<compile_context>
chip_gen: v5e
topology: v5e:2x2
jax: 0.10.0
libtpu: 0.0.40
codegen_flags: <defaults>
</compile_context>

<pallas_src>
import functools

import numpy as np

import jax
import jax.numpy as jnp
from jax.experimental import pallas as pl
from jax.experimental.pallas import tpu as pltpu


_LN_EPS = 1e-5


@functools.lru_cache(maxsize=None)
def _vmem_limit_bytes():
    """Scoped-VMEM budget gated on physical VMEM (128 MiB v5e/v6e, 64 MiB v7x)."""
    try:
        phys = pltpu.get_tpu_info().vmem_capacity_bytes
    except Exception:
        phys = 64 * 1024 * 1024
    if phys >= 128 * 1024 * 1024:
        return 96 * 1024 * 1024          # v5e / v6e
    return 48 * 1024 * 1024              # v7x (64 MiB physical)


def _compiler_params(dim_sem):
    return pltpu.CompilerParams(dimension_semantics=dim_sem,
                                vmem_limit_bytes=_vmem_limit_bytes())


def _pick_row_tile(m, row_bytes, const_bytes):
    """Largest row tile that divides M, keeps >=2 grid steps for pipelining,
    and fits double-buffered row traffic + resident weights in the VMEM budget.

    row_bytes: f32 bytes per row across all row-tiled operands/intermediates.
    const_bytes: bytes of grid-constant operands (counted double-buffered).
    """
    budget = _vmem_limit_bytes()
    for t in (1024, 512, 256, 128, 64, 32, 16, 8):
        if m % t != 0 or m // t < 2:
            continue
        if 2 * t * row_bytes + const_bytes + (256 << 10) <= budget:
            return t
    return m


# ----------------------------- Pallas kernels ------------------------------ #

def _linear_bias_kernel(x_ref, w_ref, b_ref, o_ref, *, compute_dtype):
    # y = x @ W + b
    x = x_ref[...].astype(compute_dtype)
    w = w_ref[...].astype(compute_dtype)
    acc = jnp.dot(x, w, preferred_element_type=jnp.float32)
    o_ref[...] = (acc + b_ref[...].astype(jnp.float32)).astype(o_ref.dtype)


def linear_bias_pallas(x2d, w, b, *, compute_dtype=jnp.bfloat16):
    """x2d:(M,K), w:(K,N) pre-transposed, b:(1,N)."""
    M, K = x2d.shape
    N = w.shape[1]
    tm = _pick_row_tile(M, 4 * (K + N), 2 * 4 * (K * N + N))
    return pl.pallas_call(
        functools.partial(_linear_bias_kernel, compute_dtype=compute_dtype),
        out_shape=jax.ShapeDtypeStruct((M, N), x2d.dtype),
        grid=(M // tm,),
        in_specs=[
            pl.BlockSpec((tm, K), lambda i: (i, 0)),
            pl.BlockSpec((K, N), lambda i: (0, 0)),
            pl.BlockSpec((1, N), lambda i: (0, 0)),
        ],
        out_specs=pl.BlockSpec((tm, N), lambda i: (i, 0)),
        compiler_params=_compiler_params(("parallel",)),
    )(x2d, w, b)


def _ln_qkv_kernel(x_ref, g_ref, wq_ref, wkv_ref, q_ref, kv_ref, *, eps, compute_dtype):
    # q = LN(x) @ Wq ; kv = LN(x) @ Wkv       (no bias, beta = 0)
    x = x_ref[...].astype(jnp.float32)
    mean = jnp.mean(x, axis=-1, keepdims=True)
    xc = x - mean
    var = jnp.mean(xc * xc, axis=-1, keepdims=True)
    xn = (xc * jax.lax.rsqrt(var + eps) * g_ref[...].astype(jnp.float32))
    xn_c = xn.astype(compute_dtype)
    q = jnp.dot(xn_c, wq_ref[...].astype(compute_dtype),
                preferred_element_type=jnp.float32)
    kv = jnp.dot(xn_c, wkv_ref[...].astype(compute_dtype),
                 preferred_element_type=jnp.float32)
    q_ref[...] = q.astype(q_ref.dtype)
    kv_ref[...] = kv.astype(kv_ref.dtype)


def ln_qkv_pallas(x2d, gamma, w_q, w_kv, *, compute_dtype=jnp.bfloat16):
    """Fused LayerNorm + split Q/KV projections.

    x:(M,D), gamma:(1,D), w_q:(D,D), w_kv:(D,2D) -> (q:(M,D), kv:(M,2D))."""
    M, D = x2d.shape
    row_bytes = 4 * (D + D + 2 * D)                       # x + q + kv per row
    const_bytes = 2 * 4 * (D * D + D * 2 * D + D)
    tm = _pick_row_tile(M, row_bytes, const_bytes)
    return pl.pallas_call(
        functools.partial(_ln_qkv_kernel, eps=_LN_EPS, compute_dtype=compute_dtype),
        out_shape=(jax.ShapeDtypeStruct((M, D), x2d.dtype),
                   jax.ShapeDtypeStruct((M, 2 * D), x2d.dtype)),
        grid=(M // tm,),
        in_specs=[
            pl.BlockSpec((tm, D), lambda i: (i, 0)),
            pl.BlockSpec((1, D), lambda i: (0, 0)),
            pl.BlockSpec((D, D), lambda i: (0, 0)),
            pl.BlockSpec((D, 2 * D), lambda i: (0, 0)),
        ],
        out_specs=[pl.BlockSpec((tm, D), lambda i: (i, 0)),
                   pl.BlockSpec((tm, 2 * D), lambda i: (i, 0))],
        compiler_params=_compiler_params(("parallel",)),
    )(x2d, gamma, w_q, w_kv)


def _ln_glu_ff_residual_kernel(x_ref, g_ref, w1_ref, b1_ref, w2_ref, o_ref, *,
                               inner, eps, compute_dtype):
    # y = GLU_FF(LayerNorm(x)) + x     (GLU proj has bias, FF out has no bias)
    x = x_ref[...].astype(jnp.float32)
    mean = jnp.mean(x, axis=-1, keepdims=True)
    xc = x - mean
    var = jnp.mean(xc * xc, axis=-1, keepdims=True)
    xn = xc * jax.lax.rsqrt(var + eps) * g_ref[...].astype(jnp.float32)

    h = jnp.dot(xn.astype(compute_dtype), w1_ref[...].astype(compute_dtype),
                preferred_element_type=jnp.float32) + b1_ref[...].astype(jnp.float32)
    a = h[:, :inner]
    g = h[:, inner:]
    gated = a * (g * jax.nn.sigmoid(g))           # x * SiLU(gate)
    y = jnp.dot(gated.astype(compute_dtype), w2_ref[...].astype(compute_dtype),
                preferred_element_type=jnp.float32)
    o_ref[...] = (y + x).astype(o_ref.dtype)
    # TODO(synk): for dim>=768 on v7x, tile the 2*inner axis with an
    # "arbitrary" grid dimension + f32 accumulator to fit 64 MiB VMEM.


def ln_glu_ff_residual_pallas(x2d, gamma, w1, b1, w2, *, compute_dtype=jnp.bfloat16):
    """x:(M,D), gamma:(1,D), w1:(D,2*inner), b1:(1,2*inner), w2:(inner,D)."""
    M, D = x2d.shape
    two_inner = w1.shape[1]
    inner = two_inner // 2
    row_bytes = 4 * (D + two_inner + D)                   # x + h intermediate + out
    const_bytes = 2 * 4 * (D * two_inner + two_inner + inner * D)
    tm = _pick_row_tile(M, row_bytes, const_bytes)
    return pl.pallas_call(
        functools.partial(_ln_glu_ff_residual_kernel, inner=inner, eps=_LN_EPS,
                          compute_dtype=compute_dtype),
        out_shape=jax.ShapeDtypeStruct((M, D), x2d.dtype),
        grid=(M // tm,),
        in_specs=[
            pl.BlockSpec((tm, D), lambda i: (i, 0)),
            pl.BlockSpec((1, D), lambda i: (0, 0)),
            pl.BlockSpec((D, two_inner), lambda i: (0, 0)),
            pl.BlockSpec((1, two_inner), lambda i: (0, 0)),
            pl.BlockSpec((inner, D), lambda i: (0, 0)),
        ],
        out_specs=pl.BlockSpec((tm, D), lambda i: (i, 0)),
        input_output_aliases={0: 0},                       # residual reuses x's buffer
        compiler_params=_compiler_params(("parallel",)),
    )(x2d, gamma, w1, b1, w2)


def _local_attn_kernel(q_ref, kvc_ref, kvl_ref, kvr_ref, freq_ref, wo_ref, res_ref,
                       o_ref, attn_ref, *,
                       heads, dh, dim, rot, scale, kk, n, tq, nqb, compute_dtype):
    """Banded local attention + RoPE + output projection + residual.

    q_ref:(tq,dim) query tile; kv{c,l,r}_ref:(tq,2*dim) center/left/right
    key-value tiles; freq_ref:(1,rot) rotary channel frequencies; wo_ref:(dim,dim)
    output projection; res_ref/o_ref:(tq,dim); attn_ref: (tq,dim) f32 scratch.
    For query i the allowed keys are the contiguous window of size kk centered
    at i, clamped to the sequence bounds (natten1dqk/natten1dav semantics)."""
    qi = pl.program_id(1)
    lb = jnp.maximum(qi - 1, 0)
    rb = jnp.minimum(qi + 1, nqb - 1)

    q_all = q_ref[...].astype(jnp.float32)                         # (tq, dim)
    # hoisted l/c/r concat: one sublane concat per grid step (not per head)
    kv_all = jnp.concatenate(
        [kvl_ref[...], kvc_ref[...], kvr_ref[...]], axis=0).astype(jnp.float32)  # (3tq, 2dim)
    freq = freq_ref[...].astype(jnp.float32)                       # (1, rot)

    # absolute positions (sublane-oriented for RoPE, lane-oriented for the mask)
    iota_sub = jax.lax.broadcasted_iota(jnp.int32, (tq, 1), 0)     # (tq, 1)
    iota_lane = jax.lax.broadcasted_iota(jnp.int32, (1, tq), 1)    # (1, tq)
    q_pos = qi * tq + iota_sub                                     # (tq, 1)
    kpos_sub = jnp.concatenate(
        [lb * tq + iota_sub, qi * tq + iota_sub, rb * tq + iota_sub], axis=0)  # (3tq,1)

    # lane-oriented key positions; clamped-duplicate neighbor tiles get an
    # out-of-range sentinel so they can never satisfy the window test.
    sentinel = -n - 7
    kpos_l = jnp.where(qi > 0, lb * tq + iota_lane, sentinel)
    kpos_r = jnp.where(qi < nqb - 1, rb * tq + iota_lane, sentinel)
    kpos_lane = jnp.concatenate([kpos_l, qi * tq + iota_lane, kpos_r], axis=1)  # (1,3tq)

    # neighborhood mask (computed once, shared by all heads)
    start = jnp.clip(q_pos - (kk - 1) // 2, 0, n - kk)             # (tq, 1)
    allowed = (kpos_lane >= start) & (kpos_lane < start + kk)      # (tq, 3tq)

    # rotary cos/sin computed in-kernel (EUP transcendentals)
    cos_q = jnp.cos(q_pos.astype(jnp.float32) * freq)              # (tq, rot)
    sin_q = jnp.sin(q_pos.astype(jnp.float32) * freq)
    cos_k = jnp.cos(kpos_sub.astype(jnp.float32) * freq)           # (3tq, rot)
    sin_k = jnp.sin(kpos_sub.astype(jnp.float32) * freq)

    half = rot // 2

    def rope(t, cos, sin):
        t_rot = t[:, :rot]
        rotated = jnp.concatenate([-t_rot[:, half:], t_rot[:, :half]], axis=-1)
        t_rot = t_rot * cos + rotated * sin
        if rot < t.shape[-1]:
            t_rot = jnp.concatenate([t_rot, t[:, rot:]], axis=-1)
        return t_rot

    neg_big = jnp.float32(-1e30)
    for h in range(heads):                                         # static unrolled loop
        cs = h * dh
        q_h = q_all[:, cs:cs + dh]                                 # (tq, dh)
        k_h = kv_all[:, cs:cs + dh]                                # (3tq, dh)
        v_h = kv_all[:, dim + cs:dim + cs + dh]                    # (3tq, dh)

        q_h = rope(q_h, cos_q, sin_q) * scale
        k_h = rope(k_h, cos_k, sin_k)

        s = jax.lax.dot_general(q_h.astype(compute_dtype), k_h.astype(compute_dtype),
                                (((1,), (1,)), ((), ())),
                                preferred_element_type=jnp.float32)   # (tq, 3tq)
        s = jnp.where(allowed, s, neg_big)
        m = jnp.max(s, axis=-1, keepdims=True)
        p = jnp.exp(s - m)
        l = jnp.sum(p, axis=-1, keepdims=True)
        o_h = jnp.dot(p.astype(compute_dtype), v_h.astype(compute_dtype),
                      preferred_element_type=jnp.float32)             # (tq, dh)
        attn_ref[:, cs:cs + dh] = o_h / l          # exact normalization (f32)

    proj = jnp.dot(attn_ref[...].astype(compute_dtype), wo_ref[...].astype(compute_dtype),
                   preferred_element_type=jnp.float32)
    o_ref[...] = (proj + res_ref[...].astype(jnp.float32)).astype(o_ref.dtype)


def local_attention_block_pallas(q, kv, w_o, residual, freq_ch, *, B, N, dim, heads,
                                 window, rot, scale, block_q,
                                 compute_dtype=jnp.bfloat16):
    """Banded local attention block.

    q: (B*N, dim), kv: (B*N, 2*dim) split projections, residual: (B*N, dim),
    w_o: (dim, dim), freq_ch: (1, rot).  Returns (B*N, dim) = out_proj(attn) + residual.
    """
    M = B * N
    dh = dim // heads
    kk = min(window, N)
    assert N % block_q == 0, "seq len must be a multiple of block_q"
    assert block_q >= kk, "block_q must be >= the (clamped) attention window"
    assert block_q % 8 == 0 or block_q == N
    nqb = N // block_q

    def c_map(b, qi):
        return (b * nqb + qi, 0)

    def l_map(b, qi):
        return (b * nqb + jnp.maximum(qi - 1, 0), 0)

    def r_map(b, qi):
        return (b * nqb + jnp.minimum(qi + 1, nqb - 1), 0)

    kern = functools.partial(_local_attn_kernel, heads=heads, dh=dh, dim=dim, rot=rot,
                             scale=scale, kk=kk, n=N, tq=block_q, nqb=nqb,
                             compute_dtype=compute_dtype)
    return pl.pallas_call(
        kern,
        out_shape=jax.ShapeDtypeStruct((M, dim), residual.dtype),
        grid=(B, nqb),
        in_specs=[
            pl.BlockSpec((block_q, dim), c_map),           # q center tile
            pl.BlockSpec((block_q, 2 * dim), c_map),       # kv center tile
            pl.BlockSpec((block_q, 2 * dim), l_map),       # kv left-neighbor tile
            pl.BlockSpec((block_q, 2 * dim), r_map),       # kv right-neighbor tile
            pl.BlockSpec((1, rot), lambda b, qi: (0, 0)),
            pl.BlockSpec((dim, dim), lambda b, qi: (0, 0)),
            pl.BlockSpec((block_q, dim), c_map),           # residual
        ],
        out_specs=pl.BlockSpec((block_q, dim), c_map),
        scratch_shapes=[pltpu.VMEM((block_q, dim), jnp.float32)],
        input_output_aliases={6: 0},                       # residual reuses out buffer
        compiler_params=_compiler_params(("parallel", "parallel")),
    )(q, kv, kv, kv, freq_ch, w_o, residual)


# ------------------------------ parameters --------------------------------- #

def init_params(key, *, dim, depth, dim_in, dim_out, heads, ff_mult):
    """Parameters in the PyTorch layout (Linear weight = (out_features, in_features))."""
    inner = int(dim * ff_mult)

    def dense(k, shape, s=0.05):
        return s * jax.random.normal(k, shape, dtype=jnp.float32)

    keys = jax.random.split(key, 4 + depth)
    params = {
        'w_in': dense(keys[0], (dim, dim_in)),
        'b_in': dense(keys[1], (dim,)),
        'w_out': dense(keys[2], (dim_out, dim)),
        'b_out': dense(keys[3], (dim_out,)),
        'layers': [],
    }
    for d in range(depth):
        lk = jax.random.split(keys[4 + d], 5)
        params['layers'].append({
            'norm1_g': jnp.ones((dim,), jnp.float32),
            'w_qkv': dense(lk[0], (3 * dim, dim)),
            'w_o': dense(lk[1], (dim, dim)),       # zero-init in torch; randomized here
            'norm2_g': jnp.ones((dim,), jnp.float32),
            'w1': dense(lk[2], (2 * inner, dim)),  # GLU proj (with bias)
            'b1': dense(lk[3], (2 * inner,)),
            'w2': dense(lk[4], (dim, inner)),      # FF out (no bias; zero-init in torch)
        })
    return params


def _rope_deinterleave_perm(dim, heads, dh, rot):
    """Channel permutation turning interleaved-RoPE q/k channels into NeoX layout."""
    perm = np.arange(3 * dim)
    de = np.concatenate([np.arange(0, rot, 2), np.arange(1, rot, 2)])
    for sec in range(2):                 # q and k sections only (v untouched)
        for h in range(heads):
            off = sec * dim + h * dh
            perm[off:off + rot] = off + de
    return perm


def prepare_params(raw, *, heads):
    """One-time conversion: pre-transpose weights to (K, N), reshape biases/gammas,
    split the qkv projection into q / kv, and de-interleave the q/k rotary
    channels of w_qkv (see header comment)."""
    dim = raw['w_in'].shape[0]
    dh = dim // heads
    rot = max(dh // 2, 32)
    assert rot <= dh and rot % 2 == 0, "rotary dim must fit inside head dim"
    perm = _rope_deinterleave_perm(dim, heads, dh, rot)

    layers = []
    for lyr in raw['layers']:
        w_qkv_p = lyr['w_qkv'][perm, :]                      # (3*dim, dim) torch layout
        layers.append({
            'norm1_g': lyr['norm1_g'].reshape(1, dim),
            'w_q': jnp.transpose(w_qkv_p[:dim]),             # (dim, dim)
            'w_kv': jnp.transpose(w_qkv_p[dim:]),            # (dim, 2*dim)
            'w_o': jnp.transpose(lyr['w_o']),                # (dim, dim)
            'norm2_g': lyr['norm2_g'].reshape(1, dim),
            'w1': jnp.transpose(lyr['w1']),                  # (dim, 2*inner)
            'b1': lyr['b1'].reshape(1, -1),
            'w2': jnp.transpose(lyr['w2']),                  # (inner, dim)
        })
    return {
        'w_in': jnp.transpose(raw['w_in']),                  # (dim_in, dim)
        'b_in': raw['b_in'].reshape(1, -1),
        'w_out': jnp.transpose(raw['w_out']),                # (dim, dim_out)
        'b_out': raw['b_out'].reshape(1, -1),
        'layers': layers,
    }


# ------------------------------ forward pass -------------------------------- #

def continuous_local_transformer_forward(params, x, *, heads, window, block_q=None,
                                         compute_dtype=jnp.bfloat16):
    """x: (B, N, dim_in) -> (B, N, dim_out).  params must come from prepare_params."""
    B, N, _ = x.shape
    dim = params['w_in'].shape[1]
    dim_out = params['w_out'].shape[1]
    dh = dim // heads
    rot = max(dh // 2, 32)
    assert rot <= dh and rot % 2 == 0, "rotary dim must fit inside head dim"
    scale = dh ** -0.5
    kk = min(window, N)

    if block_q is None:
        # MXU-native query tiles: prefer 256 (v6e/v7x), then 128 (v5e), ...
        block_q = N
        for t in (256, 128, 64, 32, 16, 8):
            if t >= kk and N % t == 0:
                block_q = t
                break

    # rotary channel frequencies (NeoX/concatenated layout matching the permuted weights)
    inv_freq = 1.0 / (10000.0 ** (jnp.arange(0, rot, 2, dtype=jnp.float32) / rot))
    freq_ch = jnp.concatenate([inv_freq, inv_freq]).reshape(1, rot)

    # project_in
    h = linear_bias_pallas(x.reshape(B * N, -1), params['w_in'], params['b_in'],
                           compute_dtype=compute_dtype)

    for layer in params['layers']:
        # --- local self-attention block: LN -> Q/KV -> attn -> out-proj -> +residual ---
        q, kv = ln_qkv_pallas(h, layer['norm1_g'], layer['w_q'], layer['w_kv'],
                              compute_dtype=compute_dtype)
        h = local_attention_block_pallas(q, kv, layer['w_o'], h, freq_ch,
                                         B=B, N=N, dim=dim, heads=heads,
                                         window=window, rot=rot, scale=scale,
                                         block_q=block_q, compute_dtype=compute_dtype)
        # --- feed-forward block: LN -> GLU FF -> +residual (fully fused) ---
        h = ln_glu_ff_residual_pallas(h, layer['norm2_g'], layer['w1'], layer['b1'],
                                      layer['w2'], compute_dtype=compute_dtype)

    # project_out
    out = linear_bias_pallas(h, params['w_out'], params['b_out'],
                             compute_dtype=compute_dtype)
    return out.reshape(B, N, dim_out)


# ---------------------------------- main ------------------------------------ #

if __name__ == "__main__":
    key = jax.random.PRNGKey(0)
    pkey, xkey = jax.random.split(key)

    # small config consistent with the module (heads=2 so dim_head=32 >= rotary dim)
    B, N = 2, 16
    dim, depth = 64, 2
    dim_in, dim_out = 12, 20
    heads, ff_mult = 2, 2
    local_attn_window_size = 5

    raw_params = init_params(pkey, dim=dim, depth=depth, dim_in=dim_in,
                             dim_out=dim_out, heads=heads, ff_mult=ff_mult)
    params = prepare_params(raw_params, heads=heads)
    x = jax.random.normal(xkey, (B, N, dim_in), dtype=jnp.float32)

    # block_q=8 only so this tiny demo exercises the multi-tile banding path;
    # real runs should leave block_q=None (heuristic picks 256/128).
    fwd = jax.jit(functools.partial(continuous_local_transformer_forward,
                                    heads=heads, window=local_attn_window_size,
                                    block_q=8,
                                    compute_dtype=jnp.bfloat16))   # bf16 MXU inputs
    out = fwd(params, x)
    jax.block_until_ready(out)

    assert out.shape == (B, N, dim_out)
    assert bool(jnp.all(jnp.isfinite(out)))
    print("KERNEL_OK")
</pallas_src>

<mosaic_0001>
module attributes {stable_mosaic.version = 11 : i64} {
  func.func @_ln_qkv_kernel(%arg0: i32, %arg1: memref<16x64xf32, #tpu.memory_space<vmem>>, %arg2: memref<1x64xf32, #tpu.memory_space<vmem>>, %arg3: memref<64x64xf32, #tpu.memory_space<vmem>>, %arg4: memref<64x128xf32, #tpu.memory_space<vmem>>, %arg5: memref<16x64xf32, #tpu.memory_space<vmem>>, %arg6: memref<16x128xf32, #tpu.memory_space<vmem>>) attributes {dimension_semantics = [#tpu.dimension_semantics<parallel>], iteration_bounds = array<i64: 2>, scalar_prefetch = 0 : i64, scratch_operands = 0 : i64, tpu.core_type = #tpu.core_type<tc>, window_params = [{transform_indices = @transform_0, window_bounds = array<i64: 16, 64>}, {pipeline_mode = #tpu.pipeline_mode<synchronous>, transform_indices = @transform_1, window_bounds = array<i64: 1, 64>}, {pipeline_mode = #tpu.pipeline_mode<synchronous>, transform_indices = @transform_2, window_bounds = array<i64: 64, 64>}, {pipeline_mode = #tpu.pipeline_mode<synchronous>, transform_indices = @transform_3, window_bounds = array<i64: 64, 128>}, {transform_indices = @transform_4, window_bounds = array<i64: 16, 64>}, {transform_indices = @transform_5, window_bounds = array<i64: 16, 128>}]} {
    %c0 = arith.constant 0 : index
    %c0_0 = arith.constant 0 : index
    %0 = vector.load %arg1[%c0, %c0_0] : memref<16x64xf32, #tpu.memory_space<vmem>>, vector<16x64xf32>
    %cst = arith.constant dense<0.000000e+00> : vector<16xf32>
    %1 = vector.multi_reduction <add>, %0, %cst [1] : vector<16x64xf32> to vector<16xf32>
    %2 = vector.shape_cast %1 : vector<16xf32> to vector<16x1xf32>
    %cst_1 = arith.constant 6.400000e+01 : f32
    %3 = vector.broadcast %cst_1 : f32 to vector<16x1xf32>
    %4 = arith.divf %2, %3 : vector<16x1xf32>
    %5 = vector.broadcast %4 : vector<16x1xf32> to vector<16x64xf32>
    %6 = arith.subf %0, %5 : vector<16x64xf32>
    %7 = arith.mulf %6, %6 : vector<16x64xf32>
    %cst_2 = arith.constant dense<0.000000e+00> : vector<16xf32>
    %8 = vector.multi_reduction <add>, %7, %cst_2 [1] : vector<16x64xf32> to vector<16xf32>
    %9 = vector.shape_cast %8 : vector<16xf32> to vector<16x1xf32>
    %cst_3 = arith.constant 6.400000e+01 : f32
    %10 = vector.broadcast %cst_3 : f32 to vector<16x1xf32>
    %11 = arith.divf %9, %10 : vector<16x1xf32>
    %cst_4 = arith.constant 9.99999974E-6 : f32
    %12 = vector.broadcast %cst_4 : f32 to vector<16x1xf32>
    %13 = arith.addf %11, %12 : vector<16x1xf32>
    %14 = math.rsqrt %13 : vector<16x1xf32>
    %15 = vector.broadcast %14 : vector<16x1xf32> to vector<16x64xf32>
    %16 = arith.mulf %6, %15 : vector<16x64xf32>
    %c0_5 = arith.constant 0 : index
    %c0_6 = arith.constant 0 : index
    %17 = vector.load %arg2[%c0_5, %c0_6] : memref<1x64xf32, #tpu.memory_space<vmem>>, vector<1x64xf32>
    %18 = vector.broadcast %17 : vector<1x64xf32> to vector<16x64xf32>
    %19 = arith.mulf %16, %18 : vector<16x64xf32>
    %20 = arith.truncf %19 : vector<16x64xf32> to vector<16x64xbf16>
    %c0_7 = arith.constant 0 : index
    %c0_8 = arith.constant 0 : index
    %21 = vector.load %arg3[%c0_7, %c0_8] : memref<64x64xf32, #tpu.memory_space<vmem>>, vector<64x64xf32>
    %22 = arith.truncf %21 : vector<64x64xf32> to vector<64x64xbf16>
    %cst_9 = arith.constant dense<0.000000e+00> : vector<16x64xf32>
    %23 = tpu.matmul %20, %22, %cst_9 {dimension_numbers = #tpu.dot_dimension_numbers<[1], [0], [0], [1], [0, 0, 1, 1], [], []>} : vector<16x64xbf16>, vector<64x64xbf16>, vector<16x64xf32> -> vector<16x64xf32>
    %c0_10 = arith.constant 0 : index
    %c0_11 = arith.constant 0 : index
    %24 = vector.load %arg4[%c0_10, %c0_11] : memref<64x128xf32, #tpu.memory_space<vmem>>, vector<64x128xf32>
    %25 = arith.truncf %24 : vector<64x128xf32> to vector<64x128xbf16>
    %cst_12 = arith.constant dense<0.000000e+00> : vector<16x128xf32>
    %26 = tpu.matmul %20, %25, %cst_12 {dimension_numbers = #tpu.dot_dimension_numbers<[1], [0], [0], [1], [0, 0, 1, 1], [], []>} : vector<16x64xbf16>, vector<64x128xbf16>, vector<16x128xf32> -> vector<16x128xf32>
    %c0_13 = arith.constant 0 : index
    %c0_14 = arith.constant 0 : index
    %27 = vector.load %arg5[%c0_13, %c0_14] : memref<16x64xf32, #tpu.memory_space<vmem>>, vector<16x64xf32>
    tpu.vector_store %arg5[%c0_13, %c0_14], %23 {strides = array<i32>} : memref<16x64xf32, #tpu.memory_space<vmem>>, vector<16x64xf32>,
    %c0_15 = arith.constant 0 : index
    %c0_16 = arith.constant 0 : index
    %28 = vector.load %arg6[%c0_15, %c0_16] : memref<16x128xf32, #tpu.memory_space<vmem>>, vector<16x128xf32>
    tpu.vector_store %arg6[%c0_15, %c0_16], %26 {strides = array<i32>} : memref<16x128xf32, #tpu.memory_space<vmem>>, vector<16x128xf32>,
    return
  }
  func.func @transform_0(%arg0: i32) -> (i32, i32) {
    %c0_i32 = arith.constant 0 : i32
    %c0_i32_0 = arith.constant 0 : i32
    return %arg0, %c0_i32 : i32, i32
  }
  func.func @transform_1(%arg0: i32) -> (i32, i32) {
    %c0_i32 = arith.constant 0 : i32
    %c0_i32_0 = arith.constant 0 : i32
    %c0_i32_1 = arith.constant 0 : i32
    return %c0_i32, %c0_i32_0 : i32, i32
  }
  func.func @transform_2(%arg0: i32) -> (i32, i32) {
    %c0_i32 = arith.constant 0 : i32
    %c0_i32_0 = arith.constant 0 : i32
    %c0_i32_1 = arith.constant 0 : i32
    return %c0_i32, %c0_i32_0 : i32, i32
  }
  func.func @transform_3(%arg0: i32) -> (i32, i32) {
    %c0_i32 = arith.constant 0 : i32
    %c0_i32_0 = arith.constant 0 : i32
    %c0_i32_1 = arith.constant 0 : i32
    return %c0_i32, %c0_i32_0 : i32, i32
  }
  func.func @transform_4(%arg0: i32) -> (i32, i32) {
    %c0_i32 = arith.constant 0 : i32
    %c0_i32_0 = arith.constant 0 : i32
    return %arg0, %c0_i32 : i32, i32
  }
  func.func @transform_5(%arg0: i32) -> (i32, i32) {
    %c0_i32 = arith.constant 0 : i32
    %c0_i32_0 = arith.constant 0 : i32
    return %arg0, %c0_i32 : i32, i32
  }
}

module attributes {stable_mosaic.version = 11 : i64} {
  func.func @_linear_bias_kernel(%arg0: i32, %arg1: memref<16x12xf32, #tpu.memory_space<vmem>>, %arg2: memref<12x64xf32, #tpu.memory_space<vmem>>, %arg3: memref<1x64xf32, #tpu.memory_space<vmem>>, %arg4: memref<16x64xf32, #tpu.memory_space<vmem>>) attributes {dimension_semantics = [#tpu.dimension_semantics<parallel>], iteration_bounds = array<i64: 2>, scalar_prefetch = 0 : i64, scratch_operands = 0 : i64, tpu.core_type = #tpu.core_type<tc>, window_params = [{transform_indices = @transform_0, window_bounds = array<i64: 16, 12>}, {pipeline_mode = #tpu.pipeline_mode<synchronous>, transform_indices = @transform_1, window_bounds = array<i64: 12, 64>}, {pipeline_mode = #tpu.pipeline_mode<synchronous>, transform_indices = @transform_2, window_bounds = array<i64: 1, 64>}, {transform_indices = @transform_3, window_bounds = array<i64: 16, 64>}]} {
    %c0 = arith.constant 0 : index
    %c0_0 = arith.constant 0 : index
    %0 = vector.load %arg1[%c0, %c0_0] : memref<16x12xf32, #tpu.memory_space<vmem>>, vector<16x12xf32>
    %1 = arith.truncf %0 : vector<16x12xf32> to vector<16x12xbf16>
    %c0_1 = arith.constant 0 : index
    %c0_2 = arith.constant 0 : index
    %2 = vector.load %arg2[%c0_1, %c0_2] : memref<12x64xf32, #tpu.memory_space<vmem>>, vector<12x64xf32>
    %3 = arith.truncf %2 : vector<12x64xf32> to vector<12x64xbf16>
    %cst = arith.constant dense<0.000000e+00> : vector<16x64xf32>
    %4 = tpu.matmul %1, %3, %cst {dimension_numbers = #tpu.dot_dimension_numbers<[1], [0], [0], [1], [0, 0, 1, 1], [], []>} : vector<16x12xbf16>, vector<12x64xbf16>, vector<16x64xf32> -> vector<16x64xf32>
    %c0_3 = arith.constant 0 : index
    %c0_4 = arith.constant 0 : index
    %5 = vector.load %arg3[%c0_3, %c0_4] : memref<1x64xf32, #tpu.memory_space<vmem>>, vector<1x64xf32>
    %6 = vector.broadcast %5 : vector<1x64xf32> to vector<16x64xf32>
    %7 = arith.addf %4, %6 : vector<16x64xf32>
    %c0_5 = arith.constant 0 : index
    %c0_6 = arith.constant 0 : index
    %8 = vector.load %arg4[%c0_5, %c0_6] : memref<16x64xf32, #tpu.memory_space<vmem>>, vector<16x64xf32>
    tpu.vector_store %arg4[%c0_5, %c0_6], %7 {strides = array<i32>} : memref<16x64xf32, #tpu.memory_space<vmem>>, vector<16x64xf32>,
    return
  }
  func.func @transform_0(%arg0: i32) -> (i32, i32) {
    %c0_i32 = arith.constant 0 : i32
    %c0_i32_0 = arith.constant 0 : i32
    return %arg0, %c0_i32 : i32, i32
  }
  func.func @transform_1(%arg0: i32) -> (i32, i32) {
    %c0_i32 = arith.constant 0 : i32
    %c0_i32_0 = arith.constant 0 : i32
    %c0_i32_1 = arith.constant 0 : i32
    return %c0_i32, %c0_i32_0 : i32, i32
  }
  func.func @transform_2(%arg0: i32) -> (i32, i32) {
    %c0_i32 = arith.constant 0 : i32
    %c0_i32_0 = arith.constant 0 : i32
    %c0_i32_1 = arith.constant 0 : i32
    return %c0_i32, %c0_i32_0 : i32, i32
  }
  func.func @transform_3(%arg0: i32) -> (i32, i32) {
    %c0_i32 = arith.constant 0 : i32
    %c0_i32_0 = arith.constant 0 : i32
    return %arg0, %c0_i32 : i32, i32
  }
}

module attributes {stable_mosaic.version = 11 : i64} {
  func.func @_local_attn_kernel(%arg0: i32, %arg1: i32, %arg2: memref<8x64xf32, #tpu.memory_space<vmem>>, %arg3: memref<8x128xf32, #tpu.memory_space<vmem>>, %arg4: memref<8x128xf32, #tpu.memory_space<vmem>>, %arg5: memref<8x128xf32, #tpu.memory_space<vmem>>, %arg6: memref<1x32xf32, #tpu.memory_space<vmem>>, %arg7: memref<64x64xf32, #tpu.memory_space<vmem>>, %arg8: memref<8x64xf32, #tpu.memory_space<vmem>>, %arg9: memref<8x64xf32, #tpu.memory_space<vmem>>, %arg10: memref<8x64xf32, #tpu.memory_space<vmem>>) attributes {dimension_semantics = [#tpu.dimension_semantics<parallel>, #tpu.dimension_semantics<parallel>], iteration_bounds = array<i64: 2, 2>, scalar_prefetch = 0 : i64, scratch_operands = 1 : i64, tpu.core_type = #tpu.core_type<tc>, window_params = [{transform_indices = @transform_0, window_bounds = array<i64: 8, 64>}, {transform_indices = @transform_1, window_bounds = array<i64: 8, 128>}, {transform_indices = @transform_2, window_bounds = array<i64: 8, 128>}, {transform_indices = @transform_3, window_bounds = array<i64: 8, 128>}, {pipeline_mode = #tpu.pipeline_mode<synchronous>, transform_indices = @transform_4, window_bounds = array<i64: 1, 32>}, {pipeline_mode = #tpu.pipeline_mode<synchronous>, transform_indices = @transform_5, window_bounds = array<i64: 64, 64>}, {transform_indices = @transform_6, window_bounds = array<i64: 8, 64>}, {transform_indices = @transform_7, window_bounds = array<i64: 8, 64>}]} {
    %c1_i32 = arith.constant 1 : i32
    %0 = arith.subi %arg1, %c1_i32 : i32
    %c0_i32 = arith.constant 0 : i32
    %1 = arith.maxsi %0, %c0_i32 : i32
    %c1_i32_0 = arith.constant 1 : i32
    %2 = arith.addi %arg1, %c1_i32_0 : i32
    %c1_i32_1 = arith.constant 1 : i32
    %3 = arith.minsi %2, %c1_i32_1 : i32
    %c0 = arith.constant 0 : index
    %c0_2 = arith.constant 0 : index
    %4 = vector.load %arg2[%c0, %c0_2] : memref<8x64xf32, #tpu.memory_space<vmem>>, vector<8x64xf32>
    %c0_3 = arith.constant 0 : index
    %c0_4 = arith.constant 0 : index
    %5 = vector.load %arg4[%c0_3, %c0_4] : memref<8x128xf32, #tpu.memory_space<vmem>>, vector<8x128xf32>
    %c0_5 = arith.constant 0 : index
    %c0_6 = arith.constant 0 : index
    %6 = vector.load %arg3[%c0_5, %c0_6] : memref<8x128xf32, #tpu.memory_space<vmem>>, vector<8x128xf32>
    %c0_7 = arith.constant 0 : index
    %c0_8 = arith.constant 0 : index
    %7 = vector.load %arg5[%c0_7, %c0_8] : memref<8x128xf32, #tpu.memory_space<vmem>>, vector<8x128xf32>
    %8 = tpu.concatenate %5, %6, %7 in 0 : vector<8x128xf32>, vector<8x128xf32>, vector<8x128xf32> -> vector<24x128xf32>
    %c0_9 = arith.constant 0 : index
    %c0_10 = arith.constant 0 : index
    %9 = vector.load %arg6[%c0_9, %c0_10] : memref<1x32xf32, #tpu.memory_space<vmem>>, vector<1x32xf32>
    %10 = tpu.iota {dimensions = array<i32: 0>} : vector<8x1xi32>
    %11 = tpu.iota {dimensions = array<i32: 1>} : vector<1x8xi32>
    %c8_i32 = arith.constant 8 : i32
    %12 = arith.muli %arg1, %c8_i32 : i32
    %13 = vector.broadcast %12 : i32 to vector<8x1xi32>
    %14 = arith.addi %13, %10 : vector<8x1xi32>
    %c8_i32_11 = arith.constant 8 : i32
    %15 = arith.muli %1, %c8_i32_11 : i32
    %16 = vector.broadcast %15 : i32 to vector<8x1xi32>
    %17 = arith.addi %16, %10 : vector<8x1xi32>
    %c8_i32_12 = arith.constant 8 : i32
    %18 = arith.muli %arg1, %c8_i32_12 : i32
    %19 = vector.broadcast %18 : i32 to vector<8x1xi32>
    %20 = arith.addi %19, %10 : vector<8x1xi32>
    %c8_i32_13 = arith.constant 8 : i32
    %21 = arith.muli %3, %c8_i32_13 : i32
    %22 = vector.broadcast %21 : i32 to vector<8x1xi32>
    %23 = arith.addi %22, %10 : vector<8x1xi32>
    %24 = tpu.concatenate %17, %20, %23 in 0 : vector<8x1xi32>, vector<8x1xi32>, vector<8x1xi32> -> vector<24x1xi32>
    %c0_i32_14 = arith.constant 0 : i32
    %25 = arith.cmpi sgt, %arg1, %c0_i32_14 : i32
    %c8_i32_15 = arith.constant 8 : i32
    %26 = arith.muli %1, %c8_i32_15 : i32
    %27 = vector.broadcast %26 : i32 to vector<1x8xi32>
    %28 = arith.addi %27, %11 : vector<1x8xi32>
    %c-23_i32 = arith.constant -23 : i32
    %29 = vector.broadcast %c-23_i32 : i32 to vector<1x8xi32>
    %30 = arith.select %25, %28, %29 : vector<1x8xi32>
    %c1_i32_16 = arith.constant 1 : i32
    %31 = arith.cmpi slt, %arg1, %c1_i32_16 : i32
    %c8_i32_17 = arith.constant 8 : i32
    %32 = arith.muli %3, %c8_i32_17 : i32
    %33 = vector.broadcast %32 : i32 to vector<1x8xi32>
    %34 = arith.addi %33, %11 : vector<1x8xi32>
    %c-23_i32_18 = arith.constant -23 : i32
    %35 = vector.broadcast %c-23_i32_18 : i32 to vector<1x8xi32>
    %36 = arith.select %31, %34, %35 : vector<1x8xi32>
    %c8_i32_19 = arith.constant 8 : i32
    %37 = arith.muli %arg1, %c8_i32_19 : i32
    %38 = vector.broadcast %37 : i32 to vector<1x8xi32>
    %39 = arith.addi %38, %11 : vector<1x8xi32>
    %40 = tpu.concatenate %30, %39, %36 in 1 : vector<1x8xi32>, vector<1x8xi32>, vector<1x8xi32> -> vector<1x24xi32>
    %c2_i32 = arith.constant 2 : i32
    %41 = vector.broadcast %c2_i32 : i32 to vector<8x1xi32>
    %42 = arith.subi %14, %41 : vector<8x1xi32>
    %c0_i32_20 = arith.constant 0 : i32
    %c11_i32 = arith.constant 11 : i32
    %43 = vector.broadcast %c0_i32_20 : i32 to vector<8x1xi32>
    %44 = arith.maxsi %43, %42 : vector<8x1xi32>
    %45 = vector.broadcast %c11_i32 : i32 to vector<8x1xi32>
    %46 = arith.minsi %45, %44 : vector<8x1xi32>
    %47 = vector.broadcast %40 : vector<1x24xi32> to vector<8x24xi32>
    %48 = vector.broadcast %46 : vector<8x1xi32> to vector<8x24xi32>
    %49 = arith.cmpi sge, %47, %48 : vector<8x24xi32>
    %c5_i32 = arith.constant 5 : i32
    %50 = vector.broadcast %c5_i32 : i32 to vector<8x1xi32>
    %51 = arith.addi %46, %50 : vector<8x1xi32>
    %52 = vector.broadcast %40 : vector<1x24xi32> to vector<8x24xi32>
    %53 = vector.broadcast %51 : vector<8x1xi32> to vector<8x24xi32>
    %54 = arith.cmpi slt, %52, %53 : vector<8x24xi32>
    %55 = arith.andi %49, %54 : vector<8x24xi1>
    %56 = arith.sitofp %14 : vector<8x1xi32> to vector<8x1xf32>
    %57 = vector.broadcast %56 : vector<8x1xf32> to vector<8x32xf32>
    %58 = vector.broadcast %9 : vector<1x32xf32> to vector<8x32xf32>
    %59 = arith.mulf %57, %58 : vector<8x32xf32>
    %60 = math.cos %59 : vector<8x32xf32>
    %61 = arith.sitofp %14 : vector<8x1xi32> to vector<8x1xf32>
    %62 = vector.broadcast %61 : vector<8x1xf32> to vector<8x32xf32>
    %63 = vector.broadcast %9 : vector<1x32xf32> to vector<8x32xf32>
    %64 = arith.mulf %62, %63 : vector<8x32xf32>
    %65 = math.sin %64 : vector<8x32xf32>
    %66 = arith.sitofp %24 : vector<24x1xi32> to vector<24x1xf32>
    %67 = vector.broadcast %66 : vector<24x1xf32> to vector<24x32xf32>
    %68 = vector.broadcast %9 : vector<1x32xf32> to vector<24x32xf32>
    %69 = arith.mulf %67, %68 : vector<24x32xf32>
    %70 = math.cos %69 : vector<24x32xf32>
    %71 = arith.sitofp %24 : vector<24x1xi32> to vector<24x1xf32>
    %72 = vector.broadcast %71 : vector<24x1xf32> to vector<24x32xf32>
    %73 = vector.broadcast %9 : vector<1x32xf32> to vector<24x32xf32>
    %74 = arith.mulf %72, %73 : vector<24x32xf32>
    %75 = math.sin %74 : vector<24x32xf32>
    %76 = vector.extract_strided_slice %4 {offsets = [0, 0], sizes = [8, 32], strides = [1, 1]} : vector<8x64xf32> to vector<8x32xf32>
    %77 = vector.extract_strided_slice %8 {offsets = [0, 0], sizes = [24, 32], strides = [1, 1]} : vector<24x128xf32> to vector<24x32xf32>
    %78 = vector.extract_strided_slice %8 {offsets = [0, 64], sizes = [24, 32], strides = [1, 1]} : vector<24x128xf32> to vector<24x32xf32>
    %79 = vector.extract_strided_slice %76 {offsets = [0, 16], sizes = [8, 16], strides = [1, 1]} : vector<8x32xf32> to vector<8x16xf32>
    %cst = arith.constant 0.000000e+00 : f32
    %80 = vector.broadcast %cst : f32 to vector<8x16xf32>
    %81 = arith.subf %80, %79 : vector<8x16xf32>
    %82 = vector.extract_strided_slice %76 {offsets = [0, 0], sizes = [8, 16], strides = [1, 1]} : vector<8x32xf32> to vector<8x16xf32>
    %83 = tpu.concatenate %81, %82 in 1 : vector<8x16xf32>, vector<8x16xf32> -> vector<8x32xf32>
    %84 = arith.mulf %76, %60 : vector<8x32xf32>
    %85 = arith.mulf %83, %65 : vector<8x32xf32>
    %86 = arith.addf %84, %85 : vector<8x32xf32>
    %cst_21 = arith.constant 0.176776692 : f32
    %87 = vector.broadcast %cst_21 : f32 to vector<8x32xf32>
    %88 = arith.mulf %86, %87 : vector<8x32xf32>
    %89 = vector.extract_strided_slice %77 {offsets = [0, 16], sizes = [24, 16], strides = [1, 1]} : vector<24x32xf32> to vector<24x16xf32>
    %cst_22 = arith.constant 0.000000e+00 : f32
    %90 = vector.broadcast %cst_22 : f32 to vector<24x16xf32>
    %91 = arith.subf %90, %89 : vector<24x16xf32>
    %92 = vector.extract_strided_slice %77 {offsets = [0, 0], sizes = [24, 16], strides = [1, 1]} : vector<24x32xf32> to vector<24x16xf32>
    %93 = tpu.concatenate %91, %92 in 1 : vector<24x16xf32>, vector<24x16xf32> -> vector<24x32xf32>
    %94 = arith.mulf %77, %70 : vector<24x32xf32>
    %95 = arith.mulf %93, %75 : vector<24x32xf32>
    %96 = arith.addf %94, %95 : vector<24x32xf32>
    %97 = arith.truncf %88 : vector<8x32xf32> to vector<8x32xbf16>
    %98 = arith.truncf %96 : vector<24x32xf32> to vector<24x32xbf16>
    %cst_23 = arith.constant dense<0.000000e+00> : vector<8x24xf32>
    %99 = tpu.matmul %97, %98, %cst_23 {dimension_numbers = #tpu.dot_dimension_numbers<[1], [1], [0], [0], [0, 0, 1, 0], [], []>} : vector<8x32xbf16>, vector<24x32xbf16>, vector<8x24xf32> -> vector<8x24xf32>
    %cst_24 = arith.constant -1.000000e+30 : f32
    %100 = vector.broadcast %cst_24 : f32 to vector<8x24xf32>
    %101 = arith.select %55, %99, %100 : vector<8x24xi1>, vector<8x24xf32>
    %cst_25 = arith.constant dense<0xFF800000> : vector<8xf32>
    %102 = vector.multi_reduction <maximumf>, %101, %cst_25 [1] : vector<8x24xf32> to vector<8xf32>
    %103 = vector.shape_cast %102 : vector<8xf32> to vector<8x1xf32>
    %104 = vector.broadcast %103 : vector<8x1xf32> to vector<8x24xf32>
    %105 = arith.subf %101, %104 : vector<8x24xf32>
    %106 = math.exp %105 : vector<8x24xf32>
    %cst_26 = arith.constant dense<0.000000e+00> : vector<8xf32>
    %107 = vector.multi_reduction <add>, %106, %cst_26 [1] : vector<8x24xf32> to vector<8xf32>
    %108 = vector.shape_cast %107 : vector<8xf32> to vector<8x1xf32>
    %109 = arith.truncf %106 : vector<8x24xf32> to vector<8x24xbf16>
    %110 = arith.truncf %78 : vector<24x32xf32> to vector<24x32xbf16>
    %cst_27 = arith.constant dense<0.000000e+00> : vector<8x32xf32>
    %111 = tpu.matmul %109, %110, %cst_27 {dimension_numbers = #tpu.dot_dimension_numbers<[1], [0], [0], [1], [0, 0, 1, 1], [], []>} : vector<8x24xbf16>, vector<24x32xbf16>, vector<8x32xf32> -> vector<8x32xf32>
    %112 = vector.broadcast %108 : vector<8x1xf32> to vector<8x32xf32>
    %113 = arith.divf %111, %112 : vector<8x32xf32>
    %c0_28 = arith.constant 0 : index
    %c0_29 = arith.constant 0 : index
    %114 = vector.load %arg10[%c0_28, %c0_29] : memref<8x64xf32, #tpu.memory_space<vmem>>, vector<8x32xf32>
    tpu.vector_store %arg10[%c0_28, %c0_29], %113 {strides = array<i32>} : memref<8x64xf32, #tpu.memory_space<vmem>>, vector<8x32xf32>,
    %115 = vector.extract_strided_slice %4 {offsets = [0, 32], sizes = [8, 32], strides = [1, 1]} : vector<8x64xf32> to vector<8x32xf32>
    %116 = vector.extract_strided_slice %8 {offsets = [0, 32], sizes = [24, 32], strides = [1, 1]} : vector<24x128xf32> to vector<24x32xf32>
    %117 = vector.extract_strided_slice %8 {offsets = [0, 96], sizes = [24, 32], strides = [1, 1]} : vector<24x128xf32> to vector<24x32xf32>
    %118 = vector.extract_strided_slice %115 {offsets = [0, 16], sizes = [8, 16], strides = [1, 1]} : vector<8x32xf32> to vector<8x16xf32>
    %cst_30 = arith.constant 0.000000e+00 : f32
    %119 = vector.broadcast %cst_30 : f32 to vector<8x16xf32>
    %120 = arith.subf %119, %118 : vector<8x16xf32>
    %121 = vector.extract_strided_slice %115 {offsets = [0, 0], sizes = [8, 16], strides = [1, 1]} : vector<8x32xf32> to vector<8x16xf32>
    %122 = tpu.concatenate %120, %121 in 1 : vector<8x16xf32>, vector<8x16xf32> -> vector<8x32xf32>
    %123 = arith.mulf %115, %60 : vector<8x32xf32>
    %124 = arith.mulf %122, %65 : vector<8x32xf32>
    %125 = arith.addf %123, %124 : vector<8x32xf32>
    %cst_31 = arith.constant 0.176776692 : f32
    %126 = vector.broadcast %cst_31 : f32 to vector<8x32xf32>
    %127 = arith.mulf %125, %126 : vector<8x32xf32>
    %128 = vector.extract_strided_slice %116 {offsets = [0, 16], sizes = [24, 16], strides = [1, 1]} : vector<24x32xf32> to vector<24x16xf32>
    %cst_32 = arith.constant 0.000000e+00 : f32
    %129 = vector.broadcast %cst_32 : f32 to vector<24x16xf32>
    %130 = arith.subf %129, %128 : vector<24x16xf32>
    %131 = vector.extract_strided_slice %116 {offsets = [0, 0], sizes = [24, 16], strides = [1, 1]} : vector<24x32xf32> to vector<24x16xf32>
    %132 = tpu.concatenate %130, %131 in 1 : vector<24x16xf32>, vector<24x16xf32> -> vector<24x32xf32>
    %133 = arith.mulf %116, %70 : vector<24x32xf32>
    %134 = arith.mulf %132, %75 : vector<24x32xf32>
    %135 = arith.addf %133, %134 : vector<24x32xf32>
    %136 = arith.truncf %127 : vector<8x32xf32> to vector<8x32xbf16>
    %137 = arith.truncf %135 : vector<24x32xf32> to vector<24x32xbf16>
    %cst_33 = arith.constant dense<0.000000e+00> : vector<8x24xf32>
    %138 = tpu.matmul %136, %137, %cst_33 {dimension_numbers = #tpu.dot_dimension_numbers<[1], [1], [0], [0], [0, 0, 1, 0], [], []>} : vector<8x32xbf16>, vector<24x32xbf16>, vector<8x24xf32> -> vector<8x24xf32>
    %cst_34 = arith.constant -1.000000e+30 : f32
    %139 = vector.broadcast %cst_34 : f32 to vector<8x24xf32>
    %140 = arith.select %55, %138, %139 : vector<8x24xi1>, vector<8x24xf32>
    %cst_35 = arith.constant dense<0xFF800000> : vector<8xf32>
    %141 = vector.multi_reduction <maximumf>, %140, %cst_35 [1] : vector<8x24xf32> to vector<8xf32>
    %142 = vector.shape_cast %141 : vector<8xf32> to vector<8x1xf32>
    %143 = vector.broadcast %142 : vector<8x1xf32> to vector<8x24xf32>
    %144 = arith.subf %140, %143 : vector<8x24xf32>
    %145 = math.exp %144 : vector<8x24xf32>
    %cst_36 = arith.constant dense<0.000000e+00> : vector<8xf32>
    %146 = vector.multi_reduction <add>, %145, %cst_36 [1] : vector<8x24xf32> to vector<8xf32>
    %147 = vector.shape_cast %146 : vector<8xf32> to vector<8x1xf32>
    %148 = arith.truncf %145 : vector<8x24xf32> to vector<8x24xbf16>
    %149 = arith.truncf %117 : vector<24x32xf32> to vector<24x32xbf16>
    %cst_37 = arith.constant dense<0.000000e+00> : vector<8x32xf32>
    %150 = tpu.matmul %148, %149, %cst_37 {dimension_numbers = #tpu.dot_dimension_numbers<[1], [0], [0], [1], [0, 0, 1, 1], [], []>} : vector<8x24xbf16>, vector<24x32xbf16>, vector<8x32xf32> -> vector<8x32xf32>
    %151 = vector.broadcast %147 : vector<8x1xf32> to vector<8x32xf32>
    %152 = arith.divf %150, %151 : vector<8x32xf32>
    %c0_38 = arith.constant 0 : index
    %c32 = arith.constant 32 : index
    %153 = vector.load %arg10[%c0_38, %c32] : memref<8x64xf32, #tpu.memory_space<vmem>>, vector<8x32xf32>
    tpu.vector_store %arg10[%c0_38, %c32], %152 {strides = array<i32>} : memref<8x64xf32, #tpu.memory_space<vmem>>, vector<8x32xf32>,
    %c0_39 = arith.constant 0 : index
    %c0_40 = arith.constant 0 : index
    %154 = vector.load %arg10[%c0_39, %c0_40] : memref<8x64xf32, #tpu.memory_space<vmem>>, vector<8x64xf32>
    %155 = arith.truncf %154 : vector<8x64xf32> to vector<8x64xbf16>
    %c0_41 = arith.constant 0 : index
    %c0_42 = arith.constant 0 : index
    %156 = vector.load %arg7[%c0_41, %c0_42] : memref<64x64xf32, #tpu.memory_space<vmem>>, vector<64x64xf32>
    %157 = arith.truncf %156 : vector<64x64xf32> to vector<64x64xbf16>
    %cst_43 = arith.constant dense<0.000000e+00> : vector<8x64xf32>
    %158 = tpu.matmul %155, %157, %cst_43 {dimension_numbers = #tpu.dot_dimension_numbers<[1], [0], [0], [1], [0, 0, 1, 1], [], []>} : vector<8x64xbf16>, vector<64x64xbf16>, vector<8x64xf32> -> vector<8x64xf32>
    %c0_44 = arith.constant 0 : index
    %c0_45 = arith.constant 0 : index
    %159 = vector.load %arg8[%c0_44, %c0_45] : memref<8x64xf32, #tpu.memory_space<vmem>>, vector<8x64xf32>
    %160 = arith.addf %158, %159 : vector<8x64xf32>
    %c0_46 = arith.constant 0 : index
    %c0_47 = arith.constant 0 : index
    %161 = vector.load %arg9[%c0_46, %c0_47] : memref<8x64xf32, #tpu.memory_space<vmem>>, vector<8x64xf32>
    tpu.vector_store %arg9[%c0_46, %c0_47], %160 {strides = array<i32>} : memref<8x64xf32, #tpu.memory_space<vmem>>, vector<8x64xf32>,
    return
  }
  func.func @transform_0(%arg0: i32, %arg1: i32) -> (i32, i32) {
    %c2_i32 = arith.constant 2 : i32
    %0 = arith.muli %arg0, %c2_i32 : i32
    %1 = arith.addi %0, %arg1 : i32
    %c0_i32 = arith.constant 0 : i32
    %c0_i32_0 = arith.constant 0 : i32
    return %1, %c0_i32 : i32, i32
  }
  func.func @transform_1(%arg0: i32, %arg1: i32) -> (i32, i32) {
    %c2_i32 = arith.constant 2 : i32
    %0 = arith.muli %arg0, %c2_i32 : i32
    %1 = arith.addi %0, %arg1 : i32
    %c0_i32 = arith.constant 0 : i32
    %c0_i32_0 = arith.constant 0 : i32
    return %1, %c0_i32 : i32, i32
  }
  func.func @transform_2(%arg0: i32, %arg1: i32) -> (i32, i32) {
    %c2_i32 = arith.constant 2 : i32
    %0 = arith.muli %arg0, %c2_i32 : i32
    %c1_i32 = arith.constant 1 : i32
    %1 = arith.subi %arg1, %c1_i32 : i32
    %c0_i32 = arith.constant 0 : i32
    %2 = arith.maxsi %1, %c0_i32 : i32
    %3 = arith.addi %0, %2 : i32
    %c0_i32_0 = arith.constant 0 : i32
    %c0_i32_1 = arith.constant 0 : i32
    return %3, %c0_i32_0 : i32, i32
  }
  func.func @transform_3(%arg0: i32, %arg1: i32) -> (i32, i32) {
    %c2_i32 = arith.constant 2 : i32
    %0 = arith.muli %arg0, %c2_i32 : i32
    %c1_i32 = arith.constant 1 : i32
    %1 = arith.addi %arg1, %c1_i32 : i32
    %c1_i32_0 = arith.constant 1 : i32
    %2 = arith.minsi %1, %c1_i32_0 : i32
    %3 = arith.addi %0, %2 : i32
    %c0_i32 = arith.constant 0 : i32
    %c0_i32_1 = arith.constant 0 : i32
    return %3, %c0_i32 : i32, i32
  }
  func.func @transform_4(%arg0: i32, %arg1: i32) -> (i32, i32) {
    %c0_i32 = arith.constant 0 : i32
    %c0_i32_0 = arith.constant 0 : i32
    %c0_i32_1 = arith.constant 0 : i32
    return %c0_i32, %c0_i32_0 : i32, i32
  }
  func.func @transform_5(%arg0: i32, %arg1: i32) -> (i32, i32) {
    %c0_i32 = arith.constant 0 : i32
    %c0_i32_0 = arith.constant 0 : i32
    %c0_i32_1 = arith.constant 0 : i32
    return %c0_i32, %c0_i32_0 : i32, i32
  }
  func.func @transform_6(%arg0: i32, %arg1: i32) -> (i32, i32) {
    %c2_i32 = arith.constant 2 : i32
    %0 = arith.muli %arg0, %c2_i32 : i32
    %1 = arith.addi %0, %arg1 : i32
    %c0_i32 = arith.constant 0 : i32
    %c0_i32_0 = arith.constant 0 : i32
    return %1, %c0_i32 : i32, i32
  }
  func.func @transform_7(%arg0: i32, %arg1: i32) -> (i32, i32) {
    %c2_i32 = arith.constant 2 : i32
    %0 = arith.muli %arg0, %c2_i32 : i32
    %1 = arith.addi %0, %arg1 : i32
    %c0_i32 = arith.constant 0 : i32
    %c0_i32_0 = arith.constant 0 : i32
    return %1, %c0_i32 : i32, i32
  }
}

module attributes {stable_mosaic.version = 11 : i64} {
  func.func @_ln_glu_ff_residual_kernel(%arg0: i32, %arg1: memref<16x64xf32, #tpu.memory_space<vmem>>, %arg2: memref<1x64xf32, #tpu.memory_space<vmem>>, %arg3: memref<64x256xf32, #tpu.memory_space<vmem>>, %arg4: memref<1x256xf32, #tpu.memory_space<vmem>>, %arg5: memref<128x64xf32, #tpu.memory_space<vmem>>, %arg6: memref<16x64xf32, #tpu.memory_space<vmem>>) attributes {dimension_semantics = [#tpu.dimension_semantics<parallel>], iteration_bounds = array<i64: 2>, scalar_prefetch = 0 : i64, scratch_operands = 0 : i64, tpu.core_type = #tpu.core_type<tc>, window_params = [{transform_indices = @transform_0, window_bounds = array<i64: 16, 64>}, {pipeline_mode = #tpu.pipeline_mode<synchronous>, transform_indices = @transform_1, window_bounds = array<i64: 1, 64>}, {pipeline_mode = #tpu.pipeline_mode<synchronous>, transform_indices = @transform_2, window_bounds = array<i64: 64, 256>}, {pipeline_mode = #tpu.pipeline_mode<synchronous>, transform_indices = @transform_3, window_bounds = array<i64: 1, 256>}, {pipeline_mode = #tpu.pipeline_mode<synchronous>, transform_indices = @transform_4, window_bounds = array<i64: 128, 64>}, {transform_indices = @transform_5, window_bounds = array<i64: 16, 64>}]} {
    %c0 = arith.constant 0 : index
    %c0_0 = arith.constant 0 : index
    %0 = vector.load %arg1[%c0, %c0_0] : memref<16x64xf32, #tpu.memory_space<vmem>>, vector<16x64xf32>
    %cst = arith.constant dense<0.000000e+00> : vector<16xf32>
    %1 = vector.multi_reduction <add>, %0, %cst [1] : vector<16x64xf32> to vector<16xf32>
    %2 = vector.shape_cast %1 : vector<16xf32> to vector<16x1xf32>
    %cst_1 = arith.constant 6.400000e+01 : f32
    %3 = vector.broadcast %cst_1 : f32 to vector<16x1xf32>
    %4 = arith.divf %2, %3 : vector<16x1xf32>
    %5 = vector.broadcast %4 : vector<16x1xf32> to vector<16x64xf32>
    %6 = arith.subf %0, %5 : vector<16x64xf32>
    %7 = arith.mulf %6, %6 : vector<16x64xf32>
    %cst_2 = arith.constant dense<0.000000e+00> : vector<16xf32>
    %8 = vector.multi_reduction <add>, %7, %cst_2 [1] : vector<16x64xf32> to vector<16xf32>
    %9 = vector.shape_cast %8 : vector<16xf32> to vector<16x1xf32>
    %cst_3 = arith.constant 6.400000e+01 : f32
    %10 = vector.broadcast %cst_3 : f32 to vector<16x1xf32>
    %11 = arith.divf %9, %10 : vector<16x1xf32>
    %cst_4 = arith.constant 9.99999974E-6 : f32
    %12 = vector.broadcast %cst_4 : f32 to vector<16x1xf32>
    %13 = arith.addf %11, %12 : vector<16x1xf32>
    %14 = math.rsqrt %13 : vector<16x1xf32>
    %15 = vector.broadcast %14 : vector<16x1xf32> to vector<16x64xf32>
    %16 = arith.mulf %6, %15 : vector<16x64xf32>
    %c0_5 = arith.constant 0 : index
    %c0_6 = arith.constant 0 : index
    %17 = vector.load %arg2[%c0_5, %c0_6] : memref<1x64xf32, #tpu.memory_space<vmem>>, vector<1x64xf32>
    %18 = vector.broadcast %17 : vector<1x64xf32> to vector<16x64xf32>
    %19 = arith.mulf %16, %18 : vector<16x64xf32>
    %20 = arith.truncf %19 : vector<16x64xf32> to vector<16x64xbf16>
    %c0_7 = arith.constant 0 : index
    %c0_8 = arith.constant 0 : index
    %21 = vector.load %arg3[%c0_7, %c0_8] : memref<64x256xf32, #tpu.memory_space<vmem>>, vector<64x256xf32>
    %22 = arith.truncf %21 : vector<64x256xf32> to vector<64x256xbf16>
    %cst_9 = arith.constant dense<0.000000e+00> : vector<16x256xf32>
    %23 = tpu.matmul %20, %22, %cst_9 {dimension_numbers = #tpu.dot_dimension_numbers<[1], [0], [0], [1], [0, 0, 1, 1], [], []>} : vector<16x64xbf16>, vector<64x256xbf16>, vector<16x256xf32> -> vector<16x256xf32>
    %c0_10 = arith.constant 0 : index
    %c0_11 = arith.constant 0 : index
    %24 = vector.load %arg4[%c0_10, %c0_11] : memref<1x256xf32, #tpu.memory_space<vmem>>, vector<1x256xf32>
    %25 = vector.broadcast %24 : vector<1x256xf32> to vector<16x256xf32>
    %26 = arith.addf %23, %25 : vector<16x256xf32>
    %27 = vector.extract_strided_slice %26 {offsets = [0, 0], sizes = [16, 128], strides = [1, 1]} : vector<16x256xf32> to vector<16x128xf32>
    %28 = vector.extract_strided_slice %26 {offsets = [0, 128], sizes = [16, 128], strides = [1, 1]} : vector<16x256xf32> to vector<16x128xf32>
    %29 = arith.negf %28 : vector<16x128xf32>
    %30 = math.exp %29 : vector<16x128xf32>
    %cst_12 = arith.constant 1.000000e+00 : f32
    %31 = vector.broadcast %cst_12 : f32 to vector<16x128xf32>
    %32 = arith.addf %31, %30 : vector<16x128xf32>
    %33 = arith.divf %31, %32 : vector<16x128xf32>
    %34 = arith.mulf %28, %33 : vector<16x128xf32>
    %35 = arith.mulf %27, %34 : vector<16x128xf32>
    %36 = arith.truncf %35 : vector<16x128xf32> to vector<16x128xbf16>
    %c0_13 = arith.constant 0 : index
    %c0_14 = arith.constant 0 : index
    %37 = vector.load %arg5[%c0_13, %c0_14] : memref<128x64xf32, #tpu.memory_space<vmem>>, vector<128x64xf32>
    %38 = arith.truncf %37 : vector<128x64xf32> to vector<128x64xbf16>
    %cst_15 = arith.constant dense<0.000000e+00> : vector<16x64xf32>
    %39 = tpu.matmul %36, %38, %cst_15 {dimension_numbers = #tpu.dot_dimension_numbers<[1], [0], [0], [1], [0, 0, 1, 1], [], []>} : vector<16x128xbf16>, vector<128x64xbf16>, vector<16x64xf32> -> vector<16x64xf32>
    %40 = arith.addf %39, %0 : vector<16x64xf32>
    %c0_16 = arith.constant 0 : index
    %c0_17 = arith.constant 0 : index
    %41 = vector.load %arg6[%c0_16, %c0_17] : memref<16x64xf32, #tpu.memory_space<vmem>>, vector<16x64xf32>
    tpu.vector_store %arg6[%c0_16, %c0_17], %40 {strides = array<i32>} : memref<16x64xf32, #tpu.memory_space<vmem>>, vector<16x64xf32>,
    return
  }
  func.func @transform_0(%arg0: i32) -> (i32, i32) {
    %c0_i32 = arith.constant 0 : i32
    %c0_i32_0 = arith.constant 0 : i32
    return %arg0, %c0_i32 : i32, i32
  }
  func.func @transform_1(%arg0: i32) -> (i32, i32) {
    %c0_i32 = arith.constant 0 : i32
    %c0_i32_0 = arith.constant 0 : i32
    %c0_i32_1 = arith.constant 0 : i32
    return %c0_i32, %c0_i32_0 : i32, i32
  }
  func.func @transform_2(%arg0: i32) -> (i32, i32) {
    %c0_i32 = arith.constant 0 : i32
    %c0_i32_0 = arith.constant 0 : i32
    %c0_i32_1 = arith.constant 0 : i32
    return %c0_i32, %c0_i32_0 : i32, i32
  }
  func.func @transform_3(%arg0: i32) -> (i32, i32) {
    %c0_i32 = arith.constant 0 : i32
    %c0_i32_0 = arith.constant 0 : i32
    %c0_i32_1 = arith.constant 0 : i32
    return %c0_i32, %c0_i32_0 : i32, i32
  }
  func.func @transform_4(%arg0: i32) -> (i32, i32) {
    %c0_i32 = arith.constant 0 : i32
    %c0_i32_0 = arith.constant 0 : i32
    %c0_i32_1 = arith.constant 0 : i32
    return %c0_i32, %c0_i32_0 : i32, i32
  }
  func.func @transform_5(%arg0: i32) -> (i32, i32) {
    %c0_i32 = arith.constant 0 : i32
    %c0_i32_0 = arith.constant 0 : i32
    return %arg0, %c0_i32 : i32, i32
  }
}

module attributes {stable_mosaic.version = 11 : i64} {
  func.func @_ln_qkv_kernel(%arg0: i32, %arg1: memref<16x64xf32, #tpu.memory_space<vmem>>, %arg2: memref<1x64xf32, #tpu.memory_space<vmem>>, %arg3: memref<64x64xf32, #tpu.memory_space<vmem>>, %arg4: memref<64x128xf32, #tpu.memory_space<vmem>>, %arg5: memref<16x64xf32, #tpu.memory_space<vmem>>, %arg6: memref<16x128xf32, #tpu.memory_space<vmem>>) attributes {dimension_semantics = [#tpu.dimension_semantics<parallel>], iteration_bounds = array<i64: 2>, scalar_prefetch = 0 : i64, scratch_operands = 0 : i64, tpu.core_type = #tpu.core_type<tc>, window_params = [{transform_indices = @transform_0, window_bounds = array<i64: 16, 64>}, {pipeline_mode = #tpu.pipeline_mode<synchronous>, transform_indices = @transform_1, window_bounds = array<i64: 1, 64>}, {pipeline_mode = #tpu.pipeline_mode<synchronous>, transform_indices = @transform_2, window_bounds = array<i64: 64, 64>}, {pipeline_mode = #tpu.pipeline_mode<synchronous>, transform_indices = @transform_3, window_bounds = array<i64: 64, 128>}, {transform_indices = @transform_4, window_bounds = array<i64: 16, 64>}, {transform_indices = @transform_5, window_bounds = array<i64: 16, 128>}]} {
    %c0 = arith.constant 0 : index
    %c0_0 = arith.constant 0 : index
    %0 = vector.load %arg1[%c0, %c0_0] : memref<16x64xf32, #tpu.memory_space<vmem>>, vector<16x64xf32>
    %cst = arith.constant dense<0.000000e+00> : vector<16xf32>
    %1 = vector.multi_reduction <add>, %0, %cst [1] : vector<16x64xf32> to vector<16xf32>
    %2 = vector.shape_cast %1 : vector<16xf32> to vector<16x1xf32>
    %cst_1 = arith.constant 6.400000e+01 : f32
    %3 = vector.broadcast %cst_1 : f32 to vector<16x1xf32>
    %4 = arith.divf %2, %3 : vector<16x1xf32>
    %5 = vector.broadcast %4 : vector<16x1xf32> to vector<16x64xf32>
    %6 = arith.subf %0, %5 : vector<16x64xf32>
    %7 = arith.mulf %6, %6 : vector<16x64xf32>
    %cst_2 = arith.constant dense<0.000000e+00> : vector<16xf32>
    %8 = vector.multi_reduction <add>, %7, %cst_2 [1] : vector<16x64xf32> to vector<16xf32>
    %9 = vector.shape_cast %8 : vector<16xf32> to vector<16x1xf32>
    %cst_3 = arith.constant 6.400000e+01 : f32
    %10 = vector.broadcast %cst_3 : f32 to vector<16x1xf32>
    %11 = arith.divf %9, %10 : vector<16x1xf32>
    %cst_4 = arith.constant 9.99999974E-6 : f32
    %12 = vector.broadcast %cst_4 : f32 to vector<16x1xf32>
    %13 = arith.addf %11, %12 : vector<16x1xf32>
    %14 = math.rsqrt %13 : vector<16x1xf32>
    %15 = vector.broadcast %14 : vector<16x1xf32> to vector<16x64xf32>
    %16 = arith.mulf %6, %15 : vector<16x64xf32>
    %c0_5 = arith.constant 0 : index
    %c0_6 = arith.constant 0 : index
    %17 = vector.load %arg2[%c0_5, %c0_6] : memref<1x64xf32, #tpu.memory_space<vmem>>, vector<1x64xf32>
    %18 = vector.broadcast %17 : vector<1x64xf32> to vector<16x64xf32>
    %19 = arith.mulf %16, %18 : vector<16x64xf32>
    %20 = arith.truncf %19 : vector<16x64xf32> to vector<16x64xbf16>
    %c0_7 = arith.constant 0 : index
    %c0_8 = arith.constant 0 : index
    %21 = vector.load %arg3[%c0_7, %c0_8] : memref<64x64xf32, #tpu.memory_space<vmem>>, vector<64x64xf32>
    %22 = arith.truncf %21 : vector<64x64xf32> to vector<64x64xbf16>
    %cst_9 = arith.constant dense<0.000000e+00> : vector<16x64xf32>
    %23 = tpu.matmul %20, %22, %cst_9 {dimension_numbers = #tpu.dot_dimension_numbers<[1], [0], [0], [1], [0, 0, 1, 1], [], []>} : vector<16x64xbf16>, vector<64x64xbf16>, vector<16x64xf32> -> vector<16x64xf32>
    %c0_10 = arith.constant 0 : index
    %c0_11 = arith.constant 0 : index
    %24 = vector.load %arg4[%c0_10, %c0_11] : memref<64x128xf32, #tpu.memory_space<vmem>>, vector<64x128xf32>
    %25 = arith.truncf %24 : vector<64x128xf32> to vector<64x128xbf16>
    %cst_12 = arith.constant dense<0.000000e+00> : vector<16x128xf32>
    %26 = tpu.matmul %20, %25, %cst_12 {dimension_numbers = #tpu.dot_dimension_numbers<[1], [0], [0], [1], [0, 0, 1, 1], [], []>} : vector<16x64xbf16>, vector<64x128xbf16>, vector<16x128xf32> -> vector<16x128xf32>
    %c0_13 = arith.constant 0 : index
    %c0_14 = arith.constant 0 : index
    %27 = vector.load %arg5[%c0_13, %c0_14] : memref<16x64xf32, #tpu.memory_space<vmem>>, vector<16x64xf32>
    tpu.vector_store %arg5[%c0_13, %c0_14], %23 {strides = array<i32>} : memref<16x64xf32, #tpu.memory_space<vmem>>, vector<16x64xf32>,
    %c0_15 = arith.constant 0 : index
    %c0_16 = arith.constant 0 : index
    %28 = vector.load %arg6[%c0_15, %c0_16] : memref<16x128xf32, #tpu.memory_space<vmem>>, vector<16x128xf32>
    tpu.vector_store %arg6[%c0_15, %c0_16], %26 {strides = array<i32>} : memref<16x128xf32, #tpu.memory_space<vmem>>, vector<16x128xf32>,
    return
  }
  func.func @transform_0(%arg0: i32) -> (i32, i32) {
    %c0_i32 = arith.constant 0 : i32
    %c0_i32_0 = arith.constant 0 : i32
    return %arg0, %c0_i32 : i32, i32
  }
  func.func @transform_1(%arg0: i32) -> (i32, i32) {
    %c0_i32 = arith.constant 0 : i32
    %c0_i32_0 = arith.constant 0 : i32
    %c0_i32_1 = arith.constant 0 : i32
    return %c0_i32, %c0_i32_0 : i32, i32
  }
  func.func @transform_2(%arg0: i32) -> (i32, i32) {
    %c0_i32 = arith.constant 0 : i32
    %c0_i32_0 = arith.constant 0 : i32
    %c0_i32_1 = arith.constant 0 : i32
    return %c0_i32, %c0_i32_0 : i32, i32
  }
  func.func @transform_3(%arg0: i32) -> (i32, i32) {
    %c0_i32 = arith.constant 0 : i32
    %c0_i32_0 = arith.constant 0 : i32
    %c0_i32_1 = arith.constant 0 : i32
    return %c0_i32, %c0_i32_0 : i32, i32
  }
  func.func @transform_4(%arg0: i32) -> (i32, i32) {
    %c0_i32 = arith.constant 0 : i32
    %c0_i32_0 = arith.constant 0 : i32
    return %arg0, %c0_i32 : i32, i32
  }
  func.func @transform_5(%arg0: i32) -> (i32, i32) {
    %c0_i32 = arith.constant 0 : i32
    %c0_i32_0 = arith.constant 0 : i32
    return %arg0, %c0_i32 : i32, i32
  }
}

module attributes {stable_mosaic.version = 11 : i64} {
  func.func @_linear_bias_kernel(%arg0: i32, %arg1: memref<16x64xf32, #tpu.memory_space<vmem>>, %arg2: memref<64x20xf32, #tpu.memory_space<vmem>>, %arg3: memref<1x20xf32, #tpu.memory_space<vmem>>, %arg4: memref<16x20xf32, #tpu.memory_space<vmem>>) attributes {dimension_semantics = [#tpu.dimension_semantics<parallel>], iteration_bounds = array<i64: 2>, scalar_prefetch = 0 : i64, scratch_operands = 0 : i64, tpu.core_type = #tpu.core_type<tc>, window_params = [{transform_indices = @transform_0, window_bounds = array<i64: 16, 64>}, {pipeline_mode = #tpu.pipeline_mode<synchronous>, transform_indices = @transform_1, window_bounds = array<i64: 64, 20>}, {pipeline_mode = #tpu.pipeline_mode<synchronous>, transform_indices = @transform_2, window_bounds = array<i64: 1, 20>}, {transform_indices = @transform_3, window_bounds = array<i64: 16, 20>}]} {
    %c0 = arith.constant 0 : index
    %c0_0 = arith.constant 0 : index
    %0 = vector.load %arg1[%c0, %c0_0] : memref<16x64xf32, #tpu.memory_space<vmem>>, vector<16x64xf32>
    %1 = arith.truncf %0 : vector<16x64xf32> to vector<16x64xbf16>
    %c0_1 = arith.constant 0 : index
    %c0_2 = arith.constant 0 : index
    %2 = vector.load %arg2[%c0_1, %c0_2] : memref<64x20xf32, #tpu.memory_space<vmem>>, vector<64x20xf32>
    %3 = arith.truncf %2 : vector<64x20xf32> to vector<64x20xbf16>
    %cst = arith.constant dense<0.000000e+00> : vector<16x20xf32>
    %4 = tpu.matmul %1, %3, %cst {dimension_numbers = #tpu.dot_dimension_numbers<[1], [0], [0], [1], [0, 0, 1, 1], [], []>} : vector<16x64xbf16>, vector<64x20xbf16>, vector<16x20xf32> -> vector<16x20xf32>
    %c0_3 = arith.constant 0 : index
    %c0_4 = arith.constant 0 : index
    %5 = vector.load %arg3[%c0_3, %c0_4] : memref<1x20xf32, #tpu.memory_space<vmem>>, vector<1x20xf32>
    %6 = vector.broadcast %5 : vector<1x20xf32> to vector<16x20xf32>
    %7 = arith.addf %4, %6 : vector<16x20xf32>
    %c0_5 = arith.constant 0 : index
    %c0_6 = arith.constant 0 : index
    %8 = vector.load %arg4[%c0_5, %c0_6] : memref<16x20xf32, #tpu.memory_space<vmem>>, vector<16x20xf32>
    tpu.vector_store %arg4[%c0_5, %c0_6], %7 {strides = array<i32>} : memref<16x20xf32, #tpu.memory_space<vmem>>, vector<16x20xf32>,
    return
  }
  func.func @transform_0(%arg0: i32) -> (i32, i32) {
    %c0_i32 = arith.constant 0 : i32
    %c0_i32_0 = arith.constant 0 : i32
    return %arg0, %c0_i32 : i32, i32
  }
  func.func @transform_1(%arg0: i32) -> (i32, i32) {
    %c0_i32 = arith.constant 0 : i32
    %c0_i32_0 = arith.constant 0 : i32
    %c0_i32_1 = arith.constant 0 : i32
    return %c0_i32, %c0_i32_0 : i32, i32
  }
  func.func @transform_2(%arg0: i32) -> (i32, i32) {
    %c0_i32 = arith.constant 0 : i32
    %c0_i32_0 = arith.constant 0 : i32
    %c0_i32_1 = arith.constant 0 : i32
    return %c0_i32, %c0_i32_0 : i32, i32
  }
  func.func @transform_3(%arg0: i32) -> (i32, i32) {
    %c0_i32 = arith.constant 0 : i32
    %c0_i32_0 = arith.constant 0 : i32
    return %arg0, %c0_i32 : i32, i32
  }
}

</mosaic_0001>

<llo_original>
// kernel: continuous_local_transformer_forward.9
$region0: #{continuous_local_transformer_forward.9}
  #allocation0 [shape = 'u32[]', space=smem, size = 0x4, offset = 0x4, fixed_abs, tag = 'smem constant byte address 0x4 - core index']
  #allocation1 [shape = 'u32[72,128]{1,0:T(1,128)}', space=vmem, size = 0x9000, scoped, tag = 'internal scratch']
  %s0 = inlined_call_operand.vmem [shape: f32[32,64], index: 0, kind: input, shape index: {}]
  %s1 = inlined_call_operand.hbm [shape: f32[1,64], index: 1, kind: input, shape index: {}]
  %s2 = inlined_call_operand.hbm [shape: f32[64,64], index: 2, kind: input, shape index: {}]
  %s3 = inlined_call_operand.hbm [shape: f32[64,128], index: 3, kind: input, shape index: {}]
  %s4 = inlined_call_operand.vmem [shape: f32[32,64], index: 4, kind: output, shape index: {0}]
  %s5 = inlined_call_operand.vmem [shape: f32[32,128], index: 5, kind: output, shape index: {1}]
  %6 = xla_tuple %s4, %s5
  %s7 = sld [smem:[#allocation0]]
  $region69: #{continuous_local_transformer_forward.9} parent=0
    _
  %s9 = ssub.s32 1, %s7
  %s10 = scalar_select 0, %s9, %s7
  $region1: #{continuous_local_transformer_forward.9} parent=0
    #allocation2 [shape = 'u8[512]{0}', space=vmem, size = 0x400, scoped, tag = 'input window, operand 1, single buffered']
    #allocation3 [shape = 's32[2]{0}', space=sflag, size = 0x8, scoped, tag = 'scoped memory for continuous_local_transformer_forward.9']
    #allocation4 [shape = 'u8[32768]{0}', space=vmem, size = 0x8000, scoped, tag = 'input window, operand 2, single buffered']
    #allocation5 [shape = 's32[1]{0}', space=sflag, size = 0x4, scoped, tag = 'scoped memory for continuous_local_transformer_forward.9']
    #allocation6 [shape = 'u8[32768]{0}', space=vmem, size = 0x8000, scoped, tag = 'input window, operand 3, single buffered']
    %11 = vsyncpa [#allocation3], 0
    %12 = vsyncpa [#allocation5], 0
    loop: start=0, step=1, limit=4
    $region2: #{continuous_local_transformer_forward.9} parent=1 // loop_pre_header
      _
    $region3: #{continuous_local_transformer_forward.9} parent=1 // loop_header
      %s14 = sphi 0, %s18
      %p15 = scmp.ge.s32.totalorder %s14, 4
      %s24 = sphi 0, %s26
      %s27 = sphi 0, %s24
      %s28 = sphi 0, %s27
      %s44 = sphi 0, %s28
      %s48 = sphi 0, %s48
      %s50 = sphi 0, %s48
      %s51 = sphi 0, %s50
      %s65 = sphi 0, %s51
      %s69 = sphi 0, %s69
      %s71 = sphi 0, %s69
      %s72 = sphi 0, %s71
      %s86 = sphi 0, %s72
      %s90 = sphi 0, %s90
      %s92 = sphi 0, %s90
      %s93 = sphi 0, %s92
      %s107 = sphi 0, %s93
      %s113 = sphi 0, %s115
      %s116 = sphi 0, %s113
      %s117 = sphi 0, %s116
      %s133 = sphi 0, %s117
      %s139 = sphi 0, %s141
      %s142 = sphi 0, %s139
      %s143 = sphi 0, %s142
      %s159 = sphi 0, %s143
    $region4: #{continuous_local_transformer_forward.9} parent=1 // loop_header_branch
      %17 = sbr.rel (%p15) target = $region8
    $region5: #{continuous_local_transformer_forward.9} parent=1 // loop_body
      %s19 = ssub.s32 %s14, 1
      %s20 = ssub.s32 %s14, 2
      %s21 = sadd.s32 %s14, 1
      %s22 = ssub.s32 %s14, %s21
      %p23 = scmp.eq.s32.totalorder %s22, 0
      %s25 = sadd.s32 %s24, 1
      %s26 = scalar_select %p23, %s24, %s25
      %p29 = pneg %p23
      %p30 = scmp.eq.s32.totalorder %s14, 1
      %p31 = por %p29, %p30
      %p32 = scmp.ne.s32.totalorder %s24, %s27
      %p33 = scmp.eq.s32.totalorder %s14, 0
      %p34 = por %p32, %p33
      %p35 = scmp.ne.s32.totalorder %s24, %s27
      %p36 = scmp.eq.s32.totalorder %s19, 1
      %p37 = por %p35, %p36
      %p38 = scmp.ne.s32.totalorder %s27, %s28
      %p39 = scmp.eq.s32.totalorder %s19, 0
      %p40 = por %p38, %p39
      %p41 = scmp.ne.s32.totalorder %s27, %s28
      %p42 = scmp.eq.s32.totalorder %s20, 1
      %p43 = por %p41, %p42
      %p45 = scmp.ne.s32.totalorder %s28, %s44
      %p46 = scmp.eq.s32.totalorder %s20, 0
      %p47 = por %p45, %p46
      %s49 = sadd.s32 %s48, 1
      %p52 = scmp.eq.s32.totalorder %s14, 1
      %p53 = scmp.ne.s32.totalorder %s48, %s50
      %p54 = scmp.eq.s32.totalorder %s14, 0
      %p55 = por %p53, %p54
      %p56 = scmp.ne.s32.totalorder %s48, %s50
      %p57 = scmp.eq.s32.totalorder %s19, 1
      %p58 = por %p56, %p57
      %p59 = scmp.ne.s32.totalorder %s50, %s51
      %p60 = scmp.eq.s32.totalorder %s19, 0
      %p61 = por %p59, %p60
      %p62 = scmp.ne.s32.totalorder %s50, %s51
      %p63 = scmp.eq.s32.totalorder %s20, 1
      %p64 = por %p62, %p63
      %p66 = scmp.ne.s32.totalorder %s51, %s65
      %p67 = scmp.eq.s32.totalorder %s20, 0
      %p68 = por %p66, %p67
      %s70 = sadd.s32 %s69, 1
      %p73 = scmp.eq.s32.totalorder %s14, 1
      %p74 = scmp.ne.s32.totalorder %s69, %s71
      %p75 = scmp.eq.s32.totalorder %s14, 0
      %p76 = por %p74, %p75
      %p77 = scmp.ne.s32.totalorder %s69, %s71
      %p78 = scmp.eq.s32.totalorder %s19, 1
      %p79 = por %p77, %p78
      %p80 = scmp.ne.s32.totalorder %s71, %s72
      %p81 = scmp.eq.s32.totalorder %s19, 0
      %p82 = por %p80, %p81
      %p83 = scmp.ne.s32.totalorder %s71, %s72
      %p84 = scmp.eq.s32.totalorder %s20, 1
      %p85 = por %p83, %p84
      %p87 = scmp.ne.s32.totalorder %s72, %s86
      %p88 = scmp.eq.s32.totalorder %s20, 0
      %p89 = por %p87, %p88
      %s91 = sadd.s32 %s90, 1
      %p94 = scmp.eq.s32.totalorder %s14, 1
      %p95 = scmp.ne.s32.totalorder %s90, %s92
      %p96 = scmp.eq.s32.totalorder %s14, 0
      %p97 = por %p95, %p96
      %p98 = scmp.ne.s32.totalorder %s90, %s92
      %p99 = scmp.eq.s32.totalorder %s19, 1
      %p100 = por %p98, %p99
      %p101 = scmp.ne.s32.totalorder %s92, %s93
      %p102 = scmp.eq.s32.totalorder %s19, 0
      %p103 = por %p101, %p102
      %p104 = scmp.ne.s32.totalorder %s92, %s93
      %p105 = scmp.eq.s32.totalorder %s20, 1
      %p106 = por %p104, %p105
      %p108 = scmp.ne.s32.totalorder %s93, %s107
      %p109 = scmp.eq.s32.totalorder %s20, 0
      %p110 = por %p108, %p109
      %s111 = ssub.s32 %s14, %s21
      %p112 = scmp.eq.s32.totalorder %s111, 0
      %s114 = sadd.s32 %s113, 1
      %s115 = scalar_select %p112, %s113, %s114
      %p118 = pneg %p112
      %p119 = scmp.eq.s32.totalorder %s14, 1
      %p120 = por %p118, %p119
      %p121 = scmp.ne.s32.totalorder %s113, %s116
      %p122 = scmp.eq.s32.totalorder %s14, 0
      %p123 = por %p121, %p122
      %p124 = scmp.ne.s32.totalorder %s113, %s116
      %p125 = scmp.eq.s32.totalorder %s19, 1
      %p126 = por %p124, %p125
      %p127 = scmp.ne.s32.totalorder %s116, %s117
      %p128 = scmp.eq.s32.totalorder %s19, 0
      %p129 = por %p127, %p128
      %p130 = scmp.ne.s32.totalorder %s116, %s117
      %p131 = scmp.eq.s32.totalorder %s20, 1
      %p132 = por %p130, %p131
      %p134 = scmp.ne.s32.totalorder %s117, %s133
      %p135 = scmp.eq.s32.totalorder %s20, 0
      %p136 = por %p134, %p135
      %s137 = ssub.s32 %s14, %s21
      %p138 = scmp.eq.s32.totalorder %s137, 0
      %s140 = sadd.s32 %s139, 1
      %s141 = scalar_select %p138, %s139, %s140
      %p144 = pneg %p138
      %p145 = scmp.eq.s32.totalorder %s14, 1
      %p146 = por %p144, %p145
      %p147 = scmp.ne.s32.totalorder %s139, %s142
      %p148 = scmp.eq.s32.totalorder %s14, 0
      %p149 = por %p147, %p148
      %p150 = scmp.ne.s32.totalorder %s139, %s142
      %p151 = scmp.eq.s32.totalorder %s19, 1
      %p152 = por %p150, %p151
      %p153 = scmp.ne.s32.totalorder %s142, %s143
      %p154 = scmp.eq.s32.totalorder %s19, 0
      %p155 = por %p153, %p154
      %p156 = scmp.ne.s32.totalorder %s142, %s143
      %p157 = scmp.eq.s32.totalorder %s20, 1
      %p158 = por %p156, %p157
      %p160 = scmp.ne.s32.totalorder %s143, %s159
      %p161 = scmp.eq.s32.totalorder %s20, 0
      %p162 = por %p160, %p161
      %p163 = scmp.le.s32.totalorder 1, %s14
      %p164 = scmp.lt.s32.totalorder %s14, 3
      %p165 = pnand %p163, %p164
      %p166 = pneg %p165
      // Predicated region
      $region9: #{continuous_local_transformer_forward.9} parent=5 // pred_check
        _
      $region10: #{continuous_local_transformer_forward.9} parent=5 // pred_check_branch
        %168 = sbr.rel (%p165) target = $region12
      $region11: #{continuous_local_transformer_forward.9} parent=5 // pred_region
        %s169 = ssub.s32 %s14, 1
        // Predicated region
        $region13: #{continuous_local_transformer_forward.9} parent=11 // pred_check
          %p170 = pneg %p61
        $region14: #{continuous_local_transformer_forward.9} parent=11 // pred_check_branch
          %172 = sbr.rel (%p170) target = $region16
        $region15: #{continuous_local_transformer_forward.9} parent=11 // pred_region
          %174 = vsyncadd [#allocation3], 0
          %s176 = sshll.u32 %s1, 4
          %s177 = int_to_ptr.hbm [resolvable:$true] %s176
          %s178 = sshll.u32 [#allocation2], 4
          %s179 = int_to_ptr.vmem [resolvable:$true] %s178
          %181 = dma.hbm_to_vmem [thread:$0]  %s177, 16, %s179, [#allocation3]
        $region16: #{continuous_local_transformer_forward.9} parent=11 // pred_fallthru
          _
        // Predicated region
        $region17: #{continuous_local_transformer_forward.9} parent=11 // pred_check
          %p182 = pneg %p82
        $region18: #{continuous_local_transformer_forward.9} parent=11 // pred_check_branch
          %184 = sbr.rel (%p182) target = $region20
        $region19: #{continuous_local_transformer_forward.9} parent=11 // pred_region
          %186 = vsyncadd [#allocation5], 0
          %s187 = sshll.u32 %s2, 4
          %s188 = int_to_ptr.hbm [resolvable:$true] %s187
          %s189 = sshll.u32 [#allocation4], 4
          %s190 = int_to_ptr.vmem [resolvable:$true] %s189
          %195 = dma.hbm_to_vmem [thread:$0]  %s188, 1024, %s190, [#allocation5], 128, 128, 8
        $region20: #{continuous_local_transformer_forward.9} parent=11 // pred_fallthru
          _
        // Predicated region
        $region21: #{continuous_local_transformer_forward.9} parent=11 // pred_check
          %p196 = pneg %p103
        $region22: #{continuous_local_transformer_forward.9} parent=11 // pred_check_branch
          %198 = sbr.rel (%p196) target = $region24
        $region23: #{continuous_local_transformer_forward.9} parent=11 // pred_region
          %200 = vsyncadd [#allocation5], 0
          %s201 = sshll.u32 %s3, 4
          %s202 = int_to_ptr.hbm [resolvable:$true] %s201
          %s203 = sshll.u32 [#allocation6], 4
          %s204 = int_to_ptr.vmem [resolvable:$true] %s203
          %209 = dma.hbm_to_vmem [thread:$0]  %s202, 1024, %s204, [#allocation5], 128, 128, 8
        $region24: #{continuous_local_transformer_forward.9} parent=11 // pred_fallthru
          _
      $region12: #{continuous_local_transformer_forward.9} parent=5 // pred_fallthru
        _
      %p210 = scmp.lt.s32.totalorder %s14, 2
      // Predicated region
      $region25: #{continuous_local_transformer_forward.9} parent=5 // pred_check
        %p211 = pneg %p210
      $region26: #{continuous_local_transformer_forward.9} parent=5 // pred_check_branch
        %213 = sbr.rel (%p211) target = $region28
      $region27: #{continuous_local_transformer_forward.9} parent=5 // pred_region
        // Predicated region
        $region29: #{continuous_local_transformer_forward.9} parent=27 // pred_check
          %p214 = pneg %p34
        $region30: #{continuous_local_transformer_forward.9} parent=27 // pred_check_branch
          %216 = sbr.rel (%p214) target = $region32
        $region31: #{continuous_local_transformer_forward.9} parent=27 // pred_region
          %s217 = smul.u32 2, %s14
          %p218 = scmp.lt.s32.totalorder %s217, 3
          %s219 = scalar_select %p218, %s217, 3
          %s220 = smul.addr %s219, 8
          %s221 = scalar_lea.vmem %s0, %s220
          %s222 = smul.u32 2, %s14
        $region32: #{continuous_local_transformer_forward.9} parent=27 // pred_fallthru
          _
      $region28: #{continuous_local_transformer_forward.9} parent=5 // pred_fallthru
        _
      %p223 = scmp.le.s32.totalorder 1, %s14
      %p224 = scmp.lt.s32.totalorder %s14, 3
      %p225 = pnand %p223, %p224
      %p226 = pneg %p225
      // Predicated region
      $region33: #{continuous_local_transformer_forward.9} parent=5 // pred_check
        _
      $region34: #{continuous_local_transformer_forward.9} parent=5 // pred_check_branch
        %228 = sbr.rel (%p225) target = $region36
      $region35: #{continuous_local_transformer_forward.9} parent=5 // pred_region
        %s229 = ssub.s32 %s14, 1
        // Predicated region
        $region37: #{continuous_local_transformer_forward.9} parent=35 // pred_check
          %p230 = pneg %p61
        $region38: #{continuous_local_transformer_forward.9} parent=35 // pred_check_branch
          %232 = sbr.rel (%p230) target = $region40
        $region39: #{continuous_local_transformer_forward.9} parent=35 // pred_region
          %234 = dma.done [#allocation3], 16
        $region40: #{continuous_local_transformer_forward.9} parent=35 // pred_fallthru
          _
        // Predicated region
        $region41: #{continuous_local_transformer_forward.9} parent=35 // pred_check
          %p235 = pneg %p82
        $region42: #{continuous_local_transformer_forward.9} parent=35 // pred_check_branch
          %237 = sbr.rel (%p235) target = $region44
        $region43: #{continuous_local_transformer_forward.9} parent=35 // pred_region
          %239 = dma.done [#allocation5], 1024
        $region44: #{continuous_local_transformer_forward.9} parent=35 // pred_fallthru
          _
        // Predicated region
        $region45: #{continuous_local_transformer_forward.9} parent=35 // pred_check
          %p240 = pneg %p103
        $region46: #{continuous_local_transformer_forward.9} parent=35 // pred_check_branch
          %242 = sbr.rel (%p240) target = $region48
        $region47: #{continuous_local_transformer_forward.9} parent=35 // pred_region
          %244 = dma.done [#allocation5], 1024
        $region48: #{continuous_local_transformer_forward.9} parent=35 // pred_fallthru
          _
        %s245 = smul.u32 2, %s19
        %p246 = scmp.lt.s32.totalorder %s245, 3
        %s247 = scalar_select %p246, %s245, 3
        %s248 = smul.addr %s247, 8
        %s249 = scalar_lea.vmem %s0, %s248
        %p250 = pneg %p40
        %p251 = pneg %p37
        %p252 = pneg %p61
        %p253 = pneg %p58
        %p254 = pneg %p82
        %p255 = pneg %p79
        %p256 = pneg %p103
        %p257 = pneg %p100
        %p258 = pneg %p129
        %p259 = pneg %p126
        %s260 = smul.u32 2, %s19
        %p261 = scmp.lt.s32.totalorder %s260, 3
        %s262 = scalar_select %p261, %s260, 3
        %s263 = smul.addr %s262, 8
        %s264 = scalar_lea.vmem %s4, %s263
        %p265 = pneg %p155
        %p266 = pneg %p152
        %s267 = smul.u32 2, %s19
        %p268 = scmp.lt.s32.totalorder %s267, 3
        %s269 = scalar_select %p268, %s267, 3
        %s270 = smul.addr %s269, 8
        %s271 = scalar_lea.vmem %s5, %s270
        %s272 = smul.u32 2, %s19
        %p273 = scmp.lt.s32.totalorder %s272, 3
        %s274 = scalar_select %p273, %s272, 3
        %s275 = smul.addr %s274, 8
        %s276 = scalar_lea.vmem %s0, %s275
        %s277 = smul.u32 2, %s19
        %s278 = smul.u32 2, %s19
        %p279 = scmp.lt.s32.totalorder %s278, 3
        %s280 = scalar_select %p279, %s278, 3
        %s281 = smul.addr %s280, 8
        %s282 = scalar_lea.vmem %s4, %s281
        %s283 = smul.u32 2, %s19
        %s284 = smul.u32 2, %s19
        %p285 = scmp.lt.s32.totalorder %s284, 3
        %s286 = scalar_select %p285, %s284, 3
        %s287 = smul.addr %s286, 8
        %s288 = scalar_lea.vmem %s5, %s287
        %s289 = smul.u32 2, %s19
        %v291 = vld [vmem:[%s276] sm:$0xff]
        %v292 = vld [vmem:[%s276 + $0x8] sm:$0xff]
        %vm293 = vcmask 523264
        %v294 = vsel %vm293, %v291, 0.0
        %295 = vadd.xlane.f32.xlu0 %v294
        %v296 = vpop.xlane.xlu0 %295
        %v297 = vsel %vm293, %v292, 0.0
        %298 = vadd.xlane.f32.xlu0 %v297
        %v299 = vpop.xlane.xlu0 %298
        %v300 = vrcp.pop 64.0
        %v301 = vmul.f32 64.0, %v300
        %v302 = vsub.f32 1.0, %v301
        %v303 = vmul.f32 %v300, %v302
        %v304 = vadd.f32 %v300, %v303
        %vm305 = vweird.f32 %v300
        %v306 = vsel %vm305, %v300, %v304
        %v307 = vmul.f32 %v296, %v306
        %v308 = vmul.f32 %v299, %v306
        %v309 = vsub.f32 %v291, %v307
        %v310 = vsub.f32 %v292, %v308
        %v311 = vmul.f32 %v309, %v309
        %v312 = vmul.f32 %v310, %v310
        %v313 = vsel %vm293, %v311, 0.0
        %314 = vadd.xlane.f32.xlu0 %v313
        %v315 = vpop.xlane.xlu0 %314
        %v316 = vsel %vm293, %v312, 0.0
        %317 = vadd.xlane.f32.xlu0 %v316
        %v318 = vpop.xlane.xlu0 %317
        %v319 = vmul.f32 %v315, %v306
        %v320 = vmul.f32 %v318, %v306
        %v321 = vadd.f32 %v319, 1e-05
        %v322 = vadd.f32 %v320, 1e-05
        %v323 = vrsqrt.pop %v321
        %v324 = vmul.f32 %v323, %v321
        %v325 = vmul.f32 %v324, %v323
        %v326 = vmul.f32 0.5, %v325
        %v327 = vsub.f32 1.5, %v326
        %v328 = vmul.f32 %v323, %v327
        %vm329 = vweird.f32 %v321
        %vm330 = vweird.f32 %v323
        %vm331 = vmor %vm329, %vm330
        %v332 = vsel %vm331, %v323, %v328
        %v333 = vrsqrt.pop %v322
        %v334 = vmul.f32 %v333, %v322
        %v335 = vmul.f32 %v334, %v333
        %v336 = vmul.f32 0.5, %v335
        %v337 = vsub.f32 1.5, %v336
        %v338 = vmul.f32 %v333, %v337
        %vm339 = vweird.f32 %v322
        %vm340 = vweird.f32 %v333
        %vm341 = vmor %vm339, %vm340
        %v342 = vsel %vm341, %v333, %v338
        %v343 = vmul.f32 %v309, %v332
        %v344 = vmul.f32 %v310, %v342
        %v345 = vld [vmem:[#allocation2] sm:$0x1]
        %v347 = vperm.slane %v345, 0
        %v349 = vmul.f32 %v343, %v347
        %v350 = vmul.f32 %v344, %v347
        %v351 = vpack.c.bf16 %v350, %v349
        %v352 = vld [vmem:[#allocation4] sm:$0xff]
        %v353 = vld [vmem:[#allocation4 + $0x8] sm:$0xff]
        %v354 = vld [vmem:[#allocation4 + $0x10] sm:$0xff]
        %v355 = vld [vmem:[#allocation4 + $0x18] sm:$0xff]
        %v356 = vld [vmem:[#allocation4 + $0x20] sm:$0xff]
        %v357 = vld [vmem:[#allocation4 + $0x28] sm:$0xff]
        %v358 = vld [vmem:[#allocation4 + $0x30] sm:$0xff]
        %v359 = vld [vmem:[#allocation4 + $0x38] sm:$0xff]
        %v360 = vpack.c.bf16 %v353, %v352
        %v361 = vpack.c.bf16 %v355, %v354
        %v362 = vpack.c.bf16 %v357, %v356
        %v363 = vpack.c.bf16 %v359, %v358
        %v365 = vsel %vm293, %v351, 0
        %367 = vmatpush.bf16.msra.mxu0 0
        %368 = vmatpush.bf16.msra.mxu0 0
        %369 = vmatpush.bf16.msra.mxu0 0
        %370 = vmatpush.bf16.msra.mxu0 0
        %371 = vmatpush.bf16.msra.mxu0 %v363
        %372 = vmatpush.bf16.msra.mxu0 %v362
        %373 = vmatpush.bf16.msra.mxu0 %v361
        %374 = vmatpush.bf16.msra.mxu0 %v360
        %375 = vmatmul.bf16.gmra.mxu0 %v365
        %v376 = vpop.f32.mrf.mxu0
        %v377 = vadd.f32 0.0, %v376
        %v378 = vpop.f32.mrf.mxu0
        %v379 = vadd.f32 0.0, %v378
        %380 = vdwg.mxu0
        %v381 = vld [vmem:[#allocation6] sm:$0xff]
        %v382 = vld [vmem:[#allocation6 + $0x8] sm:$0xff]
        %v383 = vld [vmem:[#allocation6 + $0x10] sm:$0xff]
        %v384 = vld [vmem:[#allocation6 + $0x18] sm:$0xff]
        %v385 = vld [vmem:[#allocation6 + $0x20] sm:$0xff]
        %v386 = vld [vmem:[#allocation6 + $0x28] sm:$0xff]
        %v387 = vld [vmem:[#allocation6 + $0x30] sm:$0xff]
        %v388 = vld [vmem:[#allocation6 + $0x38] sm:$0xff]
        %v389 = vpack.c.bf16 %v382, %v381
        %v390 = vpack.c.bf16 %v384, %v383
        %v391 = vpack.c.bf16 %v386, %v385
        %v392 = vpack.c.bf16 %v388, %v387
        %393 = vmatpush.bf16.msra.mxu0 0
        %394 = vmatpush.bf16.msra.mxu0 0
        %395 = vmatpush.bf16.msra.mxu0 0
        %396 = vmatpush.bf16.msra.mxu0 0
        %397 = vmatpush.bf16.msra.mxu0 %v392
        %398 = vmatpush.bf16.msra.mxu0 %v391
        %399 = vmatpush.bf16.msra.mxu0 %v390
        %400 = vmatpush.bf16.msra.mxu0 %v389
        %401 = vmatmul.bf16.gmra.mxu0 %v365
        %v402 = vpop.f32.mrf.mxu0
        %v403 = vadd.f32 0.0, %v402
        %v404 = vpop.f32.mrf.mxu0
        %v405 = vadd.f32 0.0, %v404
        %406 = vdwg.mxu0
        %407 = vst.msk [vmem:[%s282] sm:$0xff] %vm293, %v377
        %408 = vst.msk [vmem:[%s282 + $0x8] sm:$0xff] %vm293, %v379
        %409 = vst [vmem:[%s288] sm:$0xff] %v403
        %410 = vst [vmem:[%s288 + $0x8] sm:$0xff] %v405
        %s411 = smul.u32 2, %s19
        %p412 = scmp.lt.s32.totalorder %s411, 3
        %s413 = scalar_select %p412, %s411, 3
        %s414 = smul.addr %s413, 8
        %s415 = scalar_lea.vmem %s4, %s414
        %s416 = smul.u32 2, %s19
        %p417 = scmp.lt.s32.totalorder %s416, 3
        %s418 = scalar_select %p417, %s416, 3
        %s419 = smul.addr %s418, 8
        %s420 = scalar_lea.vmem %s5, %s419
        // Predicated region
        $region49: #{continuous_local_transformer_forward.9} parent=35 // pred_check
          %p421 = pneg %p126
        $region50: #{continuous_local_transformer_forward.9} parent=35 // pred_check_branch
          %423 = sbr.rel (%p421) target = $region52
        $region51: #{continuous_local_transformer_forward.9} parent=35 // pred_region
          %s424 = smul.u32 2, %s19
        $region52: #{continuous_local_transformer_forward.9} parent=35 // pred_fallthru
          _
        // Predicated region
        $region53: #{continuous_local_transformer_forward.9} parent=35 // pred_check
          %p425 = pneg %p152
        $region54: #{continuous_local_transformer_forward.9} parent=35 // pred_check_branch
          %427 = sbr.rel (%p425) target = $region56
        $region55: #{continuous_local_transformer_forward.9} parent=35 // pred_region
          %s428 = smul.u32 2, %s19
        $region56: #{continuous_local_transformer_forward.9} parent=35 // pred_fallthru
          _
      $region36: #{continuous_local_transformer_forward.9} parent=5 // pred_fallthru
        _
      %p429 = scmp.le.s32.totalorder 2, %s14
      // Predicated region
      $region57: #{continuous_local_transformer_forward.9} parent=5 // pred_check
        %p430 = pneg %p429
      $region58: #{continuous_local_transformer_forward.9} parent=5 // pred_check_branch
        %432 = sbr.rel (%p430) target = $region60
      $region59: #{continuous_local_transformer_forward.9} parent=5 // pred_region
        %s433 = ssub.s32 %s14, 2
        // Predicated region
        $region61: #{continuous_local_transformer_forward.9} parent=59 // pred_check
          %p434 = pneg %p132
        $region62: #{continuous_local_transformer_forward.9} parent=59 // pred_check_branch
          %436 = sbr.rel (%p434) target = $region64
        $region63: #{continuous_local_transformer_forward.9} parent=59 // pred_region
          %s437 = smul.u32 2, %s20
          %p438 = scmp.lt.s32.totalorder %s437, 3
          %s439 = scalar_select %p438, %s437, 3
          %s440 = smul.addr %s439, 8
          %s441 = scalar_lea.vmem %s4, %s440
        $region64: #{continuous_local_transformer_forward.9} parent=59 // pred_fallthru
          _
        // Predicated region
        $region65: #{continuous_local_transformer_forward.9} parent=59 // pred_check
          %p442 = pneg %p158
        $region66: #{continuous_local_transformer_forward.9} parent=59 // pred_check_branch
          %444 = sbr.rel (%p442) target = $region68
        $region67: #{continuous_local_transformer_forward.9} parent=59 // pred_region
          %s445 = smul.u32 2, %s20
          %p446 = scmp.lt.s32.totalorder %s445, 3
          %s447 = scalar_select %p446, %s445, 3
          %s448 = smul.addr %s447, 8
          %s449 = scalar_lea.vmem %s5, %s448
        $region68: #{continuous_local_transformer_forward.9} parent=59 // pred_fallthru
          _
      $region60: #{continuous_local_transformer_forward.9} parent=5 // pred_fallthru
        _
    $region6: #{continuous_local_transformer_forward.9} parent=1 // loop_footer
      %s18 = sadd.s32 1, %s14
    $region7: #{continuous_local_transformer_forward.9} parent=1 // loop_footer_branch
      %13 = sbr.rel target = $region3
    $region8: #{continuous_local_transformer_forward.9} parent=1 // loop_exit
      _
    %450 = vsyncpa [#allocation3], 1
    %s451 = scalar_lea.sflag [#allocation3], 1
    %452 = vsyncpa %s451, 1
    %453 = vsyncpa [#allocation5], 1

// kernel: continuous_local_transformer_forward.8
$region0: #{continuous_local_transformer_forward.8}
  #allocation0 [shape = 'u32[]', space=smem, size = 0x4, offset = 0x4, fixed_abs, tag = 'smem constant byte address 0x4 - core index']
  #allocation1 [shape = 'u32[72,128]{1,0:T(1,128)}', space=vmem, size = 0x9000, scoped, tag = 'internal scratch']
  %s0 = inlined_call_operand.vmem [shape: f32[32,12], index: 0, kind: input, shape index: {}]
  %s1 = inlined_call_operand.vmem [shape: f32[12,64], index: 1, kind: input, shape index: {}]
  %s2 = inlined_call_operand.vmem [shape: f32[1,64], index: 2, kind: input, shape index: {}]
  %s3 = inlined_call_operand.vmem [shape: f32[32,64], index: 3, kind: output, shape index: {}]
  %s4 = sld [smem:[#allocation0]]
  $region45: #{continuous_local_transformer_forward.8} parent=0
    _
  %s6 = ssub.s32 1, %s4
  %s7 = scalar_select 0, %s6, %s4
  loop: start=0, step=1, limit=4
  $region2: #{continuous_local_transformer_forward.8} parent=0 // loop_pre_header
    _
  $region3: #{continuous_local_transformer_forward.8} parent=0 // loop_header
    %s9 = sphi 0, %s13
    %p10 = scmp.ge.s32.totalorder %s9, 4
    %s19 = sphi 0, %s21
    %s22 = sphi 0, %s19
    %s23 = sphi 0, %s22
    %s39 = sphi 0, %s23
    %s43 = sphi 0, %s43
    %s45 = sphi 0, %s43
    %s46 = sphi 0, %s45
    %s60 = sphi 0, %s46
    %s64 = sphi 0, %s64
    %s66 = sphi 0, %s64
    %s67 = sphi 0, %s66
    %s81 = sphi 0, %s67
    %s87 = sphi 0, %s89
    %s90 = sphi 0, %s87
    %s91 = sphi 0, %s90
    %s107 = sphi 0, %s91
  $region4: #{continuous_local_transformer_forward.8} parent=0 // loop_header_branch
    %12 = sbr.rel (%p10) target = $region8
  $region5: #{continuous_local_transformer_forward.8} parent=0 // loop_body
    %s14 = ssub.s32 %s9, 1
    %s15 = ssub.s32 %s9, 2
    %s16 = sadd.s32 %s9, 1
    %s17 = ssub.s32 %s9, %s16
    %p18 = scmp.eq.s32.totalorder %s17, 0
    %s20 = sadd.s32 %s19, 1
    %s21 = scalar_select %p18, %s19, %s20
    %p24 = pneg %p18
    %p25 = scmp.eq.s32.totalorder %s9, 1
    %p26 = por %p24, %p25
    %p27 = scmp.ne.s32.totalorder %s19, %s22
    %p28 = scmp.eq.s32.totalorder %s9, 0
    %p29 = por %p27, %p28
    %p30 = scmp.ne.s32.totalorder %s19, %s22
    %p31 = scmp.eq.s32.totalorder %s14, 1
    %p32 = por %p30, %p31
    %p33 = scmp.ne.s32.totalorder %s22, %s23
    %p34 = scmp.eq.s32.totalorder %s14, 0
    %p35 = por %p33, %p34
    %p36 = scmp.ne.s32.totalorder %s22, %s23
    %p37 = scmp.eq.s32.totalorder %s15, 1
    %p38 = por %p36, %p37
    %p40 = scmp.ne.s32.totalorder %s23, %s39
    %p41 = scmp.eq.s32.totalorder %s15, 0
    %p42 = por %p40, %p41
    %s44 = sadd.s32 %s43, 1
    %p47 = scmp.eq.s32.totalorder %s9, 1
    %p48 = scmp.ne.s32.totalorder %s43, %s45
    %p49 = scmp.eq.s32.totalorder %s9, 0
    %p50 = por %p48, %p49
    %p51 = scmp.ne.s32.totalorder %s43, %s45
    %p52 = scmp.eq.s32.totalorder %s14, 1
    %p53 = por %p51, %p52
    %p54 = scmp.ne.s32.totalorder %s45, %s46
    %p55 = scmp.eq.s32.totalorder %s14, 0
    %p56 = por %p54, %p55
    %p57 = scmp.ne.s32.totalorder %s45, %s46
    %p58 = scmp.eq.s32.totalorder %s15, 1
    %p59 = por %p57, %p58
    %p61 = scmp.ne.s32.totalorder %s46, %s60
    %p62 = scmp.eq.s32.totalorder %s15, 0
    %p63 = por %p61, %p62
    %s65 = sadd.s32 %s64, 1
    %p68 = scmp.eq.s32.totalorder %s9, 1
    %p69 = scmp.ne.s32.totalorder %s64, %s66
    %p70 = scmp.eq.s32.totalorder %s9, 0
    %p71 = por %p69, %p70
    %p72 = scmp.ne.s32.totalorder %s64, %s66
    %p73 = scmp.eq.s32.totalorder %s14, 1
    %p74 = por %p72, %p73
    %p75 = scmp.ne.s32.totalorder %s66, %s67
    %p76 = scmp.eq.s32.totalorder %s14, 0
    %p77 = por %p75, %p76
    %p78 = scmp.ne.s32.totalorder %s66, %s67
    %p79 = scmp.eq.s32.totalorder %s15, 1
    %p80 = por %p78, %p79
    %p82 = scmp.ne.s32.totalorder %s67, %s81
    %p83 = scmp.eq.s32.totalorder %s15, 0
    %p84 = por %p82, %p83
    %s85 = ssub.s32 %s9, %s16
    %p86 = scmp.eq.s32.totalorder %s85, 0
    %s88 = sadd.s32 %s87, 1
    %s89 = scalar_select %p86, %s87, %s88
    %p92 = pneg %p86
    %p93 = scmp.eq.s32.totalorder %s9, 1
    %p94 = por %p92, %p93
    %p95 = scmp.ne.s32.totalorder %s87, %s90
    %p96 = scmp.eq.s32.totalorder %s9, 0
    %p97 = por %p95, %p96
    %p98 = scmp.ne.s32.totalorder %s87, %s90
    %p99 = scmp.eq.s32.totalorder %s14, 1
    %p100 = por %p98, %p99
    %p101 = scmp.ne.s32.totalorder %s90, %s91
    %p102 = scmp.eq.s32.totalorder %s14, 0
    %p103 = por %p101, %p102
    %p104 = scmp.ne.s32.totalorder %s90, %s91
    %p105 = scmp.eq.s32.totalorder %s15, 1
    %p106 = por %p104, %p105
    %p108 = scmp.ne.s32.totalorder %s91, %s107
    %p109 = scmp.eq.s32.totalorder %s15, 0
    %p110 = por %p108, %p109
    %p111 = scmp.le.s32.totalorder 1, %s9
    %p112 = scmp.lt.s32.totalorder %s9, 3
    %p113 = pnand %p111, %p112
    %p114 = pneg %p113
    // Predicated region
    $region9: #{continuous_local_transformer_forward.8} parent=5 // pred_check
      _
    $region10: #{continuous_local_transformer_forward.8} parent=5 // pred_check_branch
      %116 = sbr.rel (%p113) target = $region12
    $region11: #{continuous_local_transformer_forward.8} parent=5 // pred_region
      %s117 = ssub.s32 %s9, 1
      // Predicated region
      $region13: #{continuous_local_transformer_forward.8} parent=11 // pred_check
        %p118 = pneg %p56
      $region14: #{continuous_local_transformer_forward.8} parent=11 // pred_check_branch
        %120 = sbr.rel (%p118) target = $region16
      $region15: #{continuous_local_transformer_forward.8} parent=11 // pred_region
        _
      $region16: #{continuous_local_transformer_forward.8} parent=11 // pred_fallthru
        _
      // Predicated region
      $region17: #{continuous_local_transformer_forward.8} parent=11 // pred_check
        %p121 = pneg %p77
      $region18: #{continuous_local_transformer_forward.8} parent=11 // pred_check_branch
        %123 = sbr.rel (%p121) target = $region20
      $region19: #{continuous_local_transformer_forward.8} parent=11 // pred_region
        _
      $region20: #{continuous_local_transformer_forward.8} parent=11 // pred_fallthru
        _
    $region12: #{continuous_local_transformer_forward.8} parent=5 // pred_fallthru
      _
    %p124 = scmp.lt.s32.totalorder %s9, 2
    // Predicated region
    $region21: #{continuous_local_transformer_forward.8} parent=5 // pred_check
      %p125 = pneg %p124
    $region22: #{continuous_local_transformer_forward.8} parent=5 // pred_check_branch
      %127 = sbr.rel (%p125) target = $region24
    $region23: #{continuous_local_transformer_forward.8} parent=5 // pred_region
      // Predicated region
      $region25: #{continuous_local_transformer_forward.8} parent=23 // pred_check
        %p128 = pneg %p29
      $region26: #{continuous_local_transformer_forward.8} parent=23 // pred_check_branch
        %130 = sbr.rel (%p128) target = $region28
      $region27: #{continuous_local_transformer_forward.8} parent=23 // pred_region
        %s131 = smul.u32 2, %s9
        %p132 = scmp.lt.s32.totalorder %s131, 3
        %s133 = scalar_select %p132, %s131, 3
        %s134 = smul.addr %s133, 8
        %s135 = scalar_lea.vmem %s0, %s134
        %s136 = smul.u32 2, %s9
      $region28: #{continuous_local_transformer_forward.8} parent=23 // pred_fallthru
        _
    $region24: #{continuous_local_transformer_forward.8} parent=5 // pred_fallthru
      _
    %p137 = scmp.le.s32.totalorder 1, %s9
    %p138 = scmp.lt.s32.totalorder %s9, 3
    %p139 = pnand %p137, %p138
    %p140 = pneg %p139
    // Predicated region
    $region29: #{continuous_local_transformer_forward.8} parent=5 // pred_check
      _
    $region30: #{continuous_local_transformer_forward.8} parent=5 // pred_check_branch
      %142 = sbr.rel (%p139) target = $region32
    $region31: #{continuous_local_transformer_forward.8} parent=5 // pred_region
      %s143 = ssub.s32 %s9, 1
      %s144 = smul.u32 2, %s14
      %p145 = scmp.lt.s32.totalorder %s144, 3
      %s146 = scalar_select %p145, %s144, 3
      %s147 = smul.addr %s146, 8
      %s148 = scalar_lea.vmem %s0, %s147
      %p149 = pneg %p35
      %p150 = pneg %p32
      %p151 = pneg %p56
      %p152 = pneg %p53
      %p153 = pneg %p77
      %p154 = pneg %p74
      %p155 = pneg %p103
      %p156 = pneg %p100
      %s157 = smul.u32 2, %s14
      %p158 = scmp.lt.s32.totalorder %s157, 3
      %s159 = scalar_select %p158, %s157, 3
      %s160 = smul.addr %s159, 8
      %s161 = scalar_lea.vmem %s3, %s160
      %s162 = smul.u32 2, %s14
      %p163 = scmp.lt.s32.totalorder %s162, 3
      %s164 = scalar_select %p163, %s162, 3
      %s165 = smul.addr %s164, 8
      %s166 = scalar_lea.vmem %s0, %s165
      %s167 = smul.u32 2, %s14
      %s168 = smul.u32 2, %s14
      %p169 = scmp.lt.s32.totalorder %s168, 3
      %s170 = scalar_select %p169, %s168, 3
      %s171 = smul.addr %s170, 8
      %s172 = scalar_lea.vmem %s3, %s171
      %s173 = smul.u32 2, %s14
      %v175 = vld [vmem:[%s166] sm:$0xff]
      %v176 = vld [vmem:[%s166 + $0x8] sm:$0xff]
      %v177 = vpack.c.bf16 %v176, %v175
      %v178 = vld [vmem:[%s1] sm:$0xff]
      %v179 = vld [vmem:[%s1 + $0x8] sm:$0xf]
      %v180 = vpack.c.bf16 %v179, %v178
      %v181 = vld [vmem:[%s2] sm:$0x1]
      %v183 = vperm.slane %v181, 0
      %vm185 = vcmask 97280
      %v187 = vsel %vm185, %v177, 0
      %vm189 = vcmask 1045504
      %v191 = vsel %vm189, %v180, 0
      %193 = vmatpush.bf16.msra.mxu0 0
      %194 = vmatpush.bf16.msra.mxu0 0
      %195 = vmatpush.bf16.msra.mxu0 0
      %196 = vmatpush.bf16.msra.mxu0 0
      %197 = vmatpush.bf16.msra.mxu0 0
      %198 = vmatpush.bf16.msra.mxu0 0
      %199 = vmatpush.bf16.msra.mxu0 0
      %200 = vmatpush.bf16.msra.mxu0 %v191
      %201 = vmatmul.bf16.gmra.mxu0 %v187
      %v202 = vpop.f32.mrf.mxu0
      %v203 = vadd.f32 %v183, %v202
      %v204 = vpop.f32.mrf.mxu0
      %v205 = vadd.f32 %v183, %v204
      %206 = vdwg.mxu0
      %vm207 = vcmask 523264
      %208 = vst.msk [vmem:[%s172] sm:$0xff] %vm207, %v203
      %209 = vst.msk [vmem:[%s172 + $0x8] sm:$0xff] %vm207, %v205
      %s210 = smul.u32 2, %s14
      %p211 = scmp.lt.s32.totalorder %s210, 3
      %s212 = scalar_select %p211, %s210, 3
      %s213 = smul.addr %s212, 8
      %s214 = scalar_lea.vmem %s3, %s213
      // Predicated region
      $region33: #{continuous_local_transformer_forward.8} parent=31 // pred_check
        %p215 = pneg %p100
      $region34: #{continuous_local_transformer_forward.8} parent=31 // pred_check_branch
        %217 = sbr.rel (%p215) target = $region36
      $region35: #{continuous_local_transformer_forward.8} parent=31 // pred_region
        %s218 = smul.u32 2, %s14
      $region36: #{continuous_local_transformer_forward.8} parent=31 // pred_fallthru
        _
    $region32: #{continuous_local_transformer_forward.8} parent=5 // pred_fallthru
      _
    %p219 = scmp.le.s32.totalorder 2, %s9
    // Predicated region
    $region37: #{continuous_local_transformer_forward.8} parent=5 // pred_check
      %p220 = pneg %p219
    $region38: #{continuous_local_transformer_forward.8} parent=5 // pred_check_branch
      %222 = sbr.rel (%p220) target = $region40
    $region39: #{continuous_local_transformer_forward.8} parent=5 // pred_region
      %s223 = ssub.s32 %s9, 2
      // Predicated region
      $region41: #{continuous_local_transformer_forward.8} parent=39 // pred_check
        %p224 = pneg %p106
      $region42: #{continuous_local_transformer_forward.8} parent=39 // pred_check_branch
        %226 = sbr.rel (%p224) target = $region44
      $region43: #{continuous_local_transformer_forward.8} parent=39 // pred_region
        %s227 = smul.u32 2, %s15
        %p228 = scmp.lt.s32.totalorder %s227, 3
        %s229 = scalar_select %p228, %s227, 3
        %s230 = smul.addr %s229, 8
        %s231 = scalar_lea.vmem %s3, %s230
      $region44: #{continuous_local_transformer_forward.8} parent=39 // pred_fallthru
        _
    $region40: #{continuous_local_transformer_forward.8} parent=5 // pred_fallthru
      _
  $region6: #{continuous_local_transformer_forward.8} parent=0 // loop_footer
    %s13 = sadd.s32 1, %s9
  $region7: #{continuous_local_transformer_forward.8} parent=0 // loop_footer_branch
    %8 = sbr.rel target = $region3
  $region8: #{continuous_local_transformer_forward.8} parent=0 // loop_exit
    _

// kernel: continuous_local_transformer_forward.10
$region0: #{continuous_local_transformer_forward.10}
  #allocation0 [shape = 'u32[]', space=smem, size = 0x4, offset = 0x4, fixed_abs, tag = 'smem constant byte address 0x4 - core index']
  #allocation1 [shape = 'u32[72,128]{1,0:T(1,128)}', space=vmem, size = 0x9000, scoped, tag = 'internal scratch']
  #allocation2 [shape = 'f32[8,64]{1,0:T(8,128)}', space=vmem, size = 0x1000, scoped, tag = 'scratch operand']
  %s0 = inlined_call_operand.vmem [shape: f32[32,64], index: 0, kind: input, shape index: {}]
  %s1 = inlined_call_operand.vmem [shape: f32[32,128], index: 1, kind: input, shape index: {}, may-alias: {1,2,3}]
  %s2 = inlined_call_operand.vmem [shape: f32[32,128], index: 2, kind: input, shape index: {}, may-alias: {1,2,3}]
  %s3 = inlined_call_operand.vmem [shape: f32[32,128], index: 3, kind: input, shape index: {}, may-alias: {1,2,3}]
  %s4 = inlined_call_operand.vmem [shape: f32[1,32], index: 4, kind: input, shape index: {}]
  %s5 = inlined_call_operand.hbm [shape: f32[64,64], index: 5, kind: input, shape index: {}]
  %s6 = inlined_call_operand.vmem [shape: f32[32,64], index: 6, kind: input, shape index: {}, may-alias: {6,7}]
  %s7 = inlined_call_operand.vmem [shape: f32[32,64], index: 7, kind: output, shape index: {}, may-alias: {6,7}]
  %s8 = sld [smem:[#allocation0]]
  $region65: #{continuous_local_transformer_forward.10} parent=0
    _
  %s10 = ssub.s32 1, %s8
  %s11 = scalar_select 0, %s10, %s8
  $region1: #{continuous_local_transformer_forward.10} parent=0
    #allocation3 [shape = 'u8[32768]{0}', space=vmem, size = 0x8000, scoped, tag = 'input window, operand 5, single buffered']
    #allocation4 [shape = 's32[2]{0}', space=sflag, size = 0x8, scoped, tag = 'scoped memory for continuous_local_transformer_forward.10']
    %12 = vsyncpa [#allocation4], 0
    loop: start=0, step=1, limit=6
    $region2: #{continuous_local_transformer_forward.10} parent=1 // loop_pre_header
      _
    $region3: #{continuous_local_transformer_forward.10} parent=1 // loop_header
      %s14 = sphi 0, %s18
      %p15 = scmp.ge.s32.totalorder %s14, 6
      %s21 = sphi 0, %s33
      %s22 = sphi 0, %s29
      %s23 = sphi 0, %s21
      %s24 = sphi 0, %s22
      %s25 = sphi 0, %s23
      %s26 = sphi 0, %s24
      %s40 = sphi 0, %s42
      %s43 = sphi 0, %s40
      %s44 = sphi 0, %s43
      %s60 = sphi 0, %s44
      %s70 = sphi 0, %s72
      %s73 = sphi 0, %s70
      %s74 = sphi 0, %s73
      %s90 = sphi 0, %s74
      %s106 = sphi 0, %s108
      %s109 = sphi 0, %s106
      %s110 = sphi 0, %s109
      %s126 = sphi 0, %s110
      %s142 = sphi 0, %s144
      %s145 = sphi 0, %s142
      %s146 = sphi 0, %s145
      %s162 = sphi 0, %s146
      %s166 = sphi 0, %s166
      %s168 = sphi 0, %s166
      %s169 = sphi 0, %s168
      %s183 = sphi 0, %s169
      %s187 = sphi 0, %s187
      %s189 = sphi 0, %s187
      %s190 = sphi 0, %s189
      %s204 = sphi 0, %s190
      %s214 = sphi 0, %s216
      %s217 = sphi 0, %s214
      %s218 = sphi 0, %s217
      %s234 = sphi 0, %s218
      %s244 = sphi 0, %s246
      %s247 = sphi 0, %s244
      %s248 = sphi 0, %s247
      %s264 = sphi 0, %s248
    $region4: #{continuous_local_transformer_forward.10} parent=1 // loop_header_branch
      %17 = sbr.rel (%p15) target = $region8
    $region5: #{continuous_local_transformer_forward.10} parent=1 // loop_body
      %s19 = ssub.s32 %s14, 1
      %s20 = ssub.s32 %s14, 2
      %s27 = sadd.s32 1, %s22
      %p28 = scmp.ge.s32.totalorder %s27, 2
      %s29 = scalar_select %p28, 0, %s27
      %s30 = sadd.s32 1, %s21
      %s31 = scalar_select %p28, %s30, %s21
      %p32 = scmp.ge.s32.totalorder %s31, 2
      %s33 = scalar_select %p32, 0, %s31
      %s34 = smul.u32 %s21, 2
      %s35 = sadd.s32 %s34, %s22
      %s36 = smul.u32 %s33, 2
      %s37 = sadd.s32 %s36, %s29
      %s38 = ssub.s32 %s35, %s37
      %p39 = scmp.eq.s32.totalorder %s38, 0
      %s41 = sadd.s32 %s40, 1
      %s42 = scalar_select %p39, %s40, %s41
      %p45 = pneg %p39
      %p46 = scmp.eq.s32.totalorder %s14, 3
      %p47 = por %p45, %p46
      %p48 = scmp.ne.s32.totalorder %s40, %s43
      %p49 = scmp.eq.s32.totalorder %s14, 0
      %p50 = por %p48, %p49
      %p51 = scmp.ne.s32.totalorder %s40, %s43
      %p52 = scmp.eq.s32.totalorder %s19, 3
      %p53 = por %p51, %p52
      %p54 = scmp.ne.s32.totalorder %s43, %s44
      %p55 = scmp.eq.s32.totalorder %s19, 0
      %p56 = por %p54, %p55
      %p57 = scmp.ne.s32.totalorder %s43, %s44
      %p58 = scmp.eq.s32.totalorder %s20, 3
      %p59 = por %p57, %p58
      %p61 = scmp.ne.s32.totalorder %s44, %s60
      %p62 = scmp.eq.s32.totalorder %s20, 0
      %p63 = por %p61, %p62
      %s64 = smul.u32 %s21, 2
      %s65 = sadd.s32 %s64, %s22
      %s66 = smul.u32 %s33, 2
      %s67 = sadd.s32 %s66, %s29
      %s68 = ssub.s32 %s65, %s67
      %p69 = scmp.eq.s32.totalorder %s68, 0
      %s71 = sadd.s32 %s70, 1
      %s72 = scalar_select %p69, %s70, %s71
      %p75 = pneg %p69
      %p76 = scmp.eq.s32.totalorder %s14, 3
      %p77 = por %p75, %p76
      %p78 = scmp.ne.s32.totalorder %s70, %s73
      %p79 = scmp.eq.s32.totalorder %s14, 0
      %p80 = por %p78, %p79
      %p81 = scmp.ne.s32.totalorder %s70, %s73
      %p82 = scmp.eq.s32.totalorder %s19, 3
      %p83 = por %p81, %p82
      %p84 = scmp.ne.s32.totalorder %s73, %s74
      %p85 = scmp.eq.s32.totalorder %s19, 0
      %p86 = por %p84, %p85
      %p87 = scmp.ne.s32.totalorder %s73, %s74
      %p88 = scmp.eq.s32.totalorder %s20, 3
      %p89 = por %p87, %p88
      %p91 = scmp.ne.s32.totalorder %s74, %s90
      %p92 = scmp.eq.s32.totalorder %s20, 0
      %p93 = por %p91, %p92
      %s94 = smul.u32 %s21, 2
      %s95 = ssub.s32 %s22, 1
      %p96 = scmp.gt.s32.totalorder %s95, 0
      %s97 = scalar_select %p96, %s95, 0
      %s98 = sadd.s32 %s94, %s97
      %s99 = smul.u32 %s33, 2
      %s100 = ssub.s32 %s29, 1
      %p101 = scmp.gt.s32.totalorder %s100, 0
      %s102 = scalar_select %p101, %s100, 0
      %s103 = sadd.s32 %s99, %s102
      %s104 = ssub.s32 %s98, %s103
      %p105 = scmp.eq.s32.totalorder %s104, 0
      %s107 = sadd.s32 %s106, 1
      %s108 = scalar_select %p105, %s106, %s107
      %p111 = pneg %p105
      %p112 = scmp.eq.s32.totalorder %s14, 3
      %p113 = por %p111, %p112
      %p114 = scmp.ne.s32.totalorder %s106, %s109
      %p115 = scmp.eq.s32.totalorder %s14, 0
      %p116 = por %p114, %p115
      %p117 = scmp.ne.s32.totalorder %s106, %s109
      %p118 = scmp.eq.s32.totalorder %s19, 3
      %p119 = por %p117, %p118
      %p120 = scmp.ne.s32.totalorder %s109, %s110
      %p121 = scmp.eq.s32.totalorder %s19, 0
      %p122 = por %p120, %p121
      %p123 = scmp.ne.s32.totalorder %s109, %s110
      %p124 = scmp.eq.s32.totalorder %s20, 3
      %p125 = por %p123, %p124
      %p127 = scmp.ne.s32.totalorder %s110, %s126
      %p128 = scmp.eq.s32.totalorder %s20, 0
      %p129 = por %p127, %p128
      %s130 = smul.u32 %s21, 2
      %s131 = sadd.s32 %s22, 1
      %p132 = scmp.lt.s32.totalorder %s131, 1
      %s133 = scalar_select %p132, %s131, 1
      %s134 = sadd.s32 %s130, %s133
      %s135 = smul.u32 %s33, 2
      %s136 = sadd.s32 %s29, 1
      %p137 = scmp.lt.s32.totalorder %s136, 1
      %s138 = scalar_select %p137, %s136, 1
      %s139 = sadd.s32 %s135, %s138
      %s140 = ssub.s32 %s134, %s139
      %p141 = scmp.eq.s32.totalorder %s140, 0
      %s143 = sadd.s32 %s142, 1
      %s144 = scalar_select %p141, %s142, %s143
      %p147 = pneg %p141
      %p148 = scmp.eq.s32.totalorder %s14, 3
      %p149 = por %p147, %p148
      %p150 = scmp.ne.s32.totalorder %s142, %s145
      %p151 = scmp.eq.s32.totalorder %s14, 0
      %p152 = por %p150, %p151
      %p153 = scmp.ne.s32.totalorder %s142, %s145
      %p154 = scmp.eq.s32.totalorder %s19, 3
      %p155 = por %p153, %p154
      %p156 = scmp.ne.s32.totalorder %s145, %s146
      %p157 = scmp.eq.s32.totalorder %s19, 0
      %p158 = por %p156, %p157
      %p159 = scmp.ne.s32.totalorder %s145, %s146
      %p160 = scmp.eq.s32.totalorder %s20, 3
      %p161 = por %p159, %p160
      %p163 = scmp.ne.s32.totalorder %s146, %s162
      %p164 = scmp.eq.s32.totalorder %s20, 0
      %p165 = por %p163, %p164
      %s167 = sadd.s32 %s166, 1
      %p170 = scmp.eq.s32.totalorder %s14, 3
      %p171 = scmp.ne.s32.totalorder %s166, %s168
      %p172 = scmp.eq.s32.totalorder %s14, 0
      %p173 = por %p171, %p172
      %p174 = scmp.ne.s32.totalorder %s166, %s168
      %p175 = scmp.eq.s32.totalorder %s19, 3
      %p176 = por %p174, %p175
      %p177 = scmp.ne.s32.totalorder %s168, %s169
      %p178 = scmp.eq.s32.totalorder %s19, 0
      %p179 = por %p177, %p178
      %p180 = scmp.ne.s32.totalorder %s168, %s169
      %p181 = scmp.eq.s32.totalorder %s20, 3
      %p182 = por %p180, %p181
      %p184 = scmp.ne.s32.totalorder %s169, %s183
      %p185 = scmp.eq.s32.totalorder %s20, 0
      %p186 = por %p184, %p185
      %s188 = sadd.s32 %s187, 1
      %p191 = scmp.eq.s32.totalorder %s14, 3
      %p192 = scmp.ne.s32.totalorder %s187, %s189
      %p193 = scmp.eq.s32.totalorder %s14, 0
      %p194 = por %p192, %p193
      %p195 = scmp.ne.s32.totalorder %s187, %s189
      %p196 = scmp.eq.s32.totalorder %s19, 3
      %p197 = por %p195, %p196
      %p198 = scmp.ne.s32.totalorder %s189, %s190
      %p199 = scmp.eq.s32.totalorder %s19, 0
      %p200 = por %p198, %p199
      %p201 = scmp.ne.s32.totalorder %s189, %s190
      %p202 = scmp.eq.s32.totalorder %s20, 3
      %p203 = por %p201, %p202
      %p205 = scmp.ne.s32.totalorder %s190, %s204
      %p206 = scmp.eq.s32.totalorder %s20, 0
      %p207 = por %p205, %p206
      %s208 = smul.u32 %s21, 2
      %s209 = sadd.s32 %s208, %s22
      %s210 = smul.u32 %s33, 2
      %s211 = sadd.s32 %s210, %s29
      %s212 = ssub.s32 %s209, %s211
      %p213 = scmp.eq.s32.totalorder %s212, 0
      %s215 = sadd.s32 %s214, 1
      %s216 = scalar_select %p213, %s214, %s215
      %p219 = pneg %p213
      %p220 = scmp.eq.s32.totalorder %s14, 3
      %p221 = por %p219, %p220
      %p222 = scmp.ne.s32.totalorder %s214, %s217
      %p223 = scmp.eq.s32.totalorder %s14, 0
      %p224 = por %p222, %p223
      %p225 = scmp.ne.s32.totalorder %s214, %s217
      %p226 = scmp.eq.s32.totalorder %s19, 3
      %p227 = por %p225, %p226
      %p228 = scmp.ne.s32.totalorder %s217, %s218
      %p229 = scmp.eq.s32.totalorder %s19, 0
      %p230 = por %p228, %p229
      %p231 = scmp.ne.s32.totalorder %s217, %s218
      %p232 = scmp.eq.s32.totalorder %s20, 3
      %p233 = por %p231, %p232
      %p235 = scmp.ne.s32.totalorder %s218, %s234
      %p236 = scmp.eq.s32.totalorder %s20, 0
      %p237 = por %p235, %p236
      %s238 = smul.u32 %s21, 2
      %s239 = sadd.s32 %s238, %s22
      %s240 = smul.u32 %s33, 2
      %s241 = sadd.s32 %s240, %s29
      %s242 = ssub.s32 %s239, %s241
      %p243 = scmp.eq.s32.totalorder %s242, 0
      %s245 = sadd.s32 %s244, 1
      %s246 = scalar_select %p243, %s244, %s245
      %p249 = pneg %p243
      %p250 = scmp.eq.s32.totalorder %s14, 3
      %p251 = por %p249, %p250
      %p252 = scmp.ne.s32.totalorder %s244, %s247
      %p253 = scmp.eq.s32.totalorder %s14, 0
      %p254 = por %p252, %p253
      %p255 = scmp.ne.s32.totalorder %s244, %s247
      %p256 = scmp.eq.s32.totalorder %s19, 3
      %p257 = por %p255, %p256
      %p258 = scmp.ne.s32.totalorder %s247, %s248
      %p259 = scmp.eq.s32.totalorder %s19, 0
      %p260 = por %p258, %p259
      %p261 = scmp.ne.s32.totalorder %s247, %s248
      %p262 = scmp.eq.s32.totalorder %s20, 3
      %p263 = por %p261, %p262
      %p265 = scmp.ne.s32.totalorder %s248, %s264
      %p266 = scmp.eq.s32.totalorder %s20, 0
      %p267 = por %p265, %p266
      %p268 = scmp.le.s32.totalorder 1, %s14
      %p269 = scmp.lt.s32.totalorder %s14, 5
      %p270 = pnand %p268, %p269
      %p271 = pneg %p270
      // Predicated region
      $region9: #{continuous_local_transformer_forward.10} parent=5 // pred_check
        _
      $region10: #{continuous_local_transformer_forward.10} parent=5 // pred_check_branch
        %273 = sbr.rel (%p270) target = $region12
      $region11: #{continuous_local_transformer_forward.10} parent=5 // pred_region
        %s274 = ssub.s32 %s14, 1
        // Predicated region
        $region13: #{continuous_local_transformer_forward.10} parent=11 // pred_check
          %p275 = pneg %p179
        $region14: #{continuous_local_transformer_forward.10} parent=11 // pred_check_branch
          %277 = sbr.rel (%p275) target = $region16
        $region15: #{continuous_local_transformer_forward.10} parent=11 // pred_region
          _
        $region16: #{continuous_local_transformer_forward.10} parent=11 // pred_fallthru
          _
        // Predicated region
        $region17: #{continuous_local_transformer_forward.10} parent=11 // pred_check
          %p278 = pneg %p200
        $region18: #{continuous_local_transformer_forward.10} parent=11 // pred_check_branch
          %280 = sbr.rel (%p278) target = $region20
        $region19: #{continuous_local_transformer_forward.10} parent=11 // pred_region
          %282 = vsyncadd [#allocation4], 0
          %s283 = sshll.u32 %s5, 4
          %s284 = int_to_ptr.hbm [resolvable:$true] %s283
          %s285 = sshll.u32 [#allocation3], 4
          %s286 = int_to_ptr.vmem [resolvable:$true] %s285
          %291 = dma.hbm_to_vmem [thread:$0]  %s284, 1024, %s286, [#allocation4], 128, 128, 8
        $region20: #{continuous_local_transformer_forward.10} parent=11 // pred_fallthru
          _
      $region12: #{continuous_local_transformer_forward.10} parent=5 // pred_fallthru
        _
      %p292 = scmp.lt.s32.totalorder %s14, 4
      // Predicated region
      $region21: #{continuous_local_transformer_forward.10} parent=5 // pred_check
        %p293 = pneg %p292
      $region22: #{continuous_local_transformer_forward.10} parent=5 // pred_check_branch
        %295 = sbr.rel (%p293) target = $region24
      $region23: #{continuous_local_transformer_forward.10} parent=5 // pred_region
        // Predicated region
        $region25: #{continuous_local_transformer_forward.10} parent=23 // pred_check
          %p296 = pneg %p50
        $region26: #{continuous_local_transformer_forward.10} parent=23 // pred_check_branch
          %298 = sbr.rel (%p296) target = $region28
        $region27: #{continuous_local_transformer_forward.10} parent=23 // pred_region
          %s299 = smul.u32 %s21, 2
          %s300 = sadd.s32 %s299, %s22
          %p301 = scmp.lt.s32.totalorder %s300, 3
          %s302 = scalar_select %p301, %s300, 3
          %s303 = smul.addr %s302, 8
          %s304 = scalar_lea.vmem %s0, %s303
          %s305 = smul.u32 %s21, 2
          %s306 = sadd.s32 %s305, %s22
        $region28: #{continuous_local_transformer_forward.10} parent=23 // pred_fallthru
          _
        // Predicated region
        $region29: #{continuous_local_transformer_forward.10} parent=23 // pred_check
          %p307 = pneg %p80
        $region30: #{continuous_local_transformer_forward.10} parent=23 // pred_check_branch
          %309 = sbr.rel (%p307) target = $region32
        $region31: #{continuous_local_transformer_forward.10} parent=23 // pred_region
          %s310 = smul.u32 %s21, 2
          %s311 = sadd.s32 %s310, %s22
          %p312 = scmp.lt.s32.totalorder %s311, 3
          %s313 = scalar_select %p312, %s311, 3
          %s314 = smul.addr %s313, 8
          %s315 = scalar_lea.vmem %s1, %s314
          %s316 = smul.u32 %s21, 2
          %s317 = sadd.s32 %s316, %s22
        $region32: #{continuous_local_transformer_forward.10} parent=23 // pred_fallthru
          _
        // Predicated region
        $region33: #{continuous_local_transformer_forward.10} parent=23 // pred_check
          %p318 = pneg %p116
        $region34: #{continuous_local_transformer_forward.10} parent=23 // pred_check_branch
          %320 = sbr.rel (%p318) target = $region36
        $region35: #{continuous_local_transformer_forward.10} parent=23 // pred_region
          %s321 = smul.u32 %s21, 2
          %s322 = ssub.s32 %s22, 1
          %p323 = scmp.gt.s32.totalorder %s322, 0
          %s324 = scalar_select %p323, %s322, 0
          %s325 = sadd.s32 %s321, %s324
          %p326 = scmp.lt.s32.totalorder %s325, 3
          %s327 = scalar_select %p326, %s325, 3
          %s328 = smul.addr %s327, 8
          %s329 = scalar_lea.vmem %s2, %s328
          %s330 = smul.u32 %s21, 2
          %s331 = ssub.s32 %s22, 1
          %p332 = scmp.gt.s32.totalorder %s331, 0
          %s333 = scalar_select %p332, %s331, 0
          %s334 = sadd.s32 %s330, %s333
        $region36: #{continuous_local_transformer_forward.10} parent=23 // pred_fallthru
          _
        // Predicated region
        $region37: #{continuous_local_transformer_forward.10} parent=23 // pred_check
          %p335 = pneg %p152
        $region38: #{continuous_local_transformer_forward.10} parent=23 // pred_check_branch
          %337 = sbr.rel (%p335) target = $region40
        $region39: #{continuous_local_transformer_forward.10} parent=23 // pred_region
          %s338 = smul.u32 %s21, 2
          %s339 = sadd.s32 %s22, 1
          %p340 = scmp.lt.s32.totalorder %s339, 1
          %s341 = scalar_select %p340, %s339, 1
          %s342 = sadd.s32 %s338, %s341
          %p343 = scmp.lt.s32.totalorder %s342, 3
          %s344 = scalar_select %p343, %s342, 3
          %s345 = smul.addr %s344, 8
          %s346 = scalar_lea.vmem %s3, %s345
          %s347 = smul.u32 %s21, 2
          %s348 = sadd.s32 %s22, 1
          %p349 = scmp.lt.s32.totalorder %s348, 1
          %s350 = scalar_select %p349, %s348, 1
          %s351 = sadd.s32 %s347, %s350
        $region40: #{continuous_local_transformer_forward.10} parent=23 // pred_fallthru
          _
        // Predicated region
        $region41: #{continuous_local_transformer_forward.10} parent=23 // pred_check
          %p352 = pneg %p224
        $region42: #{continuous_local_transformer_forward.10} parent=23 // pred_check_branch
          %354 = sbr.rel (%p352) target = $region44
        $region43: #{continuous_local_transformer_forward.10} parent=23 // pred_region
          %s355 = smul.u32 %s21, 2
          %s356 = sadd.s32 %s355, %s22
          %p357 = scmp.lt.s32.totalorder %s356, 3
          %s358 = scalar_select %p357, %s356, 3
          %s359 = smul.addr %s358, 8
          %s360 = scalar_lea.vmem %s6, %s359
          %s361 = smul.u32 %s21, 2
          %s362 = sadd.s32 %s361, %s22
        $region44: #{continuous_local_transformer_forward.10} parent=23 // pred_fallthru
          _
      $region24: #{continuous_local_transformer_forward.10} parent=5 // pred_fallthru
        _
      %p363 = scmp.le.s32.totalorder 1, %s14
      %p364 = scmp.lt.s32.totalorder %s14, 5
      %p365 = pnand %p363, %p364
      %p366 = pneg %p365
      // Predicated region
      $region45: #{continuous_local_transformer_forward.10} parent=5 // pred_check
        _
      $region46: #{continuous_local_transformer_forward.10} parent=5 // pred_check_branch
        %368 = sbr.rel (%p365) target = $region48
      $region47: #{continuous_local_transformer_forward.10} parent=5 // pred_region
        %s369 = ssub.s32 %s14, 1
        // Predicated region
        $region49: #{continuous_local_transformer_forward.10} parent=47 // pred_check
          %p370 = pneg %p200
        $region50: #{continuous_local_transformer_forward.10} parent=47 // pred_check_branch
          %372 = sbr.rel (%p370) target = $region52
        $region51: #{continuous_local_transformer_forward.10} parent=47 // pred_region
          %374 = dma.done [#allocation4], 1024
        $region52: #{continuous_local_transformer_forward.10} parent=47 // pred_fallthru
          _
        %s375 = smul.u32 %s23, 2
        %s376 = sadd.s32 %s375, %s24
        %p377 = scmp.lt.s32.totalorder %s376, 3
        %s378 = scalar_select %p377, %s376, 3
        %s379 = smul.addr %s378, 8
        %s380 = scalar_lea.vmem %s0, %s379
        %p381 = pneg %p56
        %p382 = pneg %p53
        %s383 = smul.u32 %s23, 2
        %s384 = sadd.s32 %s383, %s24
        %p385 = scmp.lt.s32.totalorder %s384, 3
        %s386 = scalar_select %p385, %s384, 3
        %s387 = smul.addr %s386, 8
        %s388 = scalar_lea.vmem %s1, %s387
        %p389 = pneg %p86
        %p390 = pneg %p83
        %s391 = smul.u32 %s23, 2
        %s392 = ssub.s32 %s24, 1
        %p393 = scmp.gt.s32.totalorder %s392, 0
        %s394 = scalar_select %p393, %s392, 0
        %s395 = sadd.s32 %s391, %s394
        %p396 = scmp.lt.s32.totalorder %s395, 3
        %s397 = scalar_select %p396, %s395, 3
        %s398 = smul.addr %s397, 8
        %s399 = scalar_lea.vmem %s2, %s398
        %p400 = pneg %p122
        %p401 = pneg %p119
        %s402 = smul.u32 %s23, 2
        %s403 = sadd.s32 %s24, 1
        %p404 = scmp.lt.s32.totalorder %s403, 1
        %s405 = scalar_select %p404, %s403, 1
        %s406 = sadd.s32 %s402, %s405
        %p407 = scmp.lt.s32.totalorder %s406, 3
        %s408 = scalar_select %p407, %s406, 3
        %s409 = smul.addr %s408, 8
        %s410 = scalar_lea.vmem %s3, %s409
        %p411 = pneg %p158
        %p412 = pneg %p155
        %p413 = pneg %p179
        %p414 = pneg %p176
        %p415 = pneg %p200
        %p416 = pneg %p197
        %s417 = smul.u32 %s23, 2
        %s418 = sadd.s32 %s417, %s24
        %p419 = scmp.lt.s32.totalorder %s418, 3
        %s420 = scalar_select %p419, %s418, 3
        %s421 = smul.addr %s420, 8
        %s422 = scalar_lea.vmem %s6, %s421
        %p423 = pneg %p230
        %p424 = pneg %p227
        %p425 = pneg %p260
        %p426 = pneg %p257
        %s427 = smul.u32 %s23, 2
        %s428 = sadd.s32 %s427, %s24
        %p429 = scmp.lt.s32.totalorder %s428, 3
        %s430 = scalar_select %p429, %s428, 3
        %s431 = smul.addr %s430, 8
        %s432 = scalar_lea.vmem %s7, %s431
        %s433 = smul.u32 %s23, 2
        %s434 = sadd.s32 %s433, %s24
        %p435 = scmp.lt.s32.totalorder %s434, 3
        %s436 = scalar_select %p435, %s434, 3
        %s437 = smul.addr %s436, 8
        %s438 = scalar_lea.vmem %s0, %s437
        %s439 = smul.u32 %s23, 2
        %s440 = sadd.s32 %s439, %s24
        %s441 = smul.u32 %s23, 2
        %s442 = sadd.s32 %s441, %s24
        %p443 = scmp.lt.s32.totalorder %s442, 3
        %s444 = scalar_select %p443, %s442, 3
        %s445 = smul.addr %s444, 8
        %s446 = scalar_lea.vmem %s1, %s445
        %s447 = smul.u32 %s23, 2
        %s448 = sadd.s32 %s447, %s24
        %s449 = smul.u32 %s23, 2
        %s450 = ssub.s32 %s24, 1
        %p451 = scmp.gt.s32.totalorder %s450, 0
        %s452 = scalar_select %p451, %s450, 0
        %s453 = sadd.s32 %s449, %s452
        %p454 = scmp.lt.s32.totalorder %s453, 3
        %s455 = scalar_select %p454, %s453, 3
        %s456 = smul.addr %s455, 8
        %s457 = scalar_lea.vmem %s2, %s456
        %s458 = smul.u32 %s23, 2
        %s459 = ssub.s32 %s24, 1
        %p460 = scmp.gt.s32.totalorder %s459, 0
        %s461 = scalar_select %p460, %s459, 0
        %s462 = sadd.s32 %s458, %s461
        %s463 = smul.u32 %s23, 2
        %s464 = sadd.s32 %s24, 1
        %p465 = scmp.lt.s32.totalorder %s464, 1
        %s466 = scalar_select %p465, %s464, 1
        %s467 = sadd.s32 %s463, %s466
        %p468 = scmp.lt.s32.totalorder %s467, 3
        %s469 = scalar_select %p468, %s467, 3
        %s470 = smul.addr %s469, 8
        %s471 = scalar_lea.vmem %s3, %s470
        %s472 = smul.u32 %s23, 2
        %s473 = sadd.s32 %s24, 1
        %p474 = scmp.lt.s32.totalorder %s473, 1
        %s475 = scalar_select %p474, %s473, 1
        %s476 = sadd.s32 %s472, %s475
        %s477 = smul.u32 %s23, 2
        %s478 = sadd.s32 %s477, %s24
        %p479 = scmp.lt.s32.totalorder %s478, 3
        %s480 = scalar_select %p479, %s478, 3
        %s481 = smul.addr %s480, 8
        %s482 = scalar_lea.vmem %s6, %s481
        %s483 = smul.u32 %s23, 2
        %s484 = sadd.s32 %s483, %s24
        %s485 = smul.u32 %s23, 2
        %s486 = sadd.s32 %s485, %s24
        %p487 = scmp.lt.s32.totalorder %s486, 3
        %s488 = scalar_select %p487, %s486, 3
        %s489 = smul.addr %s488, 8
        %s490 = scalar_lea.vmem %s7, %s489
        %s491 = smul.u32 %s23, 2
        %s492 = sadd.s32 %s491, %s24
        %s494 = ssub.s32 %s24, 1
        %p495 = scmp.gt.s32.totalorder %s494, 0
        %s496 = scalar_select %p495, %s494, 0
        %s497 = sadd.s32 %s24, 1
        %p498 = scmp.lt.s32.totalorder %s497, 1
        %s499 = scalar_select %p498, %s497, 1
        %v500 = vld [vmem:[%s438] sm:$0xff]
        %v501 = vld [vmem:[%s457] sm:$0xff]
        %v502 = vld [vmem:[%s446] sm:$0xff]
        %v503 = vld [vmem:[%s471] sm:$0xff]
        %v504 = vld [vmem:[%s4] sm:$0x1]
        %v505 = vlaneseq
        %v506 = vshrl.u32 %v505, 7
        %v507 = vlaneseq
        %v508 = vand.u32 %v507, 127
        %s509 = smul.u32 %s24, 8
        %v510 = vstv %s509
        %v511 = vadd.s32 %v510, %v506
        %s512 = smul.u32 %s496, 8
        %v513 = vstv %s512
        %v514 = vadd.s32 %v513, %v506
        %s515 = smul.u32 %s499, 8
        %v516 = vstv %s515
        %v517 = vadd.s32 %v516, %v506
        %p518 = scmp.gt.s32.totalorder %s24, 0
        %v519 = vadd.s32 %v513, %v508
        %s520 = scalar_select %p518, 1, 0
        %v521 = vstv %s520
        %vm522 = vcmp.eq.s32.totalorder %v521, 1
        %v523 = vsel %vm522, %v519, 4294967273
        %p524 = scmp.lt.s32.totalorder %s24, 1
        %v525 = vadd.s32 %v516, %v508
        %s526 = scalar_select %p524, 1, 0
        %v527 = vstv %s526
        %vm528 = vcmp.eq.s32.totalorder %v527, 1
        %v529 = vsel %vm528, %v525, 4294967273
        %v530 = vadd.s32 %v510, %v508
        %531 = vrot.lane.b32.xlu0 %v530, 8
        %v532 = vpop.permute.xlu0 %531
        %533 = vrot.lane.b32.xlu0 %v529, 16
        %v534 = vpop.permute.xlu0 %533
        %vm535 = vcmask 64512
        %v536 = vsel %vm535, %v523, %v532
        %vm537 = vcmask 130048
        %v538 = vsel %vm537, %v536, %v534
        %v539 = vsub.s32 %v511, 2
        %vm540 = vcmp.gt.s32.totalorder %v539, 0
        %v541 = vsel %vm540, %v539, 0
        %vm542 = vcmp.lt.s32.totalorder %v541, 11
        %v543 = vsel %vm542, %v541, 11
        %v544 = vperm.slane %v538, 0
        %vm545 = vcmp.ge.s32.totalorder %v544, %v543
        %v546 = vadd.s32 %v543, 5
        %vm547 = vcmp.lt.s32.totalorder %v544, %v546
        %vm548 = vmand %vm545, %vm547
        %v549 = vcvt.s32.f32 %v511
        %v551 = vperm.slane %v504, 0
        %v553 = vmul.f32 %v549, %v551
        %v554 = vand.u32 2147483647, %v553
        %vm555 = vcmp.le.f32.partialorder %v554, 0.7853982
        %vm556 = vcmp.lt.s32.totalorder %v553, 0
        %v557 = vand.u32 %v553, 2139095040
        %v558 = vshrl.u32 %v557, 23
        %v559 = vsub.s32 %v558, 127
        %v560 = vand.u32 2147483647, %v553
        %v561 = vand.u32 %v560, 8388607
        %v562 = vor.u32 %v561, 8388608
        %v563 = vsub.s32 0, %v562
        %v564 = vadd.s32 %v559, 1
        %vm565 = vcmp.gt.s32.totalorder %v564, 0
        %v566 = vsel %vm565, %v564, 0
        %v567 = vshrl.u32 %v566, 5
        %v568 = vand.u32 %v566, 31
        %v569 = vsub.s32 32, %v568
        %v570 = vshrl.u32 683565275, %v569
        %v571 = vshll.u32 683565275, %v568
        %v572 = vshrl.u32 2475754826, %v569
        %v573 = vor.u32 %v571, %v572
        %v574 = vshll.u32 2475754826, %v568
        %v575 = vshrl.u32 2131351028, %v569
        %v576 = vor.u32 %v574, %v575
        %v577 = vshll.u32 2131351028, %v568
        %v578 = vshrl.u32 2102212464, %v569
        %v579 = vor.u32 %v577, %v578
        %v580 = vshll.u32 2102212464, %v568
        %v581 = vshrl.u32 920167782, %v569
        %v582 = vor.u32 %v580, %v581
        %v583 = vshll.u32 920167782, %v568
        %v584 = vshrl.u32 1326507024, %v569
        %v585 = vor.u32 %v583, %v584
        %vm586 = vcmp.lt.s32.totalorder %v567, 1
        %vm587 = vcmp.lt.s32.totalorder %v567, 2
        %vm588 = vcmp.lt.s32.totalorder %v567, 3
        %vm589 = vcmp.lt.s32.totalorder %v567, 4
        %v590 = vsel %vm586, %v570, %v573
        %v591 = vsel %vm589, %v579, 2102212464
        %v592 = vsel %vm588, %v576, %v591
        %v593 = vsel %vm587, %v590, %v592
        %v594 = vsel %vm586, %v573, %v576
        %v595 = vsel %vm589, %v582, 920167782
        %v596 = vsel %vm588, %v579, %v595
        %v597 = vsel %vm587, %v594, %v596
        %v598 = vsel %vm586, %v576, %v579
        %v599 = vsel %vm589, %v585, 1326507024
        %v600 = vsel %vm588, %v582, %v599
        %v601 = vsel %vm587, %v598, %v600
        %v602 = vshll.u32 %v562, 8
        %v603 = vand.u32 %v602, 65535
        %v604 = vshrl.u32 %v602, 16
        %v605 = vand.u32 %v601, 65535
        %v606 = vshrl.u32 %v601, 16
        %v607 = vmul.u32 %v603, %v605
        %v608 = vmul.u32 %v603, %v606
        %v609 = vmul.u32 %v604, %v605
        %v610 = vmul.u32 %v604, %v606
        %v611 = vshll.u32 %v608, 16
        %v612 = vshrl.u32 %v608, 16
        %v613 = vshll.u32 %v609, 16
        %v614 = vshrl.u32 %v609, 16
        %vm615 = vc.u32 %v607, %v611
        %v616 = vsel %vm615, 1, 0
        %v617 = vadd.s32 %v607, %v611
        %v618 = vadd.s32 %v610, %v616
        %vm619 = vc.u32 %v617, %v613
        %v620 = vsel %vm619, 1, 0
        %v621 = vadd.s32 %v617, %v613
        %v622 = vadd.s32 %v618, %v620
        %v623 = vadd.s32 %v622, %v612
        %v624 = vadd.s32 %v623, %v614
        %v625 = vand.u32 %v602, 65535
        %v626 = vshrl.u32 %v602, 16
        %v627 = vand.u32 %v597, 65535
        %v628 = vshrl.u32 %v597, 16
        %v629 = vmul.u32 %v625, %v627
        %v630 = vmul.u32 %v625, %v628
        %v631 = vmul.u32 %v626, %v627
        %v632 = vmul.u32 %v626, %v628
        %v633 = vshll.u32 %v630, 16
        %v634 = vshrl.u32 %v630, 16
        %v635 = vshll.u32 %v631, 16
        %v636 = vshrl.u32 %v631, 16
        %vm637 = vc.u32 %v629, %v633
        %v638 = vsel %vm637, 1, 0
        %v639 = vadd.s32 %v629, %v633
        %v640 = vadd.s32 %v632, %v638
        %vm641 = vc.u32 %v639, %v635
        %v642 = vsel %vm641, 1, 0
        %v643 = vadd.s32 %v639, %v635
        %v644 = vadd.s32 %v640, %v642
        %v645 = vadd.s32 %v644, %v634
        %v646 = vadd.s32 %v645, %v636
        %v647 = vmul.u32 %v602, %v593
        %v648 = vadd.s32 %v624, %v643
        %vm649 = vc.u32 %v624, %v643
        %v650 = vadd.s32 %v646, 1
        %v651 = vsel %vm649, %v650, %v646
        %v652 = vadd.s32 %v647, %v651
        %v653 = vadd.s32 %v652, 536870912
        %v654 = vshrl.u32 %v653, 30
        %v655 = vshll.u32 %v654, 30
        %v656 = vsub.s32 %v652, %v655
        %vm657 = vcmp.lt.s32.totalorder %v656, 0
        %v658 = vsub.s32 0, %v656
        %v659 = vsel %vm657, %v658, %v656
        %v660 = vclz %v659
        %v661 = vsub.s32 %v660, 2
        %vm662 = vcmp.gt.s32.totalorder 0, %v661
        %v663 = vsel %vm662, 0, %v661
        %v664 = vsub.s32 32, %v663
        %v665 = vshll.u32 %v656, %v663
        %v666 = vshrl.u32 %v648, %v664
        %v667 = vor.u32 %v665, %v666
        %v668 = vsub.s32 4294967266, %v663
        %v669 = vadd.s32 %v668, 127
        %v670 = vshll.u32 %v669, 23
        %v671 = vor.u32 4788187, %v670
        %v672 = vand.u32 2147483647, %v671
        %v674 = vcvt.s32.f32 %v667
        %v675 = vmul.f32 %v674, %v672
        %v676 = vxor.u32 %v675, 2147483648
        %v677 = vsel %vm556, %v676, %v675
        %v678 = vsub.s32 4, %v654
        %v679 = vsel %vm556, %v678, %v654
        %v680 = vsel %vm555, %v553, %v677
        %v681 = vsel %vm555, 0, %v679
        %v682 = vmul.f32 %v680, %v680
        %v683 = vmul.f32 %v682, -0.001358992
        %v684 = vadd.f32 %v683, 0.041655596
        %v685 = vmul.f32 %v682, %v684
        %v686 = vadd.f32 %v685, -0.4999988
        %v687 = vmul.f32 %v682, %v686
        %v688 = vadd.f32 1.0, %v687
        %v689 = vmul.f32 %v680, %v680
        %v690 = vmul.f32 %v689, -0.00019511016
        %v691 = vadd.f32 %v690, 0.008332121
        %v692 = vmul.f32 %v689, %v691
        %v693 = vadd.f32 %v692, -0.16666654
        %v694 = vmul.f32 %v689, %v693
        %v695 = vadd.f32 %v694, 1.0
        %v696 = vmul.f32 %v695, %v680
        %vm697 = vweird.f32 %v553
        %v698 = vand.u32 %v681, 3
        %vm699 = vcmp.lt.s32.totalorder %v698, 2
        %vm700 = vcmp.eq.s32.totalorder %v698, 0
        %v701 = vxor.u32 %v696, 2147483648
        %v702 = vsel %vm700, %v688, %v701
        %vm703 = vcmp.eq.s32.totalorder %v698, 2
        %v704 = vxor.u32 %v688, 2147483648
        %v705 = vsel %vm703, %v704, %v696
        %v706 = vsel %vm699, %v702, %v705
        %v707 = vsel %vm697, nan, %v706
        %v708 = vand.u32 2147483647, %v553
        %vm709 = vcmp.le.f32.partialorder %v708, 0.7853982
        %vm710 = vcmp.lt.s32.totalorder %v553, 0
        %v711 = vand.u32 %v553, 2139095040
        %v712 = vshrl.u32 %v711, 23
        %v713 = vsub.s32 %v712, 127
        %v714 = vand.u32 2147483647, %v553
        %v715 = vand.u32 %v714, 8388607
        %v716 = vor.u32 %v715, 8388608
        %v717 = vsub.s32 0, %v716
        %v718 = vadd.s32 %v713, 1
        %vm719 = vcmp.gt.s32.totalorder %v718, 0
        %v720 = vsel %vm719, %v718, 0
        %v721 = vshrl.u32 %v720, 5
        %v722 = vand.u32 %v720, 31
        %v723 = vsub.s32 32, %v722
        %v724 = vshrl.u32 683565275, %v723
        %v725 = vshll.u32 683565275, %v722
        %v726 = vshrl.u32 2475754826, %v723
        %v727 = vor.u32 %v725, %v726
        %v728 = vshll.u32 2475754826, %v722
        %v729 = vshrl.u32 2131351028, %v723
        %v730 = vor.u32 %v728, %v729
        %v731 = vshll.u32 2131351028, %v722
        %v732 = vshrl.u32 2102212464, %v723
        %v733 = vor.u32 %v731, %v732
        %v734 = vshll.u32 2102212464, %v722
        %v735 = vshrl.u32 920167782, %v723
        %v736 = vor.u32 %v734, %v735
        %v737 = vshll.u32 920167782, %v722
        %v738 = vshrl.u32 1326507024, %v723
        %v739 = vor.u32 %v737, %v738
        %vm740 = vcmp.lt.s32.totalorder %v721, 1
        %vm741 = vcmp.lt.s32.totalorder %v721, 2
        %vm742 = vcmp.lt.s32.totalorder %v721, 3
        %vm743 = vcmp.lt.s32.totalorder %v721, 4
        %v744 = vsel %vm740, %v724, %v727
        %v745 = vsel %vm743, %v733, 2102212464
        %v746 = vsel %vm742, %v730, %v745
        %v747 = vsel %vm741, %v744, %v746
        %v748 = vsel %vm740, %v727, %v730
        %v749 = vsel %vm743, %v736, 920167782
        %v750 = vsel %vm742, %v733, %v749
        %v751 = vsel %vm741, %v748, %v750
        %v752 = vsel %vm740, %v730, %v733
        %v753 = vsel %vm743, %v739, 1326507024
        %v754 = vsel %vm742, %v736, %v753
        %v755 = vsel %vm741, %v752, %v754
        %v756 = vshll.u32 %v716, 8
        %v757 = vand.u32 %v756, 65535
        %v758 = vshrl.u32 %v756, 16
        %v759 = vand.u32 %v755, 65535
        %v760 = vshrl.u32 %v755, 16
        %v761 = vmul.u32 %v757, %v759
        %v762 = vmul.u32 %v757, %v760
        %v763 = vmul.u32 %v758, %v759
        %v764 = vmul.u32 %v758, %v760
        %v765 = vshll.u32 %v762, 16
        %v766 = vshrl.u32 %v762, 16
        %v767 = vshll.u32 %v763, 16
        %v768 = vshrl.u32 %v763, 16
        %vm769 = vc.u32 %v761, %v765
        %v770 = vsel %vm769, 1, 0
        %v771 = vadd.s32 %v761, %v765
        %v772 = vadd.s32 %v764, %v770
        %vm773 = vc.u32 %v771, %v767
        %v774 = vsel %vm773, 1, 0
        %v775 = vadd.s32 %v771, %v767
        %v776 = vadd.s32 %v772, %v774
        %v777 = vadd.s32 %v776, %v766
        %v778 = vadd.s32 %v777, %v768
        %v779 = vand.u32 %v756, 65535
        %v780 = vshrl.u32 %v756, 16
        %v781 = vand.u32 %v751, 65535
        %v782 = vshrl.u32 %v751, 16
        %v783 = vmul.u32 %v779, %v781
        %v784 = vmul.u32 %v779, %v782
        %v785 = vmul.u32 %v780, %v781
        %v786 = vmul.u32 %v780, %v782
        %v787 = vshll.u32 %v784, 16
        %v788 = vshrl.u32 %v784, 16
        %v789 = vshll.u32 %v785, 16
        %v790 = vshrl.u32 %v785, 16
        %vm791 = vc.u32 %v783, %v787
        %v792 = vsel %vm791, 1, 0
        %v793 = vadd.s32 %v783, %v787
        %v794 = vadd.s32 %v786, %v792
        %vm795 = vc.u32 %v793, %v789
        %v796 = vsel %vm795, 1, 0
        %v797 = vadd.s32 %v793, %v789
        %v798 = vadd.s32 %v794, %v796
        %v799 = vadd.s32 %v798, %v788
        %v800 = vadd.s32 %v799, %v790
        %v801 = vmul.u32 %v756, %v747
        %v802 = vadd.s32 %v778, %v797
        %vm803 = vc.u32 %v778, %v797
        %v804 = vadd.s32 %v800, 1
        %v805 = vsel %vm803, %v804, %v800
        %v806 = vadd.s32 %v801, %v805
        %v807 = vadd.s32 %v806, 536870912
        %v808 = vshrl.u32 %v807, 30
        %v809 = vshll.u32 %v808, 30
        %v810 = vsub.s32 %v806, %v809
        %vm811 = vcmp.lt.s32.totalorder %v810, 0
        %v812 = vsub.s32 0, %v810
        %v813 = vsel %vm811, %v812, %v810
        %v814 = vclz %v813
        %v815 = vsub.s32 %v814, 2
        %vm816 = vcmp.gt.s32.totalorder 0, %v815
        %v817 = vsel %vm816, 0, %v815
        %v818 = vsub.s32 32, %v817
        %v819 = vshll.u32 %v810, %v817
        %v820 = vshrl.u32 %v802, %v818
        %v821 = vor.u32 %v819, %v820
        %v822 = vsub.s32 4294967266, %v817
        %v823 = vadd.s32 %v822, 127
        %v824 = vshll.u32 %v823, 23
        %v825 = vor.u32 4788187, %v824
        %v826 = vand.u32 2147483647, %v825
        %v828 = vcvt.s32.f32 %v821
        %v829 = vmul.f32 %v828, %v826
        %v830 = vxor.u32 %v829, 2147483648
        %v831 = vsel %vm710, %v830, %v829
        %v832 = vsub.s32 4, %v808
        %v833 = vsel %vm710, %v832, %v808
        %v834 = vsel %vm709, %v553, %v831
        %v835 = vsel %vm709, 0, %v833
        %v836 = vmul.f32 %v834, %v834
        %v837 = vmul.f32 %v836, -0.001358992
        %v838 = vadd.f32 %v837, 0.041655596
        %v839 = vmul.f32 %v836, %v838
        %v840 = vadd.f32 %v839, -0.4999988
        %v841 = vmul.f32 %v836, %v840
        %v842 = vadd.f32 1.0, %v841
        %v843 = vmul.f32 %v834, %v834
        %v844 = vmul.f32 %v843, -0.00019511016
        %v845 = vadd.f32 %v844, 0.008332121
        %v846 = vmul.f32 %v843, %v845
        %v847 = vadd.f32 %v846, -0.16666654
        %v848 = vmul.f32 %v843, %v847
        %v849 = vadd.f32 %v848, 1.0
        %v850 = vmul.f32 %v849, %v834
        %vm851 = vweird.f32 %v553
        %v852 = vadd.s32 %v835, 3
        %v853 = vand.u32 %v852, 3
        %vm854 = vcmp.lt.s32.totalorder %v853, 2
        %vm855 = vcmp.eq.s32.totalorder %v853, 0
        %v856 = vxor.u32 %v850, 2147483648
        %v857 = vsel %vm855, %v842, %v856
        %vm858 = vcmp.eq.s32.totalorder %v853, 2
        %v859 = vxor.u32 %v842, 2147483648
        %v860 = vsel %vm858, %v859, %v850
        %v861 = vsel %vm854, %v857, %v860
        %v862 = vsel %vm851, nan, %v861
        %v863 = vcvt.s32.f32 %v514
        %v864 = vcvt.s32.f32 %v517
        %866 = vset.pattern.permute.xlu0 0
        %867 = vperm.xlu0 %866, %v863
        %v868 = vpop.permute.xlu0 %867
        %871 = vset.pattern.permute.xlu0 0
        %872 = vperm.xlu0 %871, %v549
        %v873 = vpop.permute.xlu0 %872
        %876 = vset.pattern.permute.xlu0 0
        %877 = vperm.xlu0 %876, %v864
        %v878 = vpop.permute.xlu0 %877
        %v880 = vmul.f32 %v868, %v551
        %v881 = vmul.f32 %v873, %v551
        %v882 = vmul.f32 %v878, %v551
        %v883 = vand.u32 2147483647, %v880
        %vm884 = vcmp.le.f32.partialorder %v883, 0.7853982
        %vm885 = vcmp.lt.s32.totalorder %v880, 0
        %v886 = vand.u32 %v880, 2139095040
        %v887 = vshrl.u32 %v886, 23
        %v888 = vsub.s32 %v887, 127
        %v889 = vand.u32 2147483647, %v880
        %v890 = vand.u32 %v889, 8388607
        %v891 = vor.u32 %v890, 8388608
        %v892 = vsub.s32 0, %v891
        %v893 = vadd.s32 %v888, 1
        %vm894 = vcmp.gt.s32.totalorder %v893, 0
        %v895 = vsel %vm894, %v893, 0
        %v896 = vshrl.u32 %v895, 5
        %v897 = vand.u32 %v895, 31
        %v898 = vsub.s32 32, %v897
        %v899 = vshrl.u32 683565275, %v898
        %v900 = vshll.u32 683565275, %v897
        %v901 = vshrl.u32 2475754826, %v898
        %v902 = vor.u32 %v900, %v901
        %v903 = vshll.u32 2475754826, %v897
        %v904 = vshrl.u32 2131351028, %v898
        %v905 = vor.u32 %v903, %v904
        %v906 = vshll.u32 2131351028, %v897
        %v907 = vshrl.u32 2102212464, %v898
        %v908 = vor.u32 %v906, %v907
        %v909 = vshll.u32 2102212464, %v897
        %v910 = vshrl.u32 920167782, %v898
        %v911 = vor.u32 %v909, %v910
        %v912 = vshll.u32 920167782, %v897
        %v913 = vshrl.u32 1326507024, %v898
        %v914 = vor.u32 %v912, %v913
        %vm915 = vcmp.lt.s32.totalorder %v896, 1
        %vm916 = vcmp.lt.s32.totalorder %v896, 2
        %vm917 = vcmp.lt.s32.totalorder %v896, 3
        %vm918 = vcmp.lt.s32.totalorder %v896, 4
        %v919 = vsel %vm915, %v899, %v902
        %v920 = vsel %vm918, %v908, 2102212464
        %v921 = vsel %vm917, %v905, %v920
        %v922 = vsel %vm916, %v919, %v921
        %v923 = vsel %vm915, %v902, %v905
        %v924 = vsel %vm918, %v911, 920167782
        %v925 = vsel %vm917, %v908, %v924
        %v926 = vsel %vm916, %v923, %v925
        %v927 = vsel %vm915, %v905, %v908
        %v928 = vsel %vm918, %v914, 1326507024
        %v929 = vsel %vm917, %v911, %v928
        %v930 = vsel %vm916, %v927, %v929
        %v931 = vshll.u32 %v891, 8
        %v932 = vand.u32 %v931, 65535
        %v933 = vshrl.u32 %v931, 16
        %v934 = vand.u32 %v930, 65535
        %v935 = vshrl.u32 %v930, 16
        %v936 = vmul.u32 %v932, %v934
        %v937 = vmul.u32 %v932, %v935
        %v938 = vmul.u32 %v933, %v934
        %v939 = vmul.u32 %v933, %v935
        %v940 = vshll.u32 %v937, 16
        %v941 = vshrl.u32 %v937, 16
        %v942 = vshll.u32 %v938, 16
        %v943 = vshrl.u32 %v938, 16
        %vm944 = vc.u32 %v936, %v940
        %v945 = vsel %vm944, 1, 0
        %v946 = vadd.s32 %v936, %v940
        %v947 = vadd.s32 %v939, %v945
        %vm948 = vc.u32 %v946, %v942
        %v949 = vsel %vm948, 1, 0
        %v950 = vadd.s32 %v946, %v942
        %v951 = vadd.s32 %v947, %v949
        %v952 = vadd.s32 %v951, %v941
        %v953 = vadd.s32 %v952, %v943
        %v954 = vand.u32 %v931, 65535
        %v955 = vshrl.u32 %v931, 16
        %v956 = vand.u32 %v926, 65535
        %v957 = vshrl.u32 %v926, 16
        %v958 = vmul.u32 %v954, %v956
        %v959 = vmul.u32 %v954, %v957
        %v960 = vmul.u32 %v955, %v956
        %v961 = vmul.u32 %v955, %v957
        %v962 = vshll.u32 %v959, 16
        %v963 = vshrl.u32 %v959, 16
        %v964 = vshll.u32 %v960, 16
        %v965 = vshrl.u32 %v960, 16
        %vm966 = vc.u32 %v958, %v962
        %v967 = vsel %vm966, 1, 0
        %v968 = vadd.s32 %v958, %v962
        %v969 = vadd.s32 %v961, %v967
        %vm970 = vc.u32 %v968, %v964
        %v971 = vsel %vm970, 1, 0
        %v972 = vadd.s32 %v968, %v964
        %v973 = vadd.s32 %v969, %v971
        %v974 = vadd.s32 %v973, %v963
        %v975 = vadd.s32 %v974, %v965
        %v976 = vmul.u32 %v931, %v922
        %v977 = vadd.s32 %v953, %v972
        %vm978 = vc.u32 %v953, %v972
        %v979 = vadd.s32 %v975, 1
        %v980 = vsel %vm978, %v979, %v975
        %v981 = vadd.s32 %v976, %v980
        %v982 = vadd.s32 %v981, 536870912
        %v983 = vshrl.u32 %v982, 30
        %v984 = vshll.u32 %v983, 30
        %v985 = vsub.s32 %v981, %v984
        %vm986 = vcmp.lt.s32.totalorder %v985, 0
        %v987 = vsub.s32 0, %v985
        %v988 = vsel %vm986, %v987, %v985
        %v989 = vclz %v988
        %v990 = vsub.s32 %v989, 2
        %vm991 = vcmp.gt.s32.totalorder 0, %v990
        %v992 = vsel %vm991, 0, %v990
        %v993 = vsub.s32 32, %v992
        %v994 = vshll.u32 %v985, %v992
        %v995 = vshrl.u32 %v977, %v993
        %v996 = vor.u32 %v994, %v995
        %v997 = vsub.s32 4294967266, %v992
        %v998 = vadd.s32 %v997, 127
        %v999 = vshll.u32 %v998, 23
        %v1000 = vor.u32 4788187, %v999
        %v1001 = vand.u32 2147483647, %v1000
        %v1003 = vcvt.s32.f32 %v996
        %v1004 = vmul.f32 %v1003, %v1001
        %v1005 = vxor.u32 %v1004, 2147483648
        %v1006 = vsel %vm885, %v1005, %v1004
        %v1007 = vsub.s32 4, %v983
        %v1008 = vsel %vm885, %v1007, %v983
        %v1009 = vsel %vm884, %v880, %v1006
        %v1010 = vsel %vm884, 0, %v1008
        %v1011 = vmul.f32 %v1009, %v1009
        %v1012 = vmul.f32 %v1011, -0.001358992
        %v1013 = vadd.f32 %v1012, 0.041655596
        %v1014 = vmul.f32 %v1011, %v1013
        %v1015 = vadd.f32 %v1014, -0.4999988
        %v1016 = vmul.f32 %v1011, %v1015
        %v1017 = vadd.f32 1.0, %v1016
        %v1018 = vmul.f32 %v1009, %v1009
        %v1019 = vmul.f32 %v1018, -0.00019511016
        %v1020 = vadd.f32 %v1019, 0.008332121
        %v1021 = vmul.f32 %v1018, %v1020
        %v1022 = vadd.f32 %v1021, -0.16666654
        %v1023 = vmul.f32 %v1018, %v1022
        %v1024 = vadd.f32 %v1023, 1.0
        %v1025 = vmul.f32 %v1024, %v1009
        %vm1026 = vweird.f32 %v880
        %v1027 = vand.u32 %v1010, 3
        %vm1028 = vcmp.lt.s32.totalorder %v1027, 2
        %vm1029 = vcmp.eq.s32.totalorder %v1027, 0
        %v1030 = vxor.u32 %v1025, 2147483648
        %v1031 = vsel %vm1029, %v1017, %v1030
        %vm1032 = vcmp.eq.s32.totalorder %v1027, 2
        %v1033 = vxor.u32 %v1017, 2147483648
        %v1034 = vsel %vm1032, %v1033, %v1025
        %v1035 = vsel %vm1028, %v1031, %v1034
        %v1036 = vsel %vm1026, nan, %v1035
        %v1037 = vand.u32 2147483647, %v881
        %vm1038 = vcmp.le.f32.partialorder %v1037, 0.7853982
        %vm1039 = vcmp.lt.s32.totalorder %v881, 0
        %v1040 = vand.u32 %v881, 2139095040
        %v1041 = vshrl.u32 %v1040, 23
        %v1042 = vsub.s32 %v1041, 127
        %v1043 = vand.u32 2147483647, %v881
        %v1044 = vand.u32 %v1043, 8388607
        %v1045 = vor.u32 %v1044, 8388608
        %v1046 = vsub.s32 0, %v1045
        %v1047 = vadd.s32 %v1042, 1
        %vm1048 = vcmp.gt.s32.totalorder %v1047, 0
        %v1049 = vsel %vm1048, %v1047, 0
        %v1050 = vshrl.u32 %v1049, 5
        %v1051 = vand.u32 %v1049, 31
        %v1052 = vsub.s32 32, %v1051
        %v1053 = vshrl.u32 683565275, %v1052
        %v1054 = vshll.u32 683565275, %v1051
        %v1055 = vshrl.u32 2475754826, %v1052
        %v1056 = vor.u32 %v1054, %v1055
        %v1057 = vshll.u32 2475754826, %v1051
        %v1058 = vshrl.u32 2131351028, %v1052
        %v1059 = vor.u32 %v1057, %v1058
        %v1060 = vshll.u32 2131351028, %v1051
        %v1061 = vshrl.u32 2102212464, %v1052
        %v1062 = vor.u32 %v1060, %v1061
        %v1063 = vshll.u32 2102212464, %v1051
        %v1064 = vshrl.u32 920167782, %v1052
        %v1065 = vor.u32 %v1063, %v1064
        %v1066 = vshll.u32 920167782, %v1051
        %v1067 = vshrl.u32 1326507024, %v1052
        %v1068 = vor.u32 %v1066, %v1067
        %vm1069 = vcmp.lt.s32.totalorder %v1050, 1
        %vm1070 = vcmp.lt.s32.totalorder %v1050, 2
        %vm1071 = vcmp.lt.s32.totalorder %v1050, 3
        %vm1072 = vcmp.lt.s32.totalorder %v1050, 4
        %v1073 = vsel %vm1069, %v1053, %v1056
        %v1074 = vsel %vm1072, %v1062, 2102212464
        %v1075 = vsel %vm1071, %v1059, %v1074
        %v1076 = vsel %vm1070, %v1073, %v1075
        %v1077 = vsel %vm1069, %v1056, %v1059
        %v1078 = vsel %vm1072, %v1065, 920167782
        %v1079 = vsel %vm1071, %v1062, %v1078
        %v1080 = vsel %vm1070, %v1077, %v1079
        %v1081 = vsel %vm1069, %v1059, %v1062
        %v1082 = vsel %vm1072, %v1068, 1326507024
        %v1083 = vsel %vm1071, %v1065, %v1082
        %v1084 = vsel %vm1070, %v1081, %v1083
        %v1085 = vshll.u32 %v1045, 8
        %v1086 = vand.u32 %v1085, 65535
        %v1087 = vshrl.u32 %v1085, 16
        %v1088 = vand.u32 %v1084, 65535
        %v1089 = vshrl.u32 %v1084, 16
        %v1090 = vmul.u32 %v1086, %v1088
        %v1091 = vmul.u32 %v1086, %v1089
        %v1092 = vmul.u32 %v1087, %v1088
        %v1093 = vmul.u32 %v1087, %v1089
        %v1094 = vshll.u32 %v1091, 16
        %v1095 = vshrl.u32 %v1091, 16
        %v1096 = vshll.u32 %v1092, 16
        %v1097 = vshrl.u32 %v1092, 16
        %vm1098 = vc.u32 %v1090, %v1094
        %v1099 = vsel %vm1098, 1, 0
        %v1100 = vadd.s32 %v1090, %v1094
        %v1101 = vadd.s32 %v1093, %v1099
        %vm1102 = vc.u32 %v1100, %v1096
        %v1103 = vsel %vm1102, 1, 0
        %v1104 = vadd.s32 %v1100, %v1096
        %v1105 = vadd.s32 %v1101, %v1103
        %v1106 = vadd.s32 %v1105, %v1095
        %v1107 = vadd.s32 %v1106, %v1097
        %v1108 = vand.u32 %v1085, 65535
        %v1109 = vshrl.u32 %v1085, 16
        %v1110 = vand.u32 %v1080, 65535
        %v1111 = vshrl.u32 %v1080, 16
        %v1112 = vmul.u32 %v1108, %v1110
        %v1113 = vmul.u32 %v1108, %v1111
        %v1114 = vmul.u32 %v1109, %v1110
        %v1115 = vmul.u32 %v1109, %v1111
        %v1116 = vshll.u32 %v1113, 16
        %v1117 = vshrl.u32 %v1113, 16
        %v1118 = vshll.u32 %v1114, 16
        %v1119 = vshrl.u32 %v1114, 16
        %vm1120 = vc.u32 %v1112, %v1116
        %v1121 = vsel %vm1120, 1, 0
        %v1122 = vadd.s32 %v1112, %v1116
        %v1123 = vadd.s32 %v1115, %v1121
        %vm1124 = vc.u32 %v1122, %v1118
        %v1125 = vsel %vm1124, 1, 0
        %v1126 = vadd.s32 %v1122, %v1118
        %v1127 = vadd.s32 %v1123, %v1125
        %v1128 = vadd.s32 %v1127, %v1117
        %v1129 = vadd.s32 %v1128, %v1119
        %v1130 = vmul.u32 %v1085, %v1076
        %v1131 = vadd.s32 %v1107, %v1126
        %vm1132 = vc.u32 %v1107, %v1126
        %v1133 = vadd.s32 %v1129, 1
        %v1134 = vsel %vm1132, %v1133, %v1129
        %v1135 = vadd.s32 %v1130, %v1134
        %v1136 = vadd.s32 %v1135, 536870912
        %v1137 = vshrl.u32 %v1136, 30
        %v1138 = vshll.u32 %v1137, 30
        %v1139 = vsub.s32 %v1135, %v1138
        %vm1140 = vcmp.lt.s32.totalorder %v1139, 0
        %v1141 = vsub.s32 0, %v1139
        %v1142 = vsel %vm1140, %v1141, %v1139
        %v1143 = vclz %v1142
        %v1144 = vsub.s32 %v1143, 2
        %vm1145 = vcmp.gt.s32.totalorder 0, %v1144
        %v1146 = vsel %vm1145, 0, %v1144
        %v1147 = vsub.s32 32, %v1146
        %v1148 = vshll.u32 %v1139, %v1146
        %v1149 = vshrl.u32 %v1131, %v1147
        %v1150 = vor.u32 %v1148, %v1149
        %v1151 = vsub.s32 4294967266, %v1146
        %v1152 = vadd.s32 %v1151, 127
        %v1153 = vshll.u32 %v1152, 23
        %v1154 = vor.u32 4788187, %v1153
        %v1155 = vand.u32 2147483647, %v1154
        %v1157 = vcvt.s32.f32 %v1150
        %v1158 = vmul.f32 %v1157, %v1155
        %v1159 = vxor.u32 %v1158, 2147483648
        %v1160 = vsel %vm1039, %v1159, %v1158
        %v1161 = vsub.s32 4, %v1137
        %v1162 = vsel %vm1039, %v1161, %v1137
        %v1163 = vsel %vm1038, %v881, %v1160
        %v1164 = vsel %vm1038, 0, %v1162
        %v1165 = vmul.f32 %v1163, %v1163
        %v1166 = vmul.f32 %v1165, -0.001358992
        %v1167 = vadd.f32 %v1166, 0.041655596
        %v1168 = vmul.f32 %v1165, %v1167
        %v1169 = vadd.f32 %v1168, -0.4999988
        %v1170 = vmul.f32 %v1165, %v1169
        %v1171 = vadd.f32 1.0, %v1170
        %v1172 = vmul.f32 %v1163, %v1163
        %v1173 = vmul.f32 %v1172, -0.00019511016
        %v1174 = vadd.f32 %v1173, 0.008332121
        %v1175 = vmul.f32 %v1172, %v1174
        %v1176 = vadd.f32 %v1175, -0.16666654
        %v1177 = vmul.f32 %v1172, %v1176
        %v1178 = vadd.f32 %v1177, 1.0
        %v1179 = vmul.f32 %v1178, %v1163
        %vm1180 = vweird.f32 %v881
        %v1181 = vand.u32 %v1164, 3
        %vm1182 = vcmp.lt.s32.totalorder %v1181, 2
        %vm1183 = vcmp.eq.s32.totalorder %v1181, 0
        %v1184 = vxor.u32 %v1179, 2147483648
        %v1185 = vsel %vm1183, %v1171, %v1184
        %vm1186 = vcmp.eq.s32.totalorder %v1181, 2
        %v1187 = vxor.u32 %v1171, 2147483648
        %v1188 = vsel %vm1186, %v1187, %v1179
        %v1189 = vsel %vm1182, %v1185, %v1188
        %v1190 = vsel %vm1180, nan, %v1189
        %v1191 = vand.u32 2147483647, %v882
        %vm1192 = vcmp.le.f32.partialorder %v1191, 0.7853982
        %vm1193 = vcmp.lt.s32.totalorder %v882, 0
        %v1194 = vand.u32 %v882, 2139095040
        %v1195 = vshrl.u32 %v1194, 23
        %v1196 = vsub.s32 %v1195, 127
        %v1197 = vand.u32 2147483647, %v882
        %v1198 = vand.u32 %v1197, 8388607
        %v1199 = vor.u32 %v1198, 8388608
        %v1200 = vsub.s32 0, %v1199
        %v1201 = vadd.s32 %v1196, 1
        %vm1202 = vcmp.gt.s32.totalorder %v1201, 0
        %v1203 = vsel %vm1202, %v1201, 0
        %v1204 = vshrl.u32 %v1203, 5
        %v1205 = vand.u32 %v1203, 31
        %v1206 = vsub.s32 32, %v1205
        %v1207 = vshrl.u32 683565275, %v1206
        %v1208 = vshll.u32 683565275, %v1205
        %v1209 = vshrl.u32 2475754826, %v1206
        %v1210 = vor.u32 %v1208, %v1209
        %v1211 = vshll.u32 2475754826, %v1205
        %v1212 = vshrl.u32 2131351028, %v1206
        %v1213 = vor.u32 %v1211, %v1212
        %v1214 = vshll.u32 2131351028, %v1205
        %v1215 = vshrl.u32 2102212464, %v1206
        %v1216 = vor.u32 %v1214, %v1215
        %v1217 = vshll.u32 2102212464, %v1205
        %v1218 = vshrl.u32 920167782, %v1206
        %v1219 = vor.u32 %v1217, %v1218
        %v1220 = vshll.u32 920167782, %v1205
        %v1221 = vshrl.u32 1326507024, %v1206
        %v1222 = vor.u32 %v1220, %v1221
        %vm1223 = vcmp.lt.s32.totalorder %v1204, 1
        %vm1224 = vcmp.lt.s32.totalorder %v1204, 2
        %vm1225 = vcmp.lt.s32.totalorder %v1204, 3
        %vm1226 = vcmp.lt.s32.totalorder %v1204, 4
        %v1227 = vsel %vm1223, %v1207, %v1210
        %v1228 = vsel %vm1226, %v1216, 2102212464
        %v1229 = vsel %vm1225, %v1213, %v1228
        %v1230 = vsel %vm1224, %v1227, %v1229
        %v1231 = vsel %vm1223, %v1210, %v1213
        %v1232 = vsel %vm1226, %v1219, 920167782
        %v1233 = vsel %vm1225, %v1216, %v1232
        %v1234 = vsel %vm1224, %v1231, %v1233
        %v1235 = vsel %vm1223, %v1213, %v1216
        %v1236 = vsel %vm1226, %v1222, 1326507024
        %v1237 = vsel %vm1225, %v1219, %v1236
        %v1238 = vsel %vm1224, %v1235, %v1237
        %v1239 = vshll.u32 %v1199, 8
        %v1240 = vand.u32 %v1239, 65535
        %v1241 = vshrl.u32 %v1239, 16
        %v1242 = vand.u32 %v1238, 65535
        %v1243 = vshrl.u32 %v1238, 16
        %v1244 = vmul.u32 %v1240, %v1242
        %v1245 = vmul.u32 %v1240, %v1243
        %v1246 = vmul.u32 %v1241, %v1242
        %v1247 = vmul.u32 %v1241, %v1243
        %v1248 = vshll.u32 %v1245, 16
        %v1249 = vshrl.u32 %v1245, 16
        %v1250 = vshll.u32 %v1246, 16
        %v1251 = vshrl.u32 %v1246, 16
        %vm1252 = vc.u32 %v1244, %v1248
        %v1253 = vsel %vm1252, 1, 0
        %v1254 = vadd.s32 %v1244, %v1248
        %v1255 = vadd.s32 %v1247, %v1253
        %vm1256 = vc.u32 %v1254, %v1250
        %v1257 = vsel %vm1256, 1, 0
        %v1258 = vadd.s32 %v1254, %v1250
        %v1259 = vadd.s32 %v1255, %v1257
        %v1260 = vadd.s32 %v1259, %v1249
        %v1261 = vadd.s32 %v1260, %v1251
        %v1262 = vand.u32 %v1239, 65535
        %v1263 = vshrl.u32 %v1239, 16
        %v1264 = vand.u32 %v1234, 65535
        %v1265 = vshrl.u32 %v1234, 16
        %v1266 = vmul.u32 %v1262, %v1264
        %v1267 = vmul.u32 %v1262, %v1265
        %v1268 = vmul.u32 %v1263, %v1264
        %v1269 = vmul.u32 %v1263, %v1265
        %v1270 = vshll.u32 %v1267, 16
        %v1271 = vshrl.u32 %v1267, 16
        %v1272 = vshll.u32 %v1268, 16
        %v1273 = vshrl.u32 %v1268, 16
        %vm1274 = vc.u32 %v1266, %v1270
        %v1275 = vsel %vm1274, 1, 0
        %v1276 = vadd.s32 %v1266, %v1270
        %v1277 = vadd.s32 %v1269, %v1275
        %vm1278 = vc.u32 %v1276, %v1272
        %v1279 = vsel %vm1278, 1, 0
        %v1280 = vadd.s32 %v1276, %v1272
        %v1281 = vadd.s32 %v1277, %v1279
        %v1282 = vadd.s32 %v1281, %v1271
        %v1283 = vadd.s32 %v1282, %v1273
        %v1284 = vmul.u32 %v1239, %v1230
        %v1285 = vadd.s32 %v1261, %v1280
        %vm1286 = vc.u32 %v1261, %v1280
        %v1287 = vadd.s32 %v1283, 1
        %v1288 = vsel %vm1286, %v1287, %v1283
        %v1289 = vadd.s32 %v1284, %v1288
        %v1290 = vadd.s32 %v1289, 536870912
        %v1291 = vshrl.u32 %v1290, 30
        %v1292 = vshll.u32 %v1291, 30
        %v1293 = vsub.s32 %v1289, %v1292
        %vm1294 = vcmp.lt.s32.totalorder %v1293, 0
        %v1295 = vsub.s32 0, %v1293
        %v1296 = vsel %vm1294, %v1295, %v1293
        %v1297 = vclz %v1296
        %v1298 = vsub.s32 %v1297, 2
        %vm1299 = vcmp.gt.s32.totalorder 0, %v1298
        %v1300 = vsel %vm1299, 0, %v1298
        %v1301 = vsub.s32 32, %v1300
        %v1302 = vshll.u32 %v1293, %v1300
        %v1303 = vshrl.u32 %v1285, %v1301
        %v1304 = vor.u32 %v1302, %v1303
        %v1305 = vsub.s32 4294967266, %v1300
        %v1306 = vadd.s32 %v1305, 127
        %v1307 = vshll.u32 %v1306, 23
        %v1308 = vor.u32 4788187, %v1307
        %v1309 = vand.u32 2147483647, %v1308
        %v1311 = vcvt.s32.f32 %v1304
        %v1312 = vmul.f32 %v1311, %v1309
        %v1313 = vxor.u32 %v1312, 2147483648
        %v1314 = vsel %vm1193, %v1313, %v1312
        %v1315 = vsub.s32 4, %v1291
        %v1316 = vsel %vm1193, %v1315, %v1291
        %v1317 = vsel %vm1192, %v882, %v1314
        %v1318 = vsel %vm1192, 0, %v1316
        %v1319 = vmul.f32 %v1317, %v1317
        %v1320 = vmul.f32 %v1319, -0.001358992
        %v1321 = vadd.f32 %v1320, 0.041655596
        %v1322 = vmul.f32 %v1319, %v1321
        %v1323 = vadd.f32 %v1322, -0.4999988
        %v1324 = vmul.f32 %v1319, %v1323
        %v1325 = vadd.f32 1.0, %v1324
        %v1326 = vmul.f32 %v1317, %v1317
        %v1327 = vmul.f32 %v1326, -0.00019511016
        %v1328 = vadd.f32 %v1327, 0.008332121
        %v1329 = vmul.f32 %v1326, %v1328
        %v1330 = vadd.f32 %v1329, -0.16666654
        %v1331 = vmul.f32 %v1326, %v1330
        %v1332 = vadd.f32 %v1331, 1.0
        %v1333 = vmul.f32 %v1332, %v1317
        %vm1334 = vweird.f32 %v882
        %v1335 = vand.u32 %v1318, 3
        %vm1336 = vcmp.lt.s32.totalorder %v1335, 2
        %vm1337 = vcmp.eq.s32.totalorder %v1335, 0
        %v1338 = vxor.u32 %v1333, 2147483648
        %v1339 = vsel %vm1337, %v1325, %v1338
        %vm1340 = vcmp.eq.s32.totalorder %v1335, 2
        %v1341 = vxor.u32 %v1325, 2147483648
        %v1342 = vsel %vm1340, %v1341, %v1333
        %v1343 = vsel %vm1336, %v1339, %v1342
        %v1344 = vsel %vm1334, nan, %v1343
        %v1345 = vand.u32 2147483647, %v880
        %vm1346 = vcmp.le.f32.partialorder %v1345, 0.7853982
        %vm1347 = vcmp.lt.s32.totalorder %v880, 0
        %v1348 = vand.u32 %v880, 2139095040
        %v1349 = vshrl.u32 %v1348, 23
        %v1350 = vsub.s32 %v1349, 127
        %v1351 = vand.u32 2147483647, %v880
        %v1352 = vand.u32 %v1351, 8388607
        %v1353 = vor.u32 %v1352, 8388608
        %v1354 = vsub.s32 0, %v1353
        %v1355 = vadd.s32 %v1350, 1
        %vm1356 = vcmp.gt.s32.totalorder %v1355, 0
        %v1357 = vsel %vm1356, %v1355, 0
        %v1358 = vshrl.u32 %v1357, 5
        %v1359 = vand.u32 %v1357, 31
        %v1360 = vsub.s32 32, %v1359
        %v1361 = vshrl.u32 683565275, %v1360
        %v1362 = vshll.u32 683565275, %v1359
        %v1363 = vshrl.u32 2475754826, %v1360
        %v1364 = vor.u32 %v1362, %v1363
        %v1365 = vshll.u32 2475754826, %v1359
        %v1366 = vshrl.u32 2131351028, %v1360
        %v1367 = vor.u32 %v1365, %v1366
        %v1368 = vshll.u32 2131351028, %v1359
        %v1369 = vshrl.u32 2102212464, %v1360
        %v1370 = vor.u32 %v1368, %v1369
        %v1371 = vshll.u32 2102212464, %v1359
        %v1372 = vshrl.u32 920167782, %v1360
        %v1373 = vor.u32 %v1371, %v1372
        %v1374 = vshll.u32 920167782, %v1359
        %v1375 = vshrl.u32 1326507024, %v1360
        %v1376 = vor.u32 %v1374, %v1375
        %vm1377 = vcmp.lt.s32.totalorder %v1358, 1
        %vm1378 = vcmp.lt.s32.totalorder %v1358, 2
        %vm1379 = vcmp.lt.s32.totalorder %v1358, 3
        %vm1380 = vcmp.lt.s32.totalorder %v1358, 4
        %v1381 = vsel %vm1377, %v1361, %v1364
        %v1382 = vsel %vm1380, %v1370, 2102212464
        %v1383 = vsel %vm1379, %v1367, %v1382
        %v1384 = vsel %vm1378, %v1381, %v1383
        %v1385 = vsel %vm1377, %v1364, %v1367
        %v1386 = vsel %vm1380, %v1373, 920167782
        %v1387 = vsel %vm1379, %v1370, %v1386
        %v1388 = vsel %vm1378, %v1385, %v1387
        %v1389 = vsel %vm1377, %v1367, %v1370
        %v1390 = vsel %vm1380, %v1376, 1326507024
        %v1391 = vsel %vm1379, %v1373, %v1390
        %v1392 = vsel %vm1378, %v1389, %v1391
        %v1393 = vshll.u32 %v1353, 8
        %v1394 = vand.u32 %v1393, 65535
        %v1395 = vshrl.u32 %v1393, 16
        %v1396 = vand.u32 %v1392, 65535
        %v1397 = vshrl.u32 %v1392, 16
        %v1398 = vmul.u32 %v1394, %v1396
        %v1399 = vmul.u32 %v1394, %v1397
        %v1400 = vmul.u32 %v1395, %v1396
        %v1401 = vmul.u32 %v1395, %v1397
        %v1402 = vshll.u32 %v1399, 16
        %v1403 = vshrl.u32 %v1399, 16
        %v1404 = vshll.u32 %v1400, 16
        %v1405 = vshrl.u32 %v1400, 16
        %vm1406 = vc.u32 %v1398, %v1402
        %v1407 = vsel %vm1406, 1, 0
        %v1408 = vadd.s32 %v1398, %v1402
        %v1409 = vadd.s32 %v1401, %v1407
        %vm1410 = vc.u32 %v1408, %v1404
        %v1411 = vsel %vm1410, 1, 0
        %v1412 = vadd.s32 %v1408, %v1404
        %v1413 = vadd.s32 %v1409, %v1411
        %v1414 = vadd.s32 %v1413, %v1403
        %v1415 = vadd.s32 %v1414, %v1405
        %v1416 = vand.u32 %v1393, 65535
        %v1417 = vshrl.u32 %v1393, 16
        %v1418 = vand.u32 %v1388, 65535
        %v1419 = vshrl.u32 %v1388, 16
        %v1420 = vmul.u32 %v1416, %v1418
        %v1421 = vmul.u32 %v1416, %v1419
        %v1422 = vmul.u32 %v1417, %v1418
        %v1423 = vmul.u32 %v1417, %v1419
        %v1424 = vshll.u32 %v1421, 16
        %v1425 = vshrl.u32 %v1421, 16
        %v1426 = vshll.u32 %v1422, 16
        %v1427 = vshrl.u32 %v1422, 16
        %vm1428 = vc.u32 %v1420, %v1424
        %v1429 = vsel %vm1428, 1, 0
        %v1430 = vadd.s32 %v1420, %v1424
        %v1431 = vadd.s32 %v1423, %v1429
        %vm1432 = vc.u32 %v1430, %v1426
        %v1433 = vsel %vm1432, 1, 0
        %v1434 = vadd.s32 %v1430, %v1426
        %v1435 = vadd.s32 %v1431, %v1433
        %v1436 = vadd.s32 %v1435, %v1425
        %v1437 = vadd.s32 %v1436, %v1427
        %v1438 = vmul.u32 %v1393, %v1384
        %v1439 = vadd.s32 %v1415, %v1434
        %vm1440 = vc.u32 %v1415, %v1434
        %v1441 = vadd.s32 %v1437, 1
        %v1442 = vsel %vm1440, %v1441, %v1437
        %v1443 = vadd.s32 %v1438, %v1442
        %v1444 = vadd.s32 %v1443, 536870912
        %v1445 = vshrl.u32 %v1444, 30
        %v1446 = vshll.u32 %v1445, 30
        %v1447 = vsub.s32 %v1443, %v1446
        %vm1448 = vcmp.lt.s32.totalorder %v1447, 0
        %v1449 = vsub.s32 0, %v1447
        %v1450 = vsel %vm1448, %v1449, %v1447
        %v1451 = vclz %v1450
        %v1452 = vsub.s32 %v1451, 2
        %vm1453 = vcmp.gt.s32.totalorder 0, %v1452
        %v1454 = vsel %vm1453, 0, %v1452
        %v1455 = vsub.s32 32, %v1454
        %v1456 = vshll.u32 %v1447, %v1454
        %v1457 = vshrl.u32 %v1439, %v1455
        %v1458 = vor.u32 %v1456, %v1457
        %v1459 = vsub.s32 4294967266, %v1454
        %v1460 = vadd.s32 %v1459, 127
        %v1461 = vshll.u32 %v1460, 23
        %v1462 = vor.u32 4788187, %v1461
        %v1463 = vand.u32 2147483647, %v1462
        %v1465 = vcvt.s32.f32 %v1458
        %v1466 = vmul.f32 %v1465, %v1463
        %v1467 = vxor.u32 %v1466, 2147483648
        %v1468 = vsel %vm1347, %v1467, %v1466
        %v1469 = vsub.s32 4, %v1445
        %v1470 = vsel %vm1347, %v1469, %v1445
        %v1471 = vsel %vm1346, %v880, %v1468
        %v1472 = vsel %vm1346, 0, %v1470
        %v1473 = vmul.f32 %v1471, %v1471
        %v1474 = vmul.f32 %v1473, -0.001358992
        %v1475 = vadd.f32 %v1474, 0.041655596
        %v1476 = vmul.f32 %v1473, %v1475
        %v1477 = vadd.f32 %v1476, -0.4999988
        %v1478 = vmul.f32 %v1473, %v1477
        %v1479 = vadd.f32 1.0, %v1478
        %v1480 = vmul.f32 %v1471, %v1471
        %v1481 = vmul.f32 %v1480, -0.00019511016
        %v1482 = vadd.f32 %v1481, 0.008332121
        %v1483 = vmul.f32 %v1480, %v1482
        %v1484 = vadd.f32 %v1483, -0.16666654
        %v1485 = vmul.f32 %v1480, %v1484
        %v1486 = vadd.f32 %v1485, 1.0
        %v1487 = vmul.f32 %v1486, %v1471
        %vm1488 = vweird.f32 %v880
        %v1489 = vadd.s32 %v1472, 3
        %v1490 = vand.u32 %v1489, 3
        %vm1491 = vcmp.lt.s32.totalorder %v1490, 2
        %vm1492 = vcmp.eq.s32.totalorder %v1490, 0
        %v1493 = vxor.u32 %v1487, 2147483648
        %v1494 = vsel %vm1492, %v1479, %v1493
        %vm1495 = vcmp.eq.s32.totalorder %v1490, 2
        %v1496 = vxor.u32 %v1479, 2147483648
        %v1497 = vsel %vm1495, %v1496, %v1487
        %v1498 = vsel %vm1491, %v1494, %v1497
        %v1499 = vsel %vm1488, nan, %v1498
        %v1500 = vand.u32 2147483647, %v881
        %vm1501 = vcmp.le.f32.partialorder %v1500, 0.7853982
        %vm1502 = vcmp.lt.s32.totalorder %v881, 0
        %v1503 = vand.u32 %v881, 2139095040
        %v1504 = vshrl.u32 %v1503, 23
        %v1505 = vsub.s32 %v1504, 127
        %v1506 = vand.u32 2147483647, %v881
        %v1507 = vand.u32 %v1506, 8388607
        %v1508 = vor.u32 %v1507, 8388608
        %v1509 = vsub.s32 0, %v1508
        %v1510 = vadd.s32 %v1505, 1
        %vm1511 = vcmp.gt.s32.totalorder %v1510, 0
        %v1512 = vsel %vm1511, %v1510, 0
        %v1513 = vshrl.u32 %v1512, 5
        %v1514 = vand.u32 %v1512, 31
        %v1515 = vsub.s32 32, %v1514
        %v1516 = vshrl.u32 683565275, %v1515
        %v1517 = vshll.u32 683565275, %v1514
        %v1518 = vshrl.u32 2475754826, %v1515
        %v1519 = vor.u32 %v1517, %v1518
        %v1520 = vshll.u32 2475754826, %v1514
        %v1521 = vshrl.u32 2131351028, %v1515
        %v1522 = vor.u32 %v1520, %v1521
        %v1523 = vshll.u32 2131351028, %v1514
        %v1524 = vshrl.u32 2102212464, %v1515
        %v1525 = vor.u32 %v1523, %v1524
        %v1526 = vshll.u32 2102212464, %v1514
        %v1527 = vshrl.u32 920167782, %v1515
        %v1528 = vor.u32 %v1526, %v1527
        %v1529 = vshll.u32 920167782, %v1514
        %v1530 = vshrl.u32 1326507024, %v1515
        %v1531 = vor.u32 %v1529, %v1530
        %vm1532 = vcmp.lt.s32.totalorder %v1513, 1
        %vm1533 = vcmp.lt.s32.totalorder %v1513, 2
        %vm1534 = vcmp.lt.s32.totalorder %v1513, 3
        %vm1535 = vcmp.lt.s32.totalorder %v1513, 4
        %v1536 = vsel %vm1532, %v1516, %v1519
        %v1537 = vsel %vm1535, %v1525, 2102212464
        %v1538 = vsel %vm1534, %v1522, %v1537
        %v1539 = vsel %vm1533, %v1536, %v1538
        %v1540 = vsel %vm1532, %v1519, %v1522
        %v1541 = vsel %vm1535, %v1528, 920167782
        %v1542 = vsel %vm1534, %v1525, %v1541
        %v1543 = vsel %vm1533, %v1540, %v1542
        %v1544 = vsel %vm1532, %v1522, %v1525
        %v1545 = vsel %vm1535, %v1531, 1326507024
        %v1546 = vsel %vm1534, %v1528, %v1545
        %v1547 = vsel %vm1533, %v1544, %v1546
        %v1548 = vshll.u32 %v1508, 8
        %v1549 = vand.u32 %v1548, 65535
        %v1550 = vshrl.u32 %v1548, 16
        %v1551 = vand.u32 %v1547, 65535
        %v1552 = vshrl.u32 %v1547, 16
        %v1553 = vmul.u32 %v1549, %v1551
        %v1554 = vmul.u32 %v1549, %v1552
        %v1555 = vmul.u32 %v1550, %v1551
        %v1556 = vmul.u32 %v1550, %v1552
        %v1557 = vshll.u32 %v1554, 16
        %v1558 = vshrl.u32 %v1554, 16
        %v1559 = vshll.u32 %v1555, 16
        %v1560 = vshrl.u32 %v1555, 16
        %vm1561 = vc.u32 %v1553, %v1557
        %v1562 = vsel %vm1561, 1, 0
        %v1563 = vadd.s32 %v1553, %v1557
        %v1564 = vadd.s32 %v1556, %v1562
        %vm1565 = vc.u32 %v1563, %v1559
        %v1566 = vsel %vm1565, 1, 0
        %v1567 = vadd.s32 %v1563, %v1559
        %v1568 = vadd.s32 %v1564, %v1566
        %v1569 = vadd.s32 %v1568, %v1558
        %v1570 = vadd.s32 %v1569, %v1560
        %v1571 = vand.u32 %v1548, 65535
        %v1572 = vshrl.u32 %v1548, 16
        %v1573 = vand.u32 %v1543, 65535
        %v1574 = vshrl.u32 %v1543, 16
        %v1575 = vmul.u32 %v1571, %v1573
        %v1576 = vmul.u32 %v1571, %v1574
        %v1577 = vmul.u32 %v1572, %v1573
        %v1578 = vmul.u32 %v1572, %v1574
        %v1579 = vshll.u32 %v1576, 16
        %v1580 = vshrl.u32 %v1576, 16
        %v1581 = vshll.u32 %v1577, 16
        %v1582 = vshrl.u32 %v1577, 16
        %vm1583 = vc.u32 %v1575, %v1579
        %v1584 = vsel %vm1583, 1, 0
        %v1585 = vadd.s32 %v1575, %v1579
        %v1586 = vadd.s32 %v1578, %v1584
        %vm1587 = vc.u32 %v1585, %v1581
        %v1588 = vsel %vm1587, 1, 0
        %v1589 = vadd.s32 %v1585, %v1581
        %v1590 = vadd.s32 %v1586, %v1588
        %v1591 = vadd.s32 %v1590, %v1580
        %v1592 = vadd.s32 %v1591, %v1582
        %v1593 = vmul.u32 %v1548, %v1539
        %v1594 = vadd.s32 %v1570, %v1589
        %vm1595 = vc.u32 %v1570, %v1589
        %v1596 = vadd.s32 %v1592, 1
        %v1597 = vsel %vm1595, %v1596, %v1592
        %v1598 = vadd.s32 %v1593, %v1597
        %v1599 = vadd.s32 %v1598, 536870912
        %v1600 = vshrl.u32 %v1599, 30
        %v1601 = vshll.u32 %v1600, 30
        %v1602 = vsub.s32 %v1598, %v1601
        %vm1603 = vcmp.lt.s32.totalorder %v1602, 0
        %v1604 = vsub.s32 0, %v1602
        %v1605 = vsel %vm1603, %v1604, %v1602
        %v1606 = vclz %v1605
        %v1607 = vsub.s32 %v1606, 2
        %vm1608 = vcmp.gt.s32.totalorder 0, %v1607
        %v1609 = vsel %vm1608, 0, %v1607
        %v1610 = vsub.s32 32, %v1609
        %v1611 = vshll.u32 %v1602, %v1609
        %v1612 = vshrl.u32 %v1594, %v1610
        %v1613 = vor.u32 %v1611, %v1612
        %v1614 = vsub.s32 4294967266, %v1609
        %v1615 = vadd.s32 %v1614, 127
        %v1616 = vshll.u32 %v1615, 23
        %v1617 = vor.u32 4788187, %v1616
        %v1618 = vand.u32 2147483647, %v1617
        %v1620 = vcvt.s32.f32 %v1613
        %v1621 = vmul.f32 %v1620, %v1618
        %v1622 = vxor.u32 %v1621, 2147483648
        %v1623 = vsel %vm1502, %v1622, %v1621
        %v1624 = vsub.s32 4, %v1600
        %v1625 = vsel %vm1502, %v1624, %v1600
        %v1626 = vsel %vm1501, %v881, %v1623
        %v1627 = vsel %vm1501, 0, %v1625
        %v1628 = vmul.f32 %v1626, %v1626
        %v1629 = vmul.f32 %v1628, -0.001358992
        %v1630 = vadd.f32 %v1629, 0.041655596
        %v1631 = vmul.f32 %v1628, %v1630
        %v1632 = vadd.f32 %v1631, -0.4999988
        %v1633 = vmul.f32 %v1628, %v1632
        %v1634 = vadd.f32 1.0, %v1633
        %v1635 = vmul.f32 %v1626, %v1626
        %v1636 = vmul.f32 %v1635, -0.00019511016
        %v1637 = vadd.f32 %v1636, 0.008332121
        %v1638 = vmul.f32 %v1635, %v1637
        %v1639 = vadd.f32 %v1638, -0.16666654
        %v1640 = vmul.f32 %v1635, %v1639
        %v1641 = vadd.f32 %v1640, 1.0
        %v1642 = vmul.f32 %v1641, %v1626
        %vm1643 = vweird.f32 %v881
        %v1644 = vadd.s32 %v1627, 3
        %v1645 = vand.u32 %v1644, 3
        %vm1646 = vcmp.lt.s32.totalorder %v1645, 2
        %vm1647 = vcmp.eq.s32.totalorder %v1645, 0
        %v1648 = vxor.u32 %v1642, 2147483648
        %v1649 = vsel %vm1647, %v1634, %v1648
        %vm1650 = vcmp.eq.s32.totalorder %v1645, 2
        %v1651 = vxor.u32 %v1634, 2147483648
        %v1652 = vsel %vm1650, %v1651, %v1642
        %v1653 = vsel %vm1646, %v1649, %v1652
        %v1654 = vsel %vm1643, nan, %v1653
        %v1655 = vand.u32 2147483647, %v882
        %vm1656 = vcmp.le.f32.partialorder %v1655, 0.7853982
        %vm1657 = vcmp.lt.s32.totalorder %v882, 0
        %v1658 = vand.u32 %v882, 2139095040
        %v1659 = vshrl.u32 %v1658, 23
        %v1660 = vsub.s32 %v1659, 127
        %v1661 = vand.u32 2147483647, %v882
        %v1662 = vand.u32 %v1661, 8388607
        %v1663 = vor.u32 %v1662, 8388608
        %v1664 = vsub.s32 0, %v1663
        %v1665 = vadd.s32 %v1660, 1
        %vm1666 = vcmp.gt.s32.totalorder %v1665, 0
        %v1667 = vsel %vm1666, %v1665, 0
        %v1668 = vshrl.u32 %v1667, 5
        %v1669 = vand.u32 %v1667, 31
        %v1670 = vsub.s32 32, %v1669
        %v1671 = vshrl.u32 683565275, %v1670
        %v1672 = vshll.u32 683565275, %v1669
        %v1673 = vshrl.u32 2475754826, %v1670
        %v1674 = vor.u32 %v1672, %v1673
        %v1675 = vshll.u32 2475754826, %v1669
        %v1676 = vshrl.u32 2131351028, %v1670
        %v1677 = vor.u32 %v1675, %v1676
        %v1678 = vshll.u32 2131351028, %v1669
        %v1679 = vshrl.u32 2102212464, %v1670
        %v1680 = vor.u32 %v1678, %v1679
        %v1681 = vshll.u32 2102212464, %v1669
        %v1682 = vshrl.u32 920167782, %v1670
        %v1683 = vor.u32 %v1681, %v1682
        %v1684 = vshll.u32 920167782, %v1669
        %v1685 = vshrl.u32 1326507024, %v1670
        %v1686 = vor.u32 %v1684, %v1685
        %vm1687 = vcmp.lt.s32.totalorder %v1668, 1
        %vm1688 = vcmp.lt.s32.totalorder %v1668, 2
        %vm1689 = vcmp.lt.s32.totalorder %v1668, 3
        %vm1690 = vcmp.lt.s32.totalorder %v1668, 4
        %v1691 = vsel %vm1687, %v1671, %v1674
        %v1692 = vsel %vm1690, %v1680, 2102212464
        %v1693 = vsel %vm1689, %v1677, %v1692
        %v1694 = vsel %vm1688, %v1691, %v1693
        %v1695 = vsel %vm1687, %v1674, %v1677
        %v1696 = vsel %vm1690, %v1683, 920167782
        %v1697 = vsel %vm1689, %v1680, %v1696
        %v1698 = vsel %vm1688, %v1695, %v1697
        %v1699 = vsel %vm1687, %v1677, %v1680
        %v1700 = vsel %vm1690, %v1686, 1326507024
        %v1701 = vsel %vm1689, %v1683, %v1700
        %v1702 = vsel %vm1688, %v1699, %v1701
        %v1703 = vshll.u32 %v1663, 8
        %v1704 = vand.u32 %v1703, 65535
        %v1705 = vshrl.u32 %v1703, 16
        %v1706 = vand.u32 %v1702, 65535
        %v1707 = vshrl.u32 %v1702, 16
        %v1708 = vmul.u32 %v1704, %v1706
        %v1709 = vmul.u32 %v1704, %v1707
        %v1710 = vmul.u32 %v1705, %v1706
        %v1711 = vmul.u32 %v1705, %v1707
        %v1712 = vshll.u32 %v1709, 16
        %v1713 = vshrl.u32 %v1709, 16
        %v1714 = vshll.u32 %v1710, 16
        %v1715 = vshrl.u32 %v1710, 16
        %vm1716 = vc.u32 %v1708, %v1712
        %v1717 = vsel %vm1716, 1, 0
        %v1718 = vadd.s32 %v1708, %v1712
        %v1719 = vadd.s32 %v1711, %v1717
        %vm1720 = vc.u32 %v1718, %v1714
        %v1721 = vsel %vm1720, 1, 0
        %v1722 = vadd.s32 %v1718, %v1714
        %v1723 = vadd.s32 %v1719, %v1721
        %v1724 = vadd.s32 %v1723, %v1713
        %v1725 = vadd.s32 %v1724, %v1715
        %v1726 = vand.u32 %v1703, 65535
        %v1727 = vshrl.u32 %v1703, 16
        %v1728 = vand.u32 %v1698, 65535
        %v1729 = vshrl.u32 %v1698, 16
        %v1730 = vmul.u32 %v1726, %v1728
        %v1731 = vmul.u32 %v1726, %v1729
        %v1732 = vmul.u32 %v1727, %v1728
        %v1733 = vmul.u32 %v1727, %v1729
        %v1734 = vshll.u32 %v1731, 16
        %v1735 = vshrl.u32 %v1731, 16
        %v1736 = vshll.u32 %v1732, 16
        %v1737 = vshrl.u32 %v1732, 16
        %vm1738 = vc.u32 %v1730, %v1734
        %v1739 = vsel %vm1738, 1, 0
        %v1740 = vadd.s32 %v1730, %v1734
        %v1741 = vadd.s32 %v1733, %v1739
        %vm1742 = vc.u32 %v1740, %v1736
        %v1743 = vsel %vm1742, 1, 0
        %v1744 = vadd.s32 %v1740, %v1736
        %v1745 = vadd.s32 %v1741, %v1743
        %v1746 = vadd.s32 %v1745, %v1735
        %v1747 = vadd.s32 %v1746, %v1737
        %v1748 = vmul.u32 %v1703, %v1694
        %v1749 = vadd.s32 %v1725, %v1744
        %vm1750 = vc.u32 %v1725, %v1744
        %v1751 = vadd.s32 %v1747, 1
        %v1752 = vsel %vm1750, %v1751, %v1747
        %v1753 = vadd.s32 %v1748, %v1752
        %v1754 = vadd.s32 %v1753, 536870912
        %v1755 = vshrl.u32 %v1754, 30
        %v1756 = vshll.u32 %v1755, 30
        %v1757 = vsub.s32 %v1753, %v1756
        %vm1758 = vcmp.lt.s32.totalorder %v1757, 0
        %v1759 = vsub.s32 0, %v1757
        %v1760 = vsel %vm1758, %v1759, %v1757
        %v1761 = vclz %v1760
        %v1762 = vsub.s32 %v1761, 2
        %vm1763 = vcmp.gt.s32.totalorder 0, %v1762
        %v1764 = vsel %vm1763, 0, %v1762
        %v1765 = vsub.s32 32, %v1764
        %v1766 = vshll.u32 %v1757, %v1764
        %v1767 = vshrl.u32 %v1749, %v1765
        %v1768 = vor.u32 %v1766, %v1767
        %v1769 = vsub.s32 4294967266, %v1764
        %v1770 = vadd.s32 %v1769, 127
        %v1771 = vshll.u32 %v1770, 23
        %v1772 = vor.u32 4788187, %v1771
        %v1773 = vand.u32 2147483647, %v1772
        %v1775 = vcvt.s32.f32 %v1768
        %v1776 = vmul.f32 %v1775, %v1773
        %v1777 = vxor.u32 %v1776, 2147483648
        %v1778 = vsel %vm1657, %v1777, %v1776
        %v1779 = vsub.s32 4, %v1755
        %v1780 = vsel %vm1657, %v1779, %v1755
        %v1781 = vsel %vm1656, %v882, %v1778
        %v1782 = vsel %vm1656, 0, %v1780
        %v1783 = vmul.f32 %v1781, %v1781
        %v1784 = vmul.f32 %v1783, -0.001358992
        %v1785 = vadd.f32 %v1784, 0.041655596
        %v1786 = vmul.f32 %v1783, %v1785
        %v1787 = vadd.f32 %v1786, -0.4999988
        %v1788 = vmul.f32 %v1783, %v1787
        %v1789 = vadd.f32 1.0, %v1788
        %v1790 = vmul.f32 %v1781, %v1781
        %v1791 = vmul.f32 %v1790, -0.00019511016
        %v1792 = vadd.f32 %v1791, 0.008332121
        %v1793 = vmul.f32 %v1790, %v1792
        %v1794 = vadd.f32 %v1793, -0.16666654
        %v1795 = vmul.f32 %v1790, %v1794
        %v1796 = vadd.f32 %v1795, 1.0
        %v1797 = vmul.f32 %v1796, %v1781
        %vm1798 = vweird.f32 %v882
        %v1799 = vadd.s32 %v1782, 3
        %v1800 = vand.u32 %v1799, 3
        %vm1801 = vcmp.lt.s32.totalorder %v1800, 2
        %vm1802 = vcmp.eq.s32.totalorder %v1800, 0
        %v1803 = vxor.u32 %v1797, 2147483648
        %v1804 = vsel %vm1802, %v1789, %v1803
        %vm1805 = vcmp.eq.s32.totalorder %v1800, 2
        %v1806 = vxor.u32 %v1789, 2147483648
        %v1807 = vsel %vm1805, %v1806, %v1797
        %v1808 = vsel %vm1801, %v1804, %v1807
        %v1809 = vsel %vm1798, nan, %v1808
        %v1810 = vsub.f32 0.0, %v500
        %1812 = vrot.lane.b32.xlu0 %v1810, 112
        %v1813 = vpop.permute.xlu0 %1812
        %1816 = vrot.lane.b32.xlu0 %v500, 16
        %v1817 = vpop.permute.xlu0 %1816
        %v1819 = vsel %vm537, %v1813, %v1817
        %v1820 = vmul.f32 %v500, %v707
        %v1821 = vmul.f32 %v1819, %v862
        %v1822 = vadd.f32 %v1820, %v1821
        %v1823 = vmul.f32 %v1822, 0.17677669
        %v1824 = vsub.f32 0.0, %v501
        %v1825 = vsub.f32 0.0, %v502
        %v1826 = vsub.f32 0.0, %v503
        %1830 = vrot.lane.b32.xlu0 %v1824, 112
        %v1831 = vpop.permute.xlu0 %1830
        %1832 = vrot.lane.b32.xlu0 %v1825, 112
        %v1833 = vpop.permute.xlu0 %1832
        %1834 = vrot.lane.b32.xlu0 %v1826, 112
        %v1835 = vpop.permute.xlu0 %1834
        %1842 = vrot.lane.b32.xlu0 %v501, 16
        %v1843 = vpop.permute.xlu0 %1842
        %1844 = vrot.lane.b32.xlu0 %v502, 16
        %v1845 = vpop.permute.xlu0 %1844
        %1846 = vrot.lane.b32.xlu0 %v503, 16
        %v1847 = vpop.permute.xlu0 %1846
        %v1851 = vsel %vm537, %v1831, %v1843
        %v1852 = vsel %vm537, %v1833, %v1845
        %v1853 = vsel %vm537, %v1835, %v1847
        %v1854 = vmul.f32 %v501, %v1036
        %v1855 = vmul.f32 %v502, %v1190
        %v1856 = vmul.f32 %v503, %v1344
        %v1857 = vmul.f32 %v1851, %v1499
        %v1858 = vmul.f32 %v1852, %v1654
        %v1859 = vmul.f32 %v1853, %v1809
        %v1860 = vadd.f32 %v1854, %v1857
        %v1861 = vadd.f32 %v1855, %v1858
        %v1862 = vadd.f32 %v1856, %v1859
        %v1863 = vpack.c.bf16 %v1823, %v1823
        %v1864 = vpack.c.bf16 %v1861, %v1860
        %v1865 = vpack.c.bf16 %v1862, %v1862
        %vm1866 = vcmask 261120
        %v1868 = vsel %vm1866, %v1863, 0
        %v1871 = vsel %vm1866, %v1864, 0
        %v1874 = vsel %vm1866, %v1865, 0
        %1876 = vmatpush.bf16.xpose.msra.mxu0 0
        %1877 = vmatpush.bf16.xpose.msra.mxu0 0
        %1878 = vmatpush.bf16.xpose.msra.mxu0 0
        %1879 = vmatpush.bf16.xpose.msra.mxu0 0
        %1880 = vmatpush.bf16.xpose.msra.mxu0 0
        %1881 = vmatpush.bf16.xpose.msra.mxu0 0
        %1882 = vmatpush.bf16.xpose.msra.mxu0 %v1874
        %1883 = vmatpush.bf16.xpose.msra.mxu0 %v1871
        %1884 = vmatmul.bf16.gmra.mxu0 %v1868
        %v1885 = vpop.f32.mrf.mxu0
        %v1886 = vadd.f32 0.0, %v1885
        %v1887 = vpop.f32.mrf.mxu0
        %1888 = vdwg.mxu0
        %v1889 = vsel %vm548, %v1886, -1e+30
        %vm1890 = vcmask 195584
        %v1891 = vsel %vm1890, %v1889, -inf
        %1892 = vmax.xlane.f32.xlu0 %v1891
        %v1893 = vpop.xlane.xlu0 %1892
        %v1894 = vsub.f32 %v1889, %v1893
        %v1895 = vmul.f32 %v1894, 1.442695
        %v1896 = vpow.pop %v1895
        %v1897 = vsel %vm1890, %v1896, 0.0
        %1898 = vadd.xlane.f32.xlu0 %v1897
        %v1899 = vpop.xlane.xlu0 %1898
        %v1900 = vpack.c.bf16 %v1896, %v1896
        %v1901 = vpack.c.bf16 %v502, %v501
        %v1902 = vpack.c.bf16 %v503, %v503
        %1905 = vrot.lane.b32.xlu0 %v1901, 64
        %v1906 = vpop.permute.xlu0 %1905
        %1907 = vrot.lane.b32.xlu0 %v1902, 64
        %v1908 = vpop.permute.xlu0 %1907
        %v1911 = vsel %vm1890, %v1900, 0
        %vm1913 = vcmask 1043456
        %v1915 = vsel %vm1913, %v1908, 0
        %1917 = vmatpush.bf16.msra.mxu0 0
        %1918 = vmatpush.bf16.msra.mxu0 0
        %1919 = vmatpush.bf16.msra.mxu0 0
        %1920 = vmatpush.bf16.msra.mxu0 0
        %1921 = vmatpush.bf16.msra.mxu0 0
        %1922 = vmatpush.bf16.msra.mxu0 0
        %1923 = vmatpush.bf16.msra.mxu0 %v1915
        %1924 = vmatpush.bf16.msra.mxu0 %v1906
        %1925 = vmatmul.bf16.gmra.mxu0 %v1911
        %v1926 = vpop.f32.mrf.mxu0
        %v1927 = vadd.f32 0.0, %v1926
        %v1928 = vpop.f32.mrf.mxu0
        %1929 = vdwg.mxu0
        %v1930 = vrcp.pop %v1899
        %v1931 = vmul.f32 %v1899, %v1930
        %v1932 = vsub.f32 1.0, %v1931
        %v1933 = vmul.f32 %v1930, %v1932
        %v1934 = vadd.f32 %v1930, %v1933
        %vm1935 = vweird.f32 %v1899
        %vm1936 = vweird.f32 %v1930
        %vm1937 = vmor %vm1935, %vm1936
        %v1938 = vsel %vm1937, %v1930, %v1934
        %v1939 = vand.u32 2147483647, %v1899
        %vm1940 = vcmp.eq.f32.partialorder %v1939, 8.507059e+37
        %v1941 = vand.u32 %v1899, 2147483648
        %v1942 = vor.u32 1.1754944e-38, %v1941
        %v1943 = vsel %vm1940, %v1942, %v1938
        %v1944 = vmul.f32 %v1927, %v1943
        %1945 = vst.msk [vmem:[#allocation2] sm:$0xff] %vm1866, %v1944
        %1946 = vrot.lane.b32.xlu0 %v1810, 80
        %v1947 = vpop.permute.xlu0 %1946
        %1949 = vrot.lane.b32.xlu0 %v500, 112
        %v1950 = vpop.permute.xlu0 %1949
        %v1952 = vsel %vm537, %v1947, %v1950
        %1954 = vrot.lane.b32.xlu0 %v707, 32
        %v1955 = vpop.permute.xlu0 %1954
        %v1957 = vmul.f32 %v500, %v1955
        %v1958 = vmul.f32 %v1952, %v862
        %1960 = vrot.lane.b32.xlu0 %v1958, 32
        %v1961 = vpop.permute.xlu0 %1960
        %v1963 = vadd.f32 %v1957, %v1961
        %v1964 = vmul.f32 %v1963, 0.17677669
        %1965 = vrot.lane.b32.xlu0 %v1824, 80
        %v1966 = vpop.permute.xlu0 %1965
        %1967 = vrot.lane.b32.xlu0 %v1825, 80
        %v1968 = vpop.permute.xlu0 %1967
        %1969 = vrot.lane.b32.xlu0 %v1826, 80
        %v1970 = vpop.permute.xlu0 %1969
        %1974 = vrot.lane.b32.xlu0 %v501, 112
        %v1975 = vpop.permute.xlu0 %1974
        %1976 = vrot.lane.b32.xlu0 %v502, 112
        %v1977 = vpop.permute.xlu0 %1976
        %1978 = vrot.lane.b32.xlu0 %v503, 112
        %v1979 = vpop.permute.xlu0 %1978
        %v1983 = vsel %vm537, %v1966, %v1975
        %v1984 = vsel %vm537, %v1968, %v1977
        %v1985 = vsel %vm537, %v1970, %v1979
        %1989 = vrot.lane.b32.xlu0 %v1036, 32
        %v1990 = vpop.permute.xlu0 %1989
        %1991 = vrot.lane.b32.xlu0 %v1190, 32
        %v1992 = vpop.permute.xlu0 %1991
        %1993 = vrot.lane.b32.xlu0 %v1344, 32
        %v1994 = vpop.permute.xlu0 %1993
        %v1998 = vmul.f32 %v501, %v1990
        %v1999 = vmul.f32 %v502, %v1992
        %v2000 = vmul.f32 %v503, %v1994
        %v2001 = vmul.f32 %v1983, %v1499
        %v2002 = vmul.f32 %v1984, %v1654
        %v2003 = vmul.f32 %v1985, %v1809
        %2007 = vrot.lane.b32.xlu0 %v2001, 32
        %v2008 = vpop.permute.xlu0 %2007
        %2009 = vrot.lane.b32.xlu0 %v2002, 32
        %v2010 = vpop.permute.xlu0 %2009
        %2011 = vrot.lane.b32.xlu0 %v2003, 32
        %v2012 = vpop.permute.xlu0 %2011
        %v2016 = vadd.f32 %v1998, %v2008
        %v2017 = vadd.f32 %v1999, %v2010
        %v2018 = vadd.f32 %v2000, %v2012
        %v2019 = vpack.c.bf16 %v1964, %v1964
        %v2020 = vpack.c.bf16 %v2017, %v2016
        %v2021 = vpack.c.bf16 %v2018, %v2018
        %2023 = vrot.lane.b32.xlu0 %v2019, 96
        %v2024 = vpop.permute.xlu0 %2023
        %2027 = vrot.lane.b32.xlu0 %v2020, 96
        %v2028 = vpop.permute.xlu0 %2027
        %2029 = vrot.lane.b32.xlu0 %v2021, 96
        %v2030 = vpop.permute.xlu0 %2029
        %v2032 = vsel %vm1866, %v2024, 0
        %v2035 = vsel %vm1866, %v2028, 0
        %v2038 = vsel %vm1866, %v2030, 0
        %2040 = vmatpush.bf16.xpose.msra.mxu0 0
        %2041 = vmatpush.bf16.xpose.msra.mxu0 0
        %2042 = vmatpush.bf16.xpose.msra.mxu0 0
        %2043 = vmatpush.bf16.xpose.msra.mxu0 0
        %2044 = vmatpush.bf16.xpose.msra.mxu0 0
        %2045 = vmatpush.bf16.xpose.msra.mxu0 0
        %2046 = vmatpush.bf16.xpose.msra.mxu0 %v2038
        %2047 = vmatpush.bf16.xpose.msra.mxu0 %v2035
        %2048 = vmatmul.bf16.gmra.mxu0 %v2032
        %v2049 = vpop.f32.mrf.mxu0
        %v2050 = vadd.f32 0.0, %v2049
        %v2051 = vpop.f32.mrf.mxu0
        %2052 = vdwg.mxu0
        %v2053 = vsel %vm548, %v2050, -1e+30
        %v2054 = vsel %vm1890, %v2053, -inf
        %2055 = vmax.xlane.f32.xlu0 %v2054
        %v2056 = vpop.xlane.xlu0 %2055
        %v2057 = vsub.f32 %v2053, %v2056
        %v2058 = vmul.f32 %v2057, 1.442695
        %v2059 = vpow.pop %v2058
        %v2060 = vsel %vm1890, %v2059, 0.0
        %2061 = vadd.xlane.f32.xlu0 %v2060
        %v2062 = vpop.xlane.xlu0 %2061
        %v2063 = vpack.c.bf16 %v2059, %v2059
        %2064 = vrot.lane.b32.xlu0 %v1901, 32
        %v2065 = vpop.permute.xlu0 %2064
        %2066 = vrot.lane.b32.xlu0 %v1902, 32
        %v2067 = vpop.permute.xlu0 %2066
        %v2070 = vsel %vm1890, %v2063, 0
        %v2073 = vsel %vm1913, %v2067, 0
        %2075 = vmatpush.bf16.msra.mxu0 0
        %2076 = vmatpush.bf16.msra.mxu0 0
        %2077 = vmatpush.bf16.msra.mxu0 0
        %2078 = vmatpush.bf16.msra.mxu0 0
        %2079 = vmatpush.bf16.msra.mxu0 0
        %2080 = vmatpush.bf16.msra.mxu0 0
        %2081 = vmatpush.bf16.msra.mxu0 %v2073
        %2082 = vmatpush.bf16.msra.mxu0 %v2065
        %2083 = vmatmul.bf16.gmra.mxu0 %v2070
        %v2084 = vpop.f32.mrf.mxu0
        %v2085 = vadd.f32 0.0, %v2084
        %v2086 = vpop.f32.mrf.mxu0
        %2087 = vdwg.mxu0
        %v2088 = vrcp.pop %v2062
        %v2089 = vmul.f32 %v2062, %v2088
        %v2090 = vsub.f32 1.0, %v2089
        %v2091 = vmul.f32 %v2088, %v2090
        %v2092 = vadd.f32 %v2088, %v2091
        %vm2093 = vweird.f32 %v2062
        %vm2094 = vweird.f32 %v2088
        %vm2095 = vmor %vm2093, %vm2094
        %v2096 = vsel %vm2095, %v2088, %v2092
        %v2097 = vand.u32 2147483647, %v2062
        %vm2098 = vcmp.eq.f32.partialorder %v2097, 8.507059e+37
        %v2099 = vand.u32 %v2062, 2147483648
        %v2100 = vor.u32 1.1754944e-38, %v2099
        %v2101 = vsel %vm2098, %v2100, %v2096
        %v2102 = vmul.f32 %v2085, %v2101
        %2104 = vrot.lane.b32.xlu0 %v2102, 32
        %v2105 = vpop.permute.xlu0 %2104
        %vm2107 = vcmask 523520
        %2108 = vst.msk [vmem:[#allocation2] sm:$0xff] %vm2107, %v2105
        %v2109 = vld [vmem:[#allocation2] sm:$0xff]
        %v2110 = vpack.c.bf16 %v2109, %v2109
        %v2111 = vld [vmem:[#allocation3] sm:$0xff]
        %v2112 = vld [vmem:[#allocation3 + $0x8] sm:$0xff]
        %v2113 = vld [vmem:[#allocation3 + $0x10] sm:$0xff]
        %v2114 = vld [vmem:[#allocation3 + $0x18] sm:$0xff]
        %v2115 = vld [vmem:[#allocation3 + $0x20] sm:$0xff]
        %v2116 = vld [vmem:[#allocation3 + $0x28] sm:$0xff]
        %v2117 = vld [vmem:[#allocation3 + $0x30] sm:$0xff]
        %v2118 = vld [vmem:[#allocation3 + $0x38] sm:$0xff]
        %v2119 = vpack.c.bf16 %v2112, %v2111
        %v2120 = vpack.c.bf16 %v2114, %v2113
        %v2121 = vpack.c.bf16 %v2116, %v2115
        %v2122 = vpack.c.bf16 %v2118, %v2117
        %v2123 = vld [vmem:[%s482] sm:$0xff]
        %vm2124 = vcmask 523264
        %v2126 = vsel %vm2124, %v2110, 0
        %2128 = vmatpush.bf16.msra.mxu0 0
        %2129 = vmatpush.bf16.msra.mxu0 0
        %2130 = vmatpush.bf16.msra.mxu0 0
        %2131 = vmatpush.bf16.msra.mxu0 0
        %2132 = vmatpush.bf16.msra.mxu0 %v2122
        %2133 = vmatpush.bf16.msra.mxu0 %v2121
        %2134 = vmatpush.bf16.msra.mxu0 %v2120
        %2135 = vmatpush.bf16.msra.mxu0 %v2119
        %2136 = vmatmul.bf16.gmra.mxu0 %v2126
        %v2137 = vpop.f32.mrf.mxu0
        %v2138 = vadd.f32 %v2123, %v2137
        %v2139 = vpop.f32.mrf.mxu0
        %2140 = vdwg.mxu0
        %2141 = vst.msk [vmem:[%s490] sm:$0xff] %vm2124, %v2138
        %s2142 = smul.u32 %s23, 2
        %s2143 = sadd.s32 %s2142, %s24
        %p2144 = scmp.lt.s32.totalorder %s2143, 3
        %s2145 = scalar_select %p2144, %s2143, 3
        %s2146 = smul.addr %s2145, 8
        %s2147 = scalar_lea.vmem %s7, %s2146
        // Predicated region
        $region53: #{continuous_local_transformer_forward.10} parent=47 // pred_check
          %p2148 = pneg %p257
        $region54: #{continuous_local_transformer_forward.10} parent=47 // pred_check_branch
          %2150 = sbr.rel (%p2148) target = $region56
        $region55: #{continuous_local_transformer_forward.10} parent=47 // pred_region
          %s2151 = smul.u32 %s23, 2
          %s2152 = sadd.s32 %s2151, %s24
        $region56: #{continuous_local_transformer_forward.10} parent=47 // pred_fallthru
          _
      $region48: #{continuous_local_transformer_forward.10} parent=5 // pred_fallthru
        _
      %p2153 = scmp.le.s32.totalorder 2, %s14
      // Predicated region
      $region57: #{continuous_local_transformer_forward.10} parent=5 // pred_check
        %p2154 = pneg %p2153
      $region58: #{continuous_local_transformer_forward.10} parent=5 // pred_check_branch
        %2156 = sbr.rel (%p2154) target = $region60
      $region59: #{continuous_local_transformer_forward.10} parent=5 // pred_region
        %s2157 = ssub.s32 %s14, 2
        // Predicated region
        $region61: #{continuous_local_transformer_forward.10} parent=59 // pred_check
          %p2158 = pneg %p263
        $region62: #{continuous_local_transformer_forward.10} parent=59 // pred_check_branch
          %2160 = sbr.rel (%p2158) target = $region64
        $region63: #{continuous_local_transformer_forward.10} parent=59 // pred_region
          %s2161 = smul.u32 %s25, 2
          %s2162 = sadd.s32 %s2161, %s26
          %p2163 = scmp.lt.s32.totalorder %s2162, 3
          %s2164 = scalar_select %p2163, %s2162, 3
          %s2165 = smul.addr %s2164, 8
          %s2166 = scalar_lea.vmem %s7, %s2165
        $region64: #{continuous_local_transformer_forward.10} parent=59 // pred_fallthru
          _
      $region60: #{continuous_local_transformer_forward.10} parent=5 // pred_fallthru
        _
    $region6: #{continuous_local_transformer_forward.10} parent=1 // loop_footer
      %s18 = sadd.s32 1, %s14
    $region7: #{continuous_local_transformer_forward.10} parent=1 // loop_footer_branch
      %13 = sbr.rel target = $region3
    $region8: #{continuous_local_transformer_forward.10} parent=1 // loop_exit
      _
    %2167 = vsyncpa [#allocation4], 1
    %s2168 = scalar_lea.sflag [#allocation4], 1
    %2169 = vsyncpa %s2168, 1

// kernel: continuous_local_transformer_forward.11
$region0: #{continuous_local_transformer_forward.11}
  #allocation0 [shape = 'u32[]', space=smem, size = 0x4, offset = 0x4, fixed_abs, tag = 'smem constant byte address 0x4 - core index']
  #allocation1 [shape = 'u32[72,128]{1,0:T(1,128)}', space=vmem, size = 0x9000, scoped, tag = 'internal scratch']
  %s0 = inlined_call_operand.vmem [shape: f32[32,64], index: 0, kind: input, shape index: {}, may-alias: {0,5}]
  %s1 = inlined_call_operand.vmem [shape: f32[1,64], index: 1, kind: input, shape index: {}]
  %s2 = inlined_call_operand.vmem [shape: f32[64,256], index: 2, kind: input, shape index: {}]
  %s3 = inlined_call_operand.vmem [shape: f32[1,256], index: 3, kind: input, shape index: {}]
  %s4 = inlined_call_operand.vmem [shape: f32[128,64], index: 4, kind: input, shape index: {}]
  %s5 = inlined_call_operand.vmem [shape: f32[32,64], index: 5, kind: output, shape index: {}, may-alias: {0,5}]
  %s6 = sld [smem:[#allocation0]]
  $region53: #{continuous_local_transformer_forward.11} parent=0
    _
  %s8 = ssub.s32 1, %s6
  %s9 = scalar_select 0, %s8, %s6
  loop: start=0, step=1, limit=4
  $region2: #{continuous_local_transformer_forward.11} parent=0 // loop_pre_header
    _
  $region3: #{continuous_local_transformer_forward.11} parent=0 // loop_header
    %s11 = sphi 0, %s15
    %p12 = scmp.ge.s32.totalorder %s11, 4
    %s21 = sphi 0, %s23
    %s24 = sphi 0, %s21
    %s25 = sphi 0, %s24
    %s41 = sphi 0, %s25
    %s45 = sphi 0, %s45
    %s47 = sphi 0, %s45
    %s48 = sphi 0, %s47
    %s62 = sphi 0, %s48
    %s66 = sphi 0, %s66
    %s68 = sphi 0, %s66
    %s69 = sphi 0, %s68
    %s83 = sphi 0, %s69
    %s87 = sphi 0, %s87
    %s89 = sphi 0, %s87
    %s90 = sphi 0, %s89
    %s104 = sphi 0, %s90
    %s108 = sphi 0, %s108
    %s110 = sphi 0, %s108
    %s111 = sphi 0, %s110
    %s125 = sphi 0, %s111
    %s131 = sphi 0, %s133
    %s134 = sphi 0, %s131
    %s135 = sphi 0, %s134
    %s151 = sphi 0, %s135
  $region4: #{continuous_local_transformer_forward.11} parent=0 // loop_header_branch
    %14 = sbr.rel (%p12) target = $region8
  $region5: #{continuous_local_transformer_forward.11} parent=0 // loop_body
    %s16 = ssub.s32 %s11, 1
    %s17 = ssub.s32 %s11, 2
    %s18 = sadd.s32 %s11, 1
    %s19 = ssub.s32 %s11, %s18
    %p20 = scmp.eq.s32.totalorder %s19, 0
    %s22 = sadd.s32 %s21, 1
    %s23 = scalar_select %p20, %s21, %s22
    %p26 = pneg %p20
    %p27 = scmp.eq.s32.totalorder %s11, 1
    %p28 = por %p26, %p27
    %p29 = scmp.ne.s32.totalorder %s21, %s24
    %p30 = scmp.eq.s32.totalorder %s11, 0
    %p31 = por %p29, %p30
    %p32 = scmp.ne.s32.totalorder %s21, %s24
    %p33 = scmp.eq.s32.totalorder %s16, 1
    %p34 = por %p32, %p33
    %p35 = scmp.ne.s32.totalorder %s24, %s25
    %p36 = scmp.eq.s32.totalorder %s16, 0
    %p37 = por %p35, %p36
    %p38 = scmp.ne.s32.totalorder %s24, %s25
    %p39 = scmp.eq.s32.totalorder %s17, 1
    %p40 = por %p38, %p39
    %p42 = scmp.ne.s32.totalorder %s25, %s41
    %p43 = scmp.eq.s32.totalorder %s17, 0
    %p44 = por %p42, %p43
    %s46 = sadd.s32 %s45, 1
    %p49 = scmp.eq.s32.totalorder %s11, 1
    %p50 = scmp.ne.s32.totalorder %s45, %s47
    %p51 = scmp.eq.s32.totalorder %s11, 0
    %p52 = por %p50, %p51
    %p53 = scmp.ne.s32.totalorder %s45, %s47
    %p54 = scmp.eq.s32.totalorder %s16, 1
    %p55 = por %p53, %p54
    %p56 = scmp.ne.s32.totalorder %s47, %s48
    %p57 = scmp.eq.s32.totalorder %s16, 0
    %p58 = por %p56, %p57
    %p59 = scmp.ne.s32.totalorder %s47, %s48
    %p60 = scmp.eq.s32.totalorder %s17, 1
    %p61 = por %p59, %p60
    %p63 = scmp.ne.s32.totalorder %s48, %s62
    %p64 = scmp.eq.s32.totalorder %s17, 0
    %p65 = por %p63, %p64
    %s67 = sadd.s32 %s66, 1
    %p70 = scmp.eq.s32.totalorder %s11, 1
    %p71 = scmp.ne.s32.totalorder %s66, %s68
    %p72 = scmp.eq.s32.totalorder %s11, 0
    %p73 = por %p71, %p72
    %p74 = scmp.ne.s32.totalorder %s66, %s68
    %p75 = scmp.eq.s32.totalorder %s16, 1
    %p76 = por %p74, %p75
    %p77 = scmp.ne.s32.totalorder %s68, %s69
    %p78 = scmp.eq.s32.totalorder %s16, 0
    %p79 = por %p77, %p78
    %p80 = scmp.ne.s32.totalorder %s68, %s69
    %p81 = scmp.eq.s32.totalorder %s17, 1
    %p82 = por %p80, %p81
    %p84 = scmp.ne.s32.totalorder %s69, %s83
    %p85 = scmp.eq.s32.totalorder %s17, 0
    %p86 = por %p84, %p85
    %s88 = sadd.s32 %s87, 1
    %p91 = scmp.eq.s32.totalorder %s11, 1
    %p92 = scmp.ne.s32.totalorder %s87, %s89
    %p93 = scmp.eq.s32.totalorder %s11, 0
    %p94 = por %p92, %p93
    %p95 = scmp.ne.s32.totalorder %s87, %s89
    %p96 = scmp.eq.s32.totalorder %s16, 1
    %p97 = por %p95, %p96
    %p98 = scmp.ne.s32.totalorder %s89, %s90
    %p99 = scmp.eq.s32.totalorder %s16, 0
    %p100 = por %p98, %p99
    %p101 = scmp.ne.s32.totalorder %s89, %s90
    %p102 = scmp.eq.s32.totalorder %s17, 1
    %p103 = por %p101, %p102
    %p105 = scmp.ne.s32.totalorder %s90, %s104
    %p106 = scmp.eq.s32.totalorder %s17, 0
    %p107 = por %p105, %p106
    %s109 = sadd.s32 %s108, 1
    %p112 = scmp.eq.s32.totalorder %s11, 1
    %p113 = scmp.ne.s32.totalorder %s108, %s110
    %p114 = scmp.eq.s32.totalorder %s11, 0
    %p115 = por %p113, %p114
    %p116 = scmp.ne.s32.totalorder %s108, %s110
    %p117 = scmp.eq.s32.totalorder %s16, 1
    %p118 = por %p116, %p117
    %p119 = scmp.ne.s32.totalorder %s110, %s111
    %p120 = scmp.eq.s32.totalorder %s16, 0
    %p121 = por %p119, %p120
    %p122 = scmp.ne.s32.totalorder %s110, %s111
    %p123 = scmp.eq.s32.totalorder %s17, 1
    %p124 = por %p122, %p123
    %p126 = scmp.ne.s32.totalorder %s111, %s125
    %p127 = scmp.eq.s32.totalorder %s17, 0
    %p128 = por %p126, %p127
    %s129 = ssub.s32 %s11, %s18
    %p130 = scmp.eq.s32.totalorder %s129, 0
    %s132 = sadd.s32 %s131, 1
    %s133 = scalar_select %p130, %s131, %s132
    %p136 = pneg %p130
    %p137 = scmp.eq.s32.totalorder %s11, 1
    %p138 = por %p136, %p137
    %p139 = scmp.ne.s32.totalorder %s131, %s134
    %p140 = scmp.eq.s32.totalorder %s11, 0
    %p141 = por %p139, %p140
    %p142 = scmp.ne.s32.totalorder %s131, %s134
    %p143 = scmp.eq.s32.totalorder %s16, 1
    %p144 = por %p142, %p143
    %p145 = scmp.ne.s32.totalorder %s134, %s135
    %p146 = scmp.eq.s32.totalorder %s16, 0
    %p147 = por %p145, %p146
    %p148 = scmp.ne.s32.totalorder %s134, %s135
    %p149 = scmp.eq.s32.totalorder %s17, 1
    %p150 = por %p148, %p149
    %p152 = scmp.ne.s32.totalorder %s135, %s151
    %p153 = scmp.eq.s32.totalorder %s17, 0
    %p154 = por %p152, %p153
    %p155 = scmp.le.s32.totalorder 1, %s11
    %p156 = scmp.lt.s32.totalorder %s11, 3
    %p157 = pnand %p155, %p156
    %p158 = pneg %p157
    // Predicated region
    $region9: #{continuous_local_transformer_forward.11} parent=5 // pred_check
      _
    $region10: #{continuous_local_transformer_forward.11} parent=5 // pred_check_branch
      %160 = sbr.rel (%p157) target = $region12
    $region11: #{continuous_local_transformer_forward.11} parent=5 // pred_region
      %s161 = ssub.s32 %s11, 1
      // Predicated region
      $region13: #{continuous_local_transformer_forward.11} parent=11 // pred_check
        %p162 = pneg %p58
      $region14: #{continuous_local_transformer_forward.11} parent=11 // pred_check_branch
        %164 = sbr.rel (%p162) target = $region16
      $region15: #{continuous_local_transformer_forward.11} parent=11 // pred_region
        _
      $region16: #{continuous_local_transformer_forward.11} parent=11 // pred_fallthru
        _
      // Predicated region
      $region17: #{continuous_local_transformer_forward.11} parent=11 // pred_check
        %p165 = pneg %p79
      $region18: #{continuous_local_transformer_forward.11} parent=11 // pred_check_branch
        %167 = sbr.rel (%p165) target = $region20
      $region19: #{continuous_local_transformer_forward.11} parent=11 // pred_region
        _
      $region20: #{continuous_local_transformer_forward.11} parent=11 // pred_fallthru
        _
      // Predicated region
      $region21: #{continuous_local_transformer_forward.11} parent=11 // pred_check
        %p168 = pneg %p100
      $region22: #{continuous_local_transformer_forward.11} parent=11 // pred_check_branch
        %170 = sbr.rel (%p168) target = $region24
      $region23: #{continuous_local_transformer_forward.11} parent=11 // pred_region
        _
      $region24: #{continuous_local_transformer_forward.11} parent=11 // pred_fallthru
        _
      // Predicated region
      $region25: #{continuous_local_transformer_forward.11} parent=11 // pred_check
        %p171 = pneg %p121
      $region26: #{continuous_local_transformer_forward.11} parent=11 // pred_check_branch
        %173 = sbr.rel (%p171) target = $region28
      $region27: #{continuous_local_transformer_forward.11} parent=11 // pred_region
        _
      $region28: #{continuous_local_transformer_forward.11} parent=11 // pred_fallthru
        _
    $region12: #{continuous_local_transformer_forward.11} parent=5 // pred_fallthru
      _
    %p174 = scmp.lt.s32.totalorder %s11, 2
    // Predicated region
    $region29: #{continuous_local_transformer_forward.11} parent=5 // pred_check
      %p175 = pneg %p174
    $region30: #{continuous_local_transformer_forward.11} parent=5 // pred_check_branch
      %177 = sbr.rel (%p175) target = $region32
    $region31: #{continuous_local_transformer_forward.11} parent=5 // pred_region
      // Predicated region
      $region33: #{continuous_local_transformer_forward.11} parent=31 // pred_check
        %p178 = pneg %p31
      $region34: #{continuous_local_transformer_forward.11} parent=31 // pred_check_branch
        %180 = sbr.rel (%p178) target = $region36
      $region35: #{continuous_local_transformer_forward.11} parent=31 // pred_region
        %s181 = smul.u32 2, %s11
        %p182 = scmp.lt.s32.totalorder %s181, 3
        %s183 = scalar_select %p182, %s181, 3
        %s184 = smul.addr %s183, 8
        %s185 = scalar_lea.vmem %s0, %s184
        %s186 = smul.u32 2, %s11
      $region36: #{continuous_local_transformer_forward.11} parent=31 // pred_fallthru
        _
    $region32: #{continuous_local_transformer_forward.11} parent=5 // pred_fallthru
      _
    %p187 = scmp.le.s32.totalorder 1, %s11
    %p188 = scmp.lt.s32.totalorder %s11, 3
    %p189 = pnand %p187, %p188
    %p190 = pneg %p189
    // Predicated region
    $region37: #{continuous_local_transformer_forward.11} parent=5 // pred_check
      _
    $region38: #{continuous_local_transformer_forward.11} parent=5 // pred_check_branch
      %192 = sbr.rel (%p189) target = $region40
    $region39: #{continuous_local_transformer_forward.11} parent=5 // pred_region
      %s193 = ssub.s32 %s11, 1
      %s194 = smul.u32 2, %s16
      %p195 = scmp.lt.s32.totalorder %s194, 3
      %s196 = scalar_select %p195, %s194, 3
      %s197 = smul.addr %s196, 8
      %s198 = scalar_lea.vmem %s0, %s197
      %p199 = pneg %p37
      %p200 = pneg %p34
      %p201 = pneg %p58
      %p202 = pneg %p55
      %p203 = pneg %p79
      %p204 = pneg %p76
      %p205 = pneg %p100
      %p206 = pneg %p97
      %p207 = pneg %p121
      %p208 = pneg %p118
      %p209 = pneg %p147
      %p210 = pneg %p144
      %s211 = smul.u32 2, %s16
      %p212 = scmp.lt.s32.totalorder %s211, 3
      %s213 = scalar_select %p212, %s211, 3
      %s214 = smul.addr %s213, 8
      %s215 = scalar_lea.vmem %s5, %s214
      %s216 = smul.u32 2, %s16
      %p217 = scmp.lt.s32.totalorder %s216, 3
      %s218 = scalar_select %p217, %s216, 3
      %s219 = smul.addr %s218, 8
      %s220 = scalar_lea.vmem %s0, %s219
      %s221 = smul.u32 2, %s16
      %s222 = smul.u32 2, %s16
      %p223 = scmp.lt.s32.totalorder %s222, 3
      %s224 = scalar_select %p223, %s222, 3
      %s225 = smul.addr %s224, 8
      %s226 = scalar_lea.vmem %s5, %s225
      %s227 = smul.u32 2, %s16
      %v229 = vld [vmem:[%s220] sm:$0xff]
      %v230 = vld [vmem:[%s220 + $0x8] sm:$0xff]
      %vm231 = vcmask 523264
      %v232 = vsel %vm231, %v229, 0.0
      %233 = vadd.xlane.f32.xlu0 %v232
      %v234 = vpop.xlane.xlu0 %233
      %v235 = vsel %vm231, %v230, 0.0
      %236 = vadd.xlane.f32.xlu0 %v235
      %v237 = vpop.xlane.xlu0 %236
      %v238 = vrcp.pop 64.0
      %v239 = vmul.f32 64.0, %v238
      %v240 = vsub.f32 1.0, %v239
      %v241 = vmul.f32 %v238, %v240
      %v242 = vadd.f32 %v238, %v241
      %vm243 = vweird.f32 %v238
      %v244 = vsel %vm243, %v238, %v242
      %v245 = vmul.f32 %v234, %v244
      %v246 = vmul.f32 %v237, %v244
      %v247 = vsub.f32 %v229, %v245
      %v248 = vsub.f32 %v230, %v246
      %v249 = vmul.f32 %v247, %v247
      %v250 = vmul.f32 %v248, %v248
      %v251 = vsel %vm231, %v249, 0.0
      %252 = vadd.xlane.f32.xlu0 %v251
      %v253 = vpop.xlane.xlu0 %252
      %v254 = vsel %vm231, %v250, 0.0
      %255 = vadd.xlane.f32.xlu0 %v254
      %v256 = vpop.xlane.xlu0 %255
      %v257 = vmul.f32 %v253, %v244
      %v258 = vmul.f32 %v256, %v244
      %v259 = vadd.f32 %v257, 1e-05
      %v260 = vadd.f32 %v258, 1e-05
      %v261 = vrsqrt.pop %v259
      %v262 = vmul.f32 %v261, %v259
      %v263 = vmul.f32 %v262, %v261
      %v264 = vmul.f32 0.5, %v263
      %v265 = vsub.f32 1.5, %v264
      %v266 = vmul.f32 %v261, %v265
      %vm267 = vweird.f32 %v259
      %vm268 = vweird.f32 %v261
      %vm269 = vmor %vm267, %vm268
      %v270 = vsel %vm269, %v261, %v266
      %v271 = vrsqrt.pop %v260
      %v272 = vmul.f32 %v271, %v260
      %v273 = vmul.f32 %v272, %v271
      %v274 = vmul.f32 0.5, %v273
      %v275 = vsub.f32 1.5, %v274
      %v276 = vmul.f32 %v271, %v275
      %vm277 = vweird.f32 %v260
      %vm278 = vweird.f32 %v271
      %vm279 = vmor %vm277, %vm278
      %v280 = vsel %vm279, %v271, %v276
      %v281 = vmul.f32 %v247, %v270
      %v282 = vmul.f32 %v248, %v280
      %v283 = vld [vmem:[%s1] sm:$0x1]
      %v285 = vperm.slane %v283, 0
      %v287 = vmul.f32 %v281, %v285
      %v288 = vmul.f32 %v282, %v285
      %v289 = vpack.c.bf16 %v288, %v287
      %v290 = vld [vmem:[%s2] sm:$0xff]
      %v291 = vld [vmem:[%s2 + $0x8] sm:$0xff]
      %v292 = vld [vmem:[%s2 + $0x10] sm:$0xff]
      %v293 = vld [vmem:[%s2 + $0x18] sm:$0xff]
      %v294 = vld [vmem:[%s2 + $0x20] sm:$0xff]
      %v295 = vld [vmem:[%s2 + $0x28] sm:$0xff]
      %v296 = vld [vmem:[%s2 + $0x30] sm:$0xff]
      %v297 = vld [vmem:[%s2 + $0x38] sm:$0xff]
      %v298 = vld [vmem:[%s2 + $0x40] sm:$0xff]
      %v299 = vld [vmem:[%s2 + $0x48] sm:$0xff]
      %v300 = vld [vmem:[%s2 + $0x50] sm:$0xff]
      %v301 = vld [vmem:[%s2 + $0x58] sm:$0xff]
      %v302 = vld [vmem:[%s2 + $0x60] sm:$0xff]
      %v303 = vld [vmem:[%s2 + $0x68] sm:$0xff]
      %v304 = vld [vmem:[%s2 + $0x70] sm:$0xff]
      %v305 = vld [vmem:[%s2 + $0x78] sm:$0xff]
      %v306 = vpack.c.bf16 %v292, %v290
      %v307 = vpack.c.bf16 %v293, %v291
      %v308 = vpack.c.bf16 %v296, %v294
      %v309 = vpack.c.bf16 %v297, %v295
      %v310 = vpack.c.bf16 %v300, %v298
      %v311 = vpack.c.bf16 %v301, %v299
      %v312 = vpack.c.bf16 %v304, %v302
      %v313 = vpack.c.bf16 %v305, %v303
      %v314 = vld [vmem:[%s3] sm:$0x3]
      %v316 = vperm.slane %v314, 0
      %v317 = vperm.slane %v314, 1
      %v321 = vsel %vm231, %v289, 0
      %323 = vmatpush.bf16.msra.mxu0 0
      %324 = vmatpush.bf16.msra.mxu0 0
      %325 = vmatpush.bf16.msra.mxu0 0
      %326 = vmatpush.bf16.msra.mxu0 0
      %327 = vmatpush.bf16.msra.mxu0 %v312
      %328 = vmatpush.bf16.msra.mxu0 %v310
      %329 = vmatpush.bf16.msra.mxu0 %v308
      %330 = vmatpush.bf16.msra.mxu0 %v306
      %331 = vmatmul.bf16.gmra.mxu0 %v321
      %v332 = vpop.f32.mrf.mxu0
      %v333 = vadd.f32 %v316, %v332
      %v334 = vpop.f32.mrf.mxu0
      %v335 = vadd.f32 %v316, %v334
      %336 = vdwg.mxu0
      %337 = vmatpush.bf16.msra.mxu0 0
      %338 = vmatpush.bf16.msra.mxu0 0
      %339 = vmatpush.bf16.msra.mxu0 0
      %340 = vmatpush.bf16.msra.mxu0 0
      %341 = vmatpush.bf16.msra.mxu0 %v313
      %342 = vmatpush.bf16.msra.mxu0 %v311
      %343 = vmatpush.bf16.msra.mxu0 %v309
      %344 = vmatpush.bf16.msra.mxu0 %v307
      %345 = vmatmul.bf16.gmra.mxu0 %v321
      %v346 = vpop.f32.mrf.mxu0
      %v347 = vadd.f32 %v317, %v346
      %v348 = vpop.f32.mrf.mxu0
      %v349 = vadd.f32 %v317, %v348
      %350 = vdwg.mxu0
      %v351 = vxor.u32 %v347, 2147483648
      %v352 = vxor.u32 %v349, 2147483648
      %v353 = vmul.f32 %v351, 1.442695
      %v354 = vpow.pop %v353
      %v355 = vmul.f32 %v352, 1.442695
      %v356 = vpow.pop %v355
      %v357 = vadd.f32 %v354, 1.0
      %v358 = vadd.f32 %v356, 1.0
      %v359 = vrcp.pop %v357
      %v360 = vmul.f32 %v357, %v359
      %v361 = vsub.f32 1.0, %v360
      %v362 = vmul.f32 %v359, %v361
      %v363 = vadd.f32 %v359, %v362
      %vm364 = vweird.f32 %v357
      %vm365 = vweird.f32 %v359
      %vm366 = vmor %vm364, %vm365
      %v367 = vsel %vm366, %v359, %v363
      %v368 = vand.u32 2147483647, %v357
      %vm369 = vcmp.eq.f32.partialorder %v368, 8.507059e+37
      %v370 = vand.u32 %v357, 2147483648
      %v371 = vor.u32 1.1754944e-38, %v370
      %v372 = vsel %vm369, %v371, %v367
      %v373 = vmul.f32 1.0, %v372
      %v374 = vrcp.pop %v358
      %v375 = vmul.f32 %v358, %v374
      %v376 = vsub.f32 1.0, %v375
      %v377 = vmul.f32 %v374, %v376
      %v378 = vadd.f32 %v374, %v377
      %vm379 = vweird.f32 %v358
      %vm380 = vweird.f32 %v374
      %vm381 = vmor %vm379, %vm380
      %v382 = vsel %vm381, %v374, %v378
      %v383 = vand.u32 2147483647, %v358
      %vm384 = vcmp.eq.f32.partialorder %v383, 8.507059e+37
      %v385 = vand.u32 %v358, 2147483648
      %v386 = vor.u32 1.1754944e-38, %v385
      %v387 = vsel %vm384, %v386, %v382
      %v388 = vmul.f32 1.0, %v387
      %v389 = vmul.f32 %v347, %v373
      %v390 = vmul.f32 %v349, %v388
      %v391 = vmul.f32 %v333, %v389
      %v392 = vmul.f32 %v335, %v390
      %v393 = vpack.c.bf16 %v392, %v391
      %v394 = vld [vmem:[%s4] sm:$0xff]
      %v395 = vld [vmem:[%s4 + $0x8] sm:$0xff]
      %v396 = vld [vmem:[%s4 + $0x10] sm:$0xff]
      %v397 = vld [vmem:[%s4 + $0x18] sm:$0xff]
      %v398 = vld [vmem:[%s4 + $0x20] sm:$0xff]
      %v399 = vld [vmem:[%s4 + $0x28] sm:$0xff]
      %v400 = vld [vmem:[%s4 + $0x30] sm:$0xff]
      %v401 = vld [vmem:[%s4 + $0x38] sm:$0xff]
      %v402 = vld [vmem:[%s4 + $0x40] sm:$0xff]
      %v403 = vld [vmem:[%s4 + $0x48] sm:$0xff]
      %v404 = vld [vmem:[%s4 + $0x50] sm:$0xff]
      %v405 = vld [vmem:[%s4 + $0x58] sm:$0xff]
      %v406 = vld [vmem:[%s4 + $0x60] sm:$0xff]
      %v407 = vld [vmem:[%s4 + $0x68] sm:$0xff]
      %v408 = vld [vmem:[%s4 + $0x70] sm:$0xff]
      %v409 = vld [vmem:[%s4 + $0x78] sm:$0xff]
      %v410 = vpack.c.bf16 %v395, %v394
      %v411 = vpack.c.bf16 %v397, %v396
      %v412 = vpack.c.bf16 %v399, %v398
      %v413 = vpack.c.bf16 %v401, %v400
      %v414 = vpack.c.bf16 %v403, %v402
      %v415 = vpack.c.bf16 %v405, %v404
      %v416 = vpack.c.bf16 %v407, %v406
      %v417 = vpack.c.bf16 %v409, %v408
      %418 = vmatpush.bf16.msra.mxu0 %v417
      %419 = vmatpush.bf16.msra.mxu0 %v416
      %420 = vmatpush.bf16.msra.mxu0 %v415
      %421 = vmatpush.bf16.msra.mxu0 %v414
      %422 = vmatpush.bf16.msra.mxu0 %v413
      %423 = vmatpush.bf16.msra.mxu0 %v412
      %424 = vmatpush.bf16.msra.mxu0 %v411
      %425 = vmatpush.bf16.msra.mxu0 %v410
      %426 = vmatmul.bf16.gmra.mxu0 %v393
      %v427 = vpop.f32.mrf.mxu0
      %v428 = vadd.f32 %v229, %v427
      %v429 = vpop.f32.mrf.mxu0
      %v430 = vadd.f32 %v230, %v429
      %431 = vdwg.mxu0
      %432 = vst.msk [vmem:[%s226] sm:$0xff] %vm231, %v428
      %433 = vst.msk [vmem:[%s226 + $0x8] sm:$0xff] %vm231, %v430
      %s434 = smul.u32 2, %s16
      %p435 = scmp.lt.s32.totalorder %s434, 3
      %s436 = scalar_select %p435, %s434, 3
      %s437 = smul.addr %s436, 8
      %s438 = scalar_lea.vmem %s5, %s437
      // Predicated region
      $region41: #{continuous_local_transformer_forward.11} parent=39 // pred_check
        %p439 = pneg %p144
      $region42: #{continuous_local_transformer_forward.11} parent=39 // pred_check_branch
        %441 = sbr.rel (%p439) target = $region44
      $region43: #{continuous_local_transformer_forward.11} parent=39 // pred_region
        %s442 = smul.u32 2, %s16
      $region44: #{continuous_local_transformer_forward.11} parent=39 // pred_fallthru
        _
    $region40: #{continuous_local_transformer_forward.11} parent=5 // pred_fallthru
      _
    %p443 = scmp.le.s32.totalorder 2, %s11
    // Predicated region
    $region45: #{continuous_local_transformer_forward.11} parent=5 // pred_check
      %p444 = pneg %p443
    $region46: #{continuous_local_transformer_forward.11} parent=5 // pred_check_branch
      %446 = sbr.rel (%p444) target = $region48
    $region47: #{continuous_local_transformer_forward.11} parent=5 // pred_region
      %s447 = ssub.s32 %s11, 2
      // Predicated region
      $region49: #{continuous_local_transformer_forward.11} parent=47 // pred_check
        %p448 = pneg %p150
      $region50: #{continuous_local_transformer_forward.11} parent=47 // pred_check_branch
        %450 = sbr.rel (%p448) target = $region52
      $region51: #{continuous_local_transformer_forward.11} parent=47 // pred_region
        %s451 = smul.u32 2, %s17
        %p452 = scmp.lt.s32.totalorder %s451, 3
        %s453 = scalar_select %p452, %s451, 3
        %s454 = smul.addr %s453, 8
        %s455 = scalar_lea.vmem %s5, %s454
      $region52: #{continuous_local_transformer_forward.11} parent=47 // pred_fallthru
        _
    $region48: #{continuous_local_transformer_forward.11} parent=5 // pred_fallthru
      _
  $region6: #{continuous_local_transformer_forward.11} parent=0 // loop_footer
    %s15 = sadd.s32 1, %s11
  $region7: #{continuous_local_transformer_forward.11} parent=0 // loop_footer_branch
    %10 = sbr.rel target = $region3
  $region8: #{continuous_local_transformer_forward.11} parent=0 // loop_exit
    _

// kernel: continuous_local_transformer_forward.12
$region0: #{continuous_local_transformer_forward.12}
  #allocation0 [shape = 'u32[]', space=smem, size = 0x4, offset = 0x4, fixed_abs, tag = 'smem constant byte address 0x4 - core index']
  #allocation1 [shape = 'u32[72,128]{1,0:T(1,128)}', space=vmem, size = 0x9000, scoped, tag = 'internal scratch']
  %s0 = inlined_call_operand.vmem [shape: f32[32,64], index: 0, kind: input, shape index: {}]
  %s1 = inlined_call_operand.vmem [shape: f32[1,64], index: 1, kind: input, shape index: {}]
  %s2 = inlined_call_operand.hbm [shape: f32[64,64], index: 2, kind: input, shape index: {}]
  %s3 = inlined_call_operand.hbm [shape: f32[64,128], index: 3, kind: input, shape index: {}]
  %s4 = inlined_call_operand.vmem [shape: f32[32,64], index: 4, kind: output, shape index: {0}]
  %s5 = inlined_call_operand.vmem [shape: f32[32,128], index: 5, kind: output, shape index: {1}]
  %6 = xla_tuple %s4, %s5
  %s7 = sld [smem:[#allocation0]]
  $region65: #{continuous_local_transformer_forward.12} parent=0
    _
  %s9 = ssub.s32 1, %s7
  %s10 = scalar_select 0, %s9, %s7
  $region1: #{continuous_local_transformer_forward.12} parent=0
    #allocation2 [shape = 'u8[32768]{0}', space=vmem, size = 0x8000, scoped, tag = 'input window, operand 2, single buffered']
    #allocation3 [shape = 's32[2]{0}', space=sflag, size = 0x8, scoped, tag = 'scoped memory for continuous_local_transformer_forward.12']
    #allocation4 [shape = 'u8[32768]{0}', space=vmem, size = 0x8000, scoped, tag = 'input window, operand 3, single buffered']
    #allocation5 [shape = 's32[1]{0}', space=sflag, size = 0x4, scoped, tag = 'scoped memory for continuous_local_transformer_forward.12']
    %11 = vsyncpa [#allocation3], 0
    %12 = vsyncpa [#allocation5], 0
    loop: start=0, step=1, limit=4
    $region2: #{continuous_local_transformer_forward.12} parent=1 // loop_pre_header
      _
    $region3: #{continuous_local_transformer_forward.12} parent=1 // loop_header
      %s14 = sphi 0, %s18
      %p15 = scmp.ge.s32.totalorder %s14, 4
      %s24 = sphi 0, %s26
      %s27 = sphi 0, %s24
      %s28 = sphi 0, %s27
      %s44 = sphi 0, %s28
      %s48 = sphi 0, %s48
      %s50 = sphi 0, %s48
      %s51 = sphi 0, %s50
      %s65 = sphi 0, %s51
      %s69 = sphi 0, %s69
      %s71 = sphi 0, %s69
      %s72 = sphi 0, %s71
      %s86 = sphi 0, %s72
      %s90 = sphi 0, %s90
      %s92 = sphi 0, %s90
      %s93 = sphi 0, %s92
      %s107 = sphi 0, %s93
      %s113 = sphi 0, %s115
      %s116 = sphi 0, %s113
      %s117 = sphi 0, %s116
      %s133 = sphi 0, %s117
      %s139 = sphi 0, %s141
      %s142 = sphi 0, %s139
      %s143 = sphi 0, %s142
      %s159 = sphi 0, %s143
    $region4: #{continuous_local_transformer_forward.12} parent=1 // loop_header_branch
      %17 = sbr.rel (%p15) target = $region8
    $region5: #{continuous_local_transformer_forward.12} parent=1 // loop_body
      %s19 = ssub.s32 %s14, 1
      %s20 = ssub.s32 %s14, 2
      %s21 = sadd.s32 %s14, 1
      %s22 = ssub.s32 %s14, %s21
      %p23 = scmp.eq.s32.totalorder %s22, 0
      %s25 = sadd.s32 %s24, 1
      %s26 = scalar_select %p23, %s24, %s25
      %p29 = pneg %p23
      %p30 = scmp.eq.s32.totalorder %s14, 1
      %p31 = por %p29, %p30
      %p32 = scmp.ne.s32.totalorder %s24, %s27
      %p33 = scmp.eq.s32.totalorder %s14, 0
      %p34 = por %p32, %p33
      %p35 = scmp.ne.s32.totalorder %s24, %s27
      %p36 = scmp.eq.s32.totalorder %s19, 1
      %p37 = por %p35, %p36
      %p38 = scmp.ne.s32.totalorder %s27, %s28
      %p39 = scmp.eq.s32.totalorder %s19, 0
      %p40 = por %p38, %p39
      %p41 = scmp.ne.s32.totalorder %s27, %s28
      %p42 = scmp.eq.s32.totalorder %s20, 1
      %p43 = por %p41, %p42
      %p45 = scmp.ne.s32.totalorder %s28, %s44
      %p46 = scmp.eq.s32.totalorder %s20, 0
      %p47 = por %p45, %p46
      %s49 = sadd.s32 %s48, 1
      %p52 = scmp.eq.s32.totalorder %s14, 1
      %p53 = scmp.ne.s32.totalorder %s48, %s50
      %p54 = scmp.eq.s32.totalorder %s14, 0
      %p55 = por %p53, %p54
      %p56 = scmp.ne.s32.totalorder %s48, %s50
      %p57 = scmp.eq.s32.totalorder %s19, 1
      %p58 = por %p56, %p57
      %p59 = scmp.ne.s32.totalorder %s50, %s51
      %p60 = scmp.eq.s32.totalorder %s19, 0
      %p61 = por %p59, %p60
      %p62 = scmp.ne.s32.totalorder %s50, %s51
      %p63 = scmp.eq.s32.totalorder %s20, 1
      %p64 = por %p62, %p63
      %p66 = scmp.ne.s32.totalorder %s51, %s65
      %p67 = scmp.eq.s32.totalorder %s20, 0
      %p68 = por %p66, %p67
      %s70 = sadd.s32 %s69, 1
      %p73 = scmp.eq.s32.totalorder %s14, 1
      %p74 = scmp.ne.s32.totalorder %s69, %s71
      %p75 = scmp.eq.s32.totalorder %s14, 0
      %p76 = por %p74, %p75
      %p77 = scmp.ne.s32.totalorder %s69, %s71
      %p78 = scmp.eq.s32.totalorder %s19, 1
      %p79 = por %p77, %p78
      %p80 = scmp.ne.s32.totalorder %s71, %s72
      %p81 = scmp.eq.s32.totalorder %s19, 0
      %p82 = por %p80, %p81
      %p83 = scmp.ne.s32.totalorder %s71, %s72
      %p84 = scmp.eq.s32.totalorder %s20, 1
      %p85 = por %p83, %p84
      %p87 = scmp.ne.s32.totalorder %s72, %s86
      %p88 = scmp.eq.s32.totalorder %s20, 0
      %p89 = por %p87, %p88
      %s91 = sadd.s32 %s90, 1
      %p94 = scmp.eq.s32.totalorder %s14, 1
      %p95 = scmp.ne.s32.totalorder %s90, %s92
      %p96 = scmp.eq.s32.totalorder %s14, 0
      %p97 = por %p95, %p96
      %p98 = scmp.ne.s32.totalorder %s90, %s92
      %p99 = scmp.eq.s32.totalorder %s19, 1
      %p100 = por %p98, %p99
      %p101 = scmp.ne.s32.totalorder %s92, %s93
      %p102 = scmp.eq.s32.totalorder %s19, 0
      %p103 = por %p101, %p102
      %p104 = scmp.ne.s32.totalorder %s92, %s93
      %p105 = scmp.eq.s32.totalorder %s20, 1
      %p106 = por %p104, %p105
      %p108 = scmp.ne.s32.totalorder %s93, %s107
      %p109 = scmp.eq.s32.totalorder %s20, 0
      %p110 = por %p108, %p109
      %s111 = ssub.s32 %s14, %s21
      %p112 = scmp.eq.s32.totalorder %s111, 0
      %s114 = sadd.s32 %s113, 1
      %s115 = scalar_select %p112, %s113, %s114
      %p118 = pneg %p112
      %p119 = scmp.eq.s32.totalorder %s14, 1
      %p120 = por %p118, %p119
      %p121 = scmp.ne.s32.totalorder %s113, %s116
      %p122 = scmp.eq.s32.totalorder %s14, 0
      %p123 = por %p121, %p122
      %p124 = scmp.ne.s32.totalorder %s113, %s116
      %p125 = scmp.eq.s32.totalorder %s19, 1
      %p126 = por %p124, %p125
      %p127 = scmp.ne.s32.totalorder %s116, %s117
      %p128 = scmp.eq.s32.totalorder %s19, 0
      %p129 = por %p127, %p128
      %p130 = scmp.ne.s32.totalorder %s116, %s117
      %p131 = scmp.eq.s32.totalorder %s20, 1
      %p132 = por %p130, %p131
      %p134 = scmp.ne.s32.totalorder %s117, %s133
      %p135 = scmp.eq.s32.totalorder %s20, 0
      %p136 = por %p134, %p135
      %s137 = ssub.s32 %s14, %s21
      %p138 = scmp.eq.s32.totalorder %s137, 0
      %s140 = sadd.s32 %s139, 1
      %s141 = scalar_select %p138, %s139, %s140
      %p144 = pneg %p138
      %p145 = scmp.eq.s32.totalorder %s14, 1
      %p146 = por %p144, %p145
      %p147 = scmp.ne.s32.totalorder %s139, %s142
      %p148 = scmp.eq.s32.totalorder %s14, 0
      %p149 = por %p147, %p148
      %p150 = scmp.ne.s32.totalorder %s139, %s142
      %p151 = scmp.eq.s32.totalorder %s19, 1
      %p152 = por %p150, %p151
      %p153 = scmp.ne.s32.totalorder %s142, %s143
      %p154 = scmp.eq.s32.totalorder %s19, 0
      %p155 = por %p153, %p154
      %p156 = scmp.ne.s32.totalorder %s142, %s143
      %p157 = scmp.eq.s32.totalorder %s20, 1
      %p158 = por %p156, %p157
      %p160 = scmp.ne.s32.totalorder %s143, %s159
      %p161 = scmp.eq.s32.totalorder %s20, 0
      %p162 = por %p160, %p161
      %p163 = scmp.le.s32.totalorder 1, %s14
      %p164 = scmp.lt.s32.totalorder %s14, 3
      %p165 = pnand %p163, %p164
      %p166 = pneg %p165
      // Predicated region
      $region9: #{continuous_local_transformer_forward.12} parent=5 // pred_check
        _
      $region10: #{continuous_local_transformer_forward.12} parent=5 // pred_check_branch
        %168 = sbr.rel (%p165) target = $region12
      $region11: #{continuous_local_transformer_forward.12} parent=5 // pred_region
        %s169 = ssub.s32 %s14, 1
        // Predicated region
        $region13: #{continuous_local_transformer_forward.12} parent=11 // pred_check
          %p170 = pneg %p61
        $region14: #{continuous_local_transformer_forward.12} parent=11 // pred_check_branch
          %172 = sbr.rel (%p170) target = $region16
        $region15: #{continuous_local_transformer_forward.12} parent=11 // pred_region
          _
        $region16: #{continuous_local_transformer_forward.12} parent=11 // pred_fallthru
          _
        // Predicated region
        $region17: #{continuous_local_transformer_forward.12} parent=11 // pred_check
          %p173 = pneg %p82
        $region18: #{continuous_local_transformer_forward.12} parent=11 // pred_check_branch
          %175 = sbr.rel (%p173) target = $region20
        $region19: #{continuous_local_transformer_forward.12} parent=11 // pred_region
          %177 = vsyncadd [#allocation3], 0
          %s178 = sshll.u32 %s2, 4
          %s179 = int_to_ptr.hbm [resolvable:$true] %s178
          %s180 = sshll.u32 [#allocation2], 4
          %s181 = int_to_ptr.vmem [resolvable:$true] %s180
          %186 = dma.hbm_to_vmem [thread:$0]  %s179, 1024, %s181, [#allocation3], 128, 128, 8
        $region20: #{continuous_local_transformer_forward.12} parent=11 // pred_fallthru
          _
        // Predicated region
        $region21: #{continuous_local_transformer_forward.12} parent=11 // pred_check
          %p187 = pneg %p103
        $region22: #{continuous_local_transformer_forward.12} parent=11 // pred_check_branch
          %189 = sbr.rel (%p187) target = $region24
        $region23: #{continuous_local_transformer_forward.12} parent=11 // pred_region
          %191 = vsyncadd [#allocation5], 0
          %s192 = sshll.u32 %s3, 4
          %s193 = int_to_ptr.hbm [resolvable:$true] %s192
          %s194 = sshll.u32 [#allocation4], 4
          %s195 = int_to_ptr.vmem [resolvable:$true] %s194
          %200 = dma.hbm_to_vmem [thread:$0]  %s193, 1024, %s195, [#allocation5], 128, 128, 8
        $region24: #{continuous_local_transformer_forward.12} parent=11 // pred_fallthru
          _
      $region12: #{continuous_local_transformer_forward.12} parent=5 // pred_fallthru
        _
      %p201 = scmp.lt.s32.totalorder %s14, 2
      // Predicated region
      $region25: #{continuous_local_transformer_forward.12} parent=5 // pred_check
        %p202 = pneg %p201
      $region26: #{continuous_local_transformer_forward.12} parent=5 // pred_check_branch
        %204 = sbr.rel (%p202) target = $region28
      $region27: #{continuous_local_transformer_forward.12} parent=5 // pred_region
        // Predicated region
        $region29: #{continuous_local_transformer_forward.12} parent=27 // pred_check
          %p205 = pneg %p34
        $region30: #{continuous_local_transformer_forward.12} parent=27 // pred_check_branch
          %207 = sbr.rel (%p205) target = $region32
        $region31: #{continuous_local_transformer_forward.12} parent=27 // pred_region
          %s208 = smul.u32 2, %s14
          %p209 = scmp.lt.s32.totalorder %s208, 3
          %s210 = scalar_select %p209, %s208, 3
          %s211 = smul.addr %s210, 8
          %s212 = scalar_lea.vmem %s0, %s211
          %s213 = smul.u32 2, %s14
        $region32: #{continuous_local_transformer_forward.12} parent=27 // pred_fallthru
          _
      $region28: #{continuous_local_transformer_forward.12} parent=5 // pred_fallthru
        _
      %p214 = scmp.le.s32.totalorder 1, %s14
      %p215 = scmp.lt.s32.totalorder %s14, 3
      %p216 = pnand %p214, %p215
      %p217 = pneg %p216
      // Predicated region
      $region33: #{continuous_local_transformer_forward.12} parent=5 // pred_check
        _
      $region34: #{continuous_local_transformer_forward.12} parent=5 // pred_check_branch
        %219 = sbr.rel (%p216) target = $region36
      $region35: #{continuous_local_transformer_forward.12} parent=5 // pred_region
        %s220 = ssub.s32 %s14, 1
        // Predicated region
        $region37: #{continuous_local_transformer_forward.12} parent=35 // pred_check
          %p221 = pneg %p82
        $region38: #{continuous_local_transformer_forward.12} parent=35 // pred_check_branch
          %223 = sbr.rel (%p221) target = $region40
        $region39: #{continuous_local_transformer_forward.12} parent=35 // pred_region
          %225 = dma.done [#allocation3], 1024
        $region40: #{continuous_local_transformer_forward.12} parent=35 // pred_fallthru
          _
        // Predicated region
        $region41: #{continuous_local_transformer_forward.12} parent=35 // pred_check
          %p226 = pneg %p103
        $region42: #{continuous_local_transformer_forward.12} parent=35 // pred_check_branch
          %228 = sbr.rel (%p226) target = $region44
        $region43: #{continuous_local_transformer_forward.12} parent=35 // pred_region
          %230 = dma.done [#allocation5], 1024
        $region44: #{continuous_local_transformer_forward.12} parent=35 // pred_fallthru
          _
        %s231 = smul.u32 2, %s19
        %p232 = scmp.lt.s32.totalorder %s231, 3
        %s233 = scalar_select %p232, %s231, 3
        %s234 = smul.addr %s233, 8
        %s235 = scalar_lea.vmem %s0, %s234
        %p236 = pneg %p40
        %p237 = pneg %p37
        %p238 = pneg %p61
        %p239 = pneg %p58
        %p240 = pneg %p82
        %p241 = pneg %p79
        %p242 = pneg %p103
        %p243 = pneg %p100
        %p244 = pneg %p129
        %p245 = pneg %p126
        %s246 = smul.u32 2, %s19
        %p247 = scmp.lt.s32.totalorder %s246, 3
        %s248 = scalar_select %p247, %s246, 3
        %s249 = smul.addr %s248, 8
        %s250 = scalar_lea.vmem %s4, %s249
        %p251 = pneg %p155
        %p252 = pneg %p152
        %s253 = smul.u32 2, %s19
        %p254 = scmp.lt.s32.totalorder %s253, 3
        %s255 = scalar_select %p254, %s253, 3
        %s256 = smul.addr %s255, 8
        %s257 = scalar_lea.vmem %s5, %s256
        %s258 = smul.u32 2, %s19
        %p259 = scmp.lt.s32.totalorder %s258, 3
        %s260 = scalar_select %p259, %s258, 3
        %s261 = smul.addr %s260, 8
        %s262 = scalar_lea.vmem %s0, %s261
        %s263 = smul.u32 2, %s19
        %s264 = smul.u32 2, %s19
        %p265 = scmp.lt.s32.totalorder %s264, 3
        %s266 = scalar_select %p265, %s264, 3
        %s267 = smul.addr %s266, 8
        %s268 = scalar_lea.vmem %s4, %s267
        %s269 = smul.u32 2, %s19
        %s270 = smul.u32 2, %s19
        %p271 = scmp.lt.s32.totalorder %s270, 3
        %s272 = scalar_select %p271, %s270, 3
        %s273 = smul.addr %s272, 8
        %s274 = scalar_lea.vmem %s5, %s273
        %s275 = smul.u32 2, %s19
        %v277 = vld [vmem:[%s262] sm:$0xff]
        %v278 = vld [vmem:[%s262 + $0x8] sm:$0xff]
        %vm279 = vcmask 523264
        %v280 = vsel %vm279, %v277, 0.0
        %281 = vadd.xlane.f32.xlu0 %v280
        %v282 = vpop.xlane.xlu0 %281
        %v283 = vsel %vm279, %v278, 0.0
        %284 = vadd.xlane.f32.xlu0 %v283
        %v285 = vpop.xlane.xlu0 %284
        %v286 = vrcp.pop 64.0
        %v287 = vmul.f32 64.0, %v286
        %v288 = vsub.f32 1.0, %v287
        %v289 = vmul.f32 %v286, %v288
        %v290 = vadd.f32 %v286, %v289
        %vm291 = vweird.f32 %v286
        %v292 = vsel %vm291, %v286, %v290
        %v293 = vmul.f32 %v282, %v292
        %v294 = vmul.f32 %v285, %v292
        %v295 = vsub.f32 %v277, %v293
        %v296 = vsub.f32 %v278, %v294
        %v297 = vmul.f32 %v295, %v295
        %v298 = vmul.f32 %v296, %v296
        %v299 = vsel %vm279, %v297, 0.0
        %300 = vadd.xlane.f32.xlu0 %v299
        %v301 = vpop.xlane.xlu0 %300
        %v302 = vsel %vm279, %v298, 0.0
        %303 = vadd.xlane.f32.xlu0 %v302
        %v304 = vpop.xlane.xlu0 %303
        %v305 = vmul.f32 %v301, %v292
        %v306 = vmul.f32 %v304, %v292
        %v307 = vadd.f32 %v305, 1e-05
        %v308 = vadd.f32 %v306, 1e-05
        %v309 = vrsqrt.pop %v307
        %v310 = vmul.f32 %v309, %v307
        %v311 = vmul.f32 %v310, %v309
        %v312 = vmul.f32 0.5, %v311
        %v313 = vsub.f32 1.5, %v312
        %v314 = vmul.f32 %v309, %v313
        %vm315 = vweird.f32 %v307
        %vm316 = vweird.f32 %v309
        %vm317 = vmor %vm315, %vm316
        %v318 = vsel %vm317, %v309, %v314
        %v319 = vrsqrt.pop %v308
        %v320 = vmul.f32 %v319, %v308
        %v321 = vmul.f32 %v320, %v319
        %v322 = vmul.f32 0.5, %v321
        %v323 = vsub.f32 1.5, %v322
        %v324 = vmul.f32 %v319, %v323
        %vm325 = vweird.f32 %v308
        %vm326 = vweird.f32 %v319
        %vm327 = vmor %vm325, %vm326
        %v328 = vsel %vm327, %v319, %v324
        %v329 = vmul.f32 %v295, %v318
        %v330 = vmul.f32 %v296, %v328
        %v331 = vld [vmem:[%s1] sm:$0x1]
        %v333 = vperm.slane %v331, 0
        %v335 = vmul.f32 %v329, %v333
        %v336 = vmul.f32 %v330, %v333
        %v337 = vpack.c.bf16 %v336, %v335
        %v338 = vld [vmem:[#allocation2] sm:$0xff]
        %v339 = vld [vmem:[#allocation2 + $0x8] sm:$0xff]
        %v340 = vld [vmem:[#allocation2 + $0x10] sm:$0xff]
        %v341 = vld [vmem:[#allocation2 + $0x18] sm:$0xff]
        %v342 = vld [vmem:[#allocation2 + $0x20] sm:$0xff]
        %v343 = vld [vmem:[#allocation2 + $0x28] sm:$0xff]
        %v344 = vld [vmem:[#allocation2 + $0x30] sm:$0xff]
        %v345 = vld [vmem:[#allocation2 + $0x38] sm:$0xff]
        %v346 = vpack.c.bf16 %v339, %v338
        %v347 = vpack.c.bf16 %v341, %v340
        %v348 = vpack.c.bf16 %v343, %v342
        %v349 = vpack.c.bf16 %v345, %v344
        %v351 = vsel %vm279, %v337, 0
        %353 = vmatpush.bf16.msra.mxu0 0
        %354 = vmatpush.bf16.msra.mxu0 0
        %355 = vmatpush.bf16.msra.mxu0 0
        %356 = vmatpush.bf16.msra.mxu0 0
        %357 = vmatpush.bf16.msra.mxu0 %v349
        %358 = vmatpush.bf16.msra.mxu0 %v348
        %359 = vmatpush.bf16.msra.mxu0 %v347
        %360 = vmatpush.bf16.msra.mxu0 %v346
        %361 = vmatmul.bf16.gmra.mxu0 %v351
        %v362 = vpop.f32.mrf.mxu0
        %v363 = vadd.f32 0.0, %v362
        %v364 = vpop.f32.mrf.mxu0
        %v365 = vadd.f32 0.0, %v364
        %366 = vdwg.mxu0
        %v367 = vld [vmem:[#allocation4] sm:$0xff]
        %v368 = vld [vmem:[#allocation4 + $0x8] sm:$0xff]
        %v369 = vld [vmem:[#allocation4 + $0x10] sm:$0xff]
        %v370 = vld [vmem:[#allocation4 + $0x18] sm:$0xff]
        %v371 = vld [vmem:[#allocation4 + $0x20] sm:$0xff]
        %v372 = vld [vmem:[#allocation4 + $0x28] sm:$0xff]
        %v373 = vld [vmem:[#allocation4 + $0x30] sm:$0xff]
        %v374 = vld [vmem:[#allocation4 + $0x38] sm:$0xff]
        %v375 = vpack.c.bf16 %v368, %v367
        %v376 = vpack.c.bf16 %v370, %v369
        %v377 = vpack.c.bf16 %v372, %v371
        %v378 = vpack.c.bf16 %v374, %v373
        %379 = vmatpush.bf16.msra.mxu0 0
        %380 = vmatpush.bf16.msra.mxu0 0
        %381 = vmatpush.bf16.msra.mxu0 0
        %382 = vmatpush.bf16.msra.mxu0 0
        %383 = vmatpush.bf16.msra.mxu0 %v378
        %384 = vmatpush.bf16.msra.mxu0 %v377
        %385 = vmatpush.bf16.msra.mxu0 %v376
        %386 = vmatpush.bf16.msra.mxu0 %v375
        %387 = vmatmul.bf16.gmra.mxu0 %v351
        %v388 = vpop.f32.mrf.mxu0
        %v389 = vadd.f32 0.0, %v388
        %v390 = vpop.f32.mrf.mxu0
        %v391 = vadd.f32 0.0, %v390
        %392 = vdwg.mxu0
        %393 = vst.msk [vmem:[%s268] sm:$0xff] %vm279, %v363
        %394 = vst.msk [vmem:[%s268 + $0x8] sm:$0xff] %vm279, %v365
        %395 = vst [vmem:[%s274] sm:$0xff] %v389
        %396 = vst [vmem:[%s274 + $0x8] sm:$0xff] %v391
        %s397 = smul.u32 2, %s19
        %p398 = scmp.lt.s32.totalorder %s397, 3
        %s399 = scalar_select %p398, %s397, 3
        %s400 = smul.addr %s399, 8
        %s401 = scalar_lea.vmem %s4, %s400
        %s402 = smul.u32 2, %s19
        %p403 = scmp.lt.s32.totalorder %s402, 3
        %s404 = scalar_select %p403, %s402, 3
        %s405 = smul.addr %s404, 8
        %s406 = scalar_lea.vmem %s5, %s405
        // Predicated region
        $region45: #{continuous_local_transformer_forward.12} parent=35 // pred_check
          %p407 = pneg %p126
        $region46: #{continuous_local_transformer_forward.12} parent=35 // pred_check_branch
          %409 = sbr.rel (%p407) target = $region48
        $region47: #{continuous_local_transformer_forward.12} parent=35 // pred_region
          %s410 = smul.u32 2, %s19
        $region48: #{continuous_local_transformer_forward.12} parent=35 // pred_fallthru
          _
        // Predicated region
        $region49: #{continuous_local_transformer_forward.12} parent=35 // pred_check
          %p411 = pneg %p152
        $region50: #{continuous_local_transformer_forward.12} parent=35 // pred_check_branch
          %413 = sbr.rel (%p411) target = $region52
        $region51: #{continuous_local_transformer_forward.12} parent=35 // pred_region
          %s414 = smul.u32 2, %s19
        $region52: #{continuous_local_transformer_forward.12} parent=35 // pred_fallthru
          _
      $region36: #{continuous_local_transformer_forward.12} parent=5 // pred_fallthru
        _
      %p415 = scmp.le.s32.totalorder 2, %s14
      // Predicated region
      $region53: #{continuous_local_transformer_forward.12} parent=5 // pred_check
        %p416 = pneg %p415
      $region54: #{continuous_local_transformer_forward.12} parent=5 // pred_check_branch
        %418 = sbr.rel (%p416) target = $region56
      $region55: #{continuous_local_transformer_forward.12} parent=5 // pred_region
        %s419 = ssub.s32 %s14, 2
        // Predicated region
        $region57: #{continuous_local_transformer_forward.12} parent=55 // pred_check
          %p420 = pneg %p132
        $region58: #{continuous_local_transformer_forward.12} parent=55 // pred_check_branch
          %422 = sbr.rel (%p420) target = $region60
        $region59: #{continuous_local_transformer_forward.12} parent=55 // pred_region
          %s423 = smul.u32 2, %s20
          %p424 = scmp.lt.s32.totalorder %s423, 3
          %s425 = scalar_select %p424, %s423, 3
          %s426 = smul.addr %s425, 8
          %s427 = scalar_lea.vmem %s4, %s426
        $region60: #{continuous_local_transformer_forward.12} parent=55 // pred_fallthru
          _
        // Predicated region
        $region61: #{continuous_local_transformer_forward.12} parent=55 // pred_check
          %p428 = pneg %p158
        $region62: #{continuous_local_transformer_forward.12} parent=55 // pred_check_branch
          %430 = sbr.rel (%p428) target = $region64
        $region63: #{continuous_local_transformer_forward.12} parent=55 // pred_region
          %s431 = smul.u32 2, %s20
          %p432 = scmp.lt.s32.totalorder %s431, 3
          %s433 = scalar_select %p432, %s431, 3
          %s434 = smul.addr %s433, 8
          %s435 = scalar_lea.vmem %s5, %s434
        $region64: #{continuous_local_transformer_forward.12} parent=55 // pred_fallthru
          _
      $region56: #{continuous_local_transformer_forward.12} parent=5 // pred_fallthru
        _
    $region6: #{continuous_local_transformer_forward.12} parent=1 // loop_footer
      %s18 = sadd.s32 1, %s14
    $region7: #{continuous_local_transformer_forward.12} parent=1 // loop_footer_branch
      %13 = sbr.rel target = $region3
    $region8: #{continuous_local_transformer_forward.12} parent=1 // loop_exit
      _
    %436 = vsyncpa [#allocation3], 1
    %s437 = scalar_lea.sflag [#allocation3], 1
    %438 = vsyncpa %s437, 1
    %439 = vsyncpa [#allocation5], 1

// kernel: continuous_local_transformer_forward.15
$region0: #{continuous_local_transformer_forward.15}
  #allocation0 [shape = 'u32[]', space=smem, size = 0x4, offset = 0x4, fixed_abs, tag = 'smem constant byte address 0x4 - core index']
  #allocation1 [shape = 'u32[72,128]{1,0:T(1,128)}', space=vmem, size = 0x9000, scoped, tag = 'internal scratch']
  %s0 = inlined_call_operand.vmem [shape: f32[32,64], index: 0, kind: input, shape index: {}]
  %s1 = inlined_call_operand.vmem [shape: f32[64,20], index: 1, kind: input, shape index: {}]
  %s2 = inlined_call_operand.vmem [shape: f32[1,20], index: 2, kind: input, shape index: {}]
  %s3 = inlined_call_operand.hbm [shape: f32[32,20], index: 3, kind: output, shape index: {}]
  %s4 = sld [smem:[#allocation0]]
  $region45: #{continuous_local_transformer_forward.15} parent=0
    _
  %s6 = ssub.s32 1, %s4
  %s7 = scalar_select 0, %s6, %s4
  $region1: #{continuous_local_transformer_forward.15} parent=0
    #allocation2 [shape = 'u8[16384]{0}', space=vmem, size = 0x4000, scoped, tag = 'output window, operand 0']
    #allocation3 [shape = 's32[2]{0}', space=sflag, size = 0x8, scoped, tag = 'scoped memory for continuous_local_transformer_forward.15']
    %8 = vsyncpa [#allocation3], 0
    %s9 = scalar_lea.sflag [#allocation3], 1
    %10 = vsyncpa %s9, 0
    loop: start=0, step=1, limit=4
    $region2: #{continuous_local_transformer_forward.15} parent=1 // loop_pre_header
      _
    $region3: #{continuous_local_transformer_forward.15} parent=1 // loop_header
      %s12 = sphi 0, %s16
      %p13 = scmp.ge.s32.totalorder %s12, 4
      %s22 = sphi 0, %s24
      %s25 = sphi 0, %s22
      %s26 = sphi 0, %s25
      %s42 = sphi 0, %s26
      %s46 = sphi 0, %s46
      %s48 = sphi 0, %s46
      %s49 = sphi 0, %s48
      %s63 = sphi 0, %s49
      %s67 = sphi 0, %s67
      %s69 = sphi 0, %s67
      %s70 = sphi 0, %s69
      %s84 = sphi 0, %s70
      %s90 = sphi 0, %s92
      %s93 = sphi 0, %s90
      %s94 = sphi 0, %s93
      %s110 = sphi 0, %s94
    $region4: #{continuous_local_transformer_forward.15} parent=1 // loop_header_branch
      %15 = sbr.rel (%p13) target = $region8
    $region5: #{continuous_local_transformer_forward.15} parent=1 // loop_body
      %s17 = ssub.s32 %s12, 1
      %s18 = ssub.s32 %s12, 2
      %s19 = sadd.s32 %s12, 1
      %s20 = ssub.s32 %s12, %s19
      %p21 = scmp.eq.s32.totalorder %s20, 0
      %s23 = sadd.s32 %s22, 1
      %s24 = scalar_select %p21, %s22, %s23
      %p27 = pneg %p21
      %p28 = scmp.eq.s32.totalorder %s12, 1
      %p29 = por %p27, %p28
      %p30 = scmp.ne.s32.totalorder %s22, %s25
      %p31 = scmp.eq.s32.totalorder %s12, 0
      %p32 = por %p30, %p31
      %p33 = scmp.ne.s32.totalorder %s22, %s25
      %p34 = scmp.eq.s32.totalorder %s17, 1
      %p35 = por %p33, %p34
      %p36 = scmp.ne.s32.totalorder %s25, %s26
      %p37 = scmp.eq.s32.totalorder %s17, 0
      %p38 = por %p36, %p37
      %p39 = scmp.ne.s32.totalorder %s25, %s26
      %p40 = scmp.eq.s32.totalorder %s18, 1
      %p41 = por %p39, %p40
      %p43 = scmp.ne.s32.totalorder %s26, %s42
      %p44 = scmp.eq.s32.totalorder %s18, 0
      %p45 = por %p43, %p44
      %s47 = sadd.s32 %s46, 1
      %p50 = scmp.eq.s32.totalorder %s12, 1
      %p51 = scmp.ne.s32.totalorder %s46, %s48
      %p52 = scmp.eq.s32.totalorder %s12, 0
      %p53 = por %p51, %p52
      %p54 = scmp.ne.s32.totalorder %s46, %s48
      %p55 = scmp.eq.s32.totalorder %s17, 1
      %p56 = por %p54, %p55
      %p57 = scmp.ne.s32.totalorder %s48, %s49
      %p58 = scmp.eq.s32.totalorder %s17, 0
      %p59 = por %p57, %p58
      %p60 = scmp.ne.s32.totalorder %s48, %s49
      %p61 = scmp.eq.s32.totalorder %s18, 1
      %p62 = por %p60, %p61
      %p64 = scmp.ne.s32.totalorder %s49, %s63
      %p65 = scmp.eq.s32.totalorder %s18, 0
      %p66 = por %p64, %p65
      %s68 = sadd.s32 %s67, 1
      %p71 = scmp.eq.s32.totalorder %s12, 1
      %p72 = scmp.ne.s32.totalorder %s67, %s69
      %p73 = scmp.eq.s32.totalorder %s12, 0
      %p74 = por %p72, %p73
      %p75 = scmp.ne.s32.totalorder %s67, %s69
      %p76 = scmp.eq.s32.totalorder %s17, 1
      %p77 = por %p75, %p76
      %p78 = scmp.ne.s32.totalorder %s69, %s70
      %p79 = scmp.eq.s32.totalorder %s17, 0
      %p80 = por %p78, %p79
      %p81 = scmp.ne.s32.totalorder %s69, %s70
      %p82 = scmp.eq.s32.totalorder %s18, 1
      %p83 = por %p81, %p82
      %p85 = scmp.ne.s32.totalorder %s70, %s84
      %p86 = scmp.eq.s32.totalorder %s18, 0
      %p87 = por %p85, %p86
      %s88 = ssub.s32 %s12, %s19
      %p89 = scmp.eq.s32.totalorder %s88, 0
      %s91 = sadd.s32 %s90, 1
      %s92 = scalar_select %p89, %s90, %s91
      %p95 = pneg %p89
      %p96 = scmp.eq.s32.totalorder %s12, 1
      %p97 = por %p95, %p96
      %p98 = scmp.ne.s32.totalorder %s90, %s93
      %p99 = scmp.eq.s32.totalorder %s12, 0
      %p100 = por %p98, %p99
      %p101 = scmp.ne.s32.totalorder %s90, %s93
      %p102 = scmp.eq.s32.totalorder %s17, 1
      %p103 = por %p101, %p102
      %p104 = scmp.ne.s32.totalorder %s93, %s94
      %p105 = scmp.eq.s32.totalorder %s17, 0
      %p106 = por %p104, %p105
      %p107 = scmp.ne.s32.totalorder %s93, %s94
      %p108 = scmp.eq.s32.totalorder %s18, 1
      %p109 = por %p107, %p108
      %p111 = scmp.ne.s32.totalorder %s94, %s110
      %p112 = scmp.eq.s32.totalorder %s18, 0
      %p113 = por %p111, %p112
      %p114 = scmp.le.s32.totalorder 1, %s12
      %p115 = scmp.lt.s32.totalorder %s12, 3
      %p116 = pnand %p114, %p115
      %p117 = pneg %p116
      // Predicated region
      $region9: #{continuous_local_transformer_forward.15} parent=5 // pred_check
        _
      $region10: #{continuous_local_transformer_forward.15} parent=5 // pred_check_branch
        %119 = sbr.rel (%p116) target = $region12
      $region11: #{continuous_local_transformer_forward.15} parent=5 // pred_region
        %s120 = ssub.s32 %s12, 1
        // Predicated region
        $region13: #{continuous_local_transformer_forward.15} parent=11 // pred_check
          %p121 = pneg %p59
        $region14: #{continuous_local_transformer_forward.15} parent=11 // pred_check_branch
          %123 = sbr.rel (%p121) target = $region16
        $region15: #{continuous_local_transformer_forward.15} parent=11 // pred_region
          _
        $region16: #{continuous_local_transformer_forward.15} parent=11 // pred_fallthru
          _
        // Predicated region
        $region17: #{continuous_local_transformer_forward.15} parent=11 // pred_check
          %p124 = pneg %p80
        $region18: #{continuous_local_transformer_forward.15} parent=11 // pred_check_branch
          %126 = sbr.rel (%p124) target = $region20
        $region19: #{continuous_local_transformer_forward.15} parent=11 // pred_region
          _
        $region20: #{continuous_local_transformer_forward.15} parent=11 // pred_fallthru
          _
      $region12: #{continuous_local_transformer_forward.15} parent=5 // pred_fallthru
        _
      %p127 = scmp.lt.s32.totalorder %s12, 2
      // Predicated region
      $region21: #{continuous_local_transformer_forward.15} parent=5 // pred_check
        %p128 = pneg %p127
      $region22: #{continuous_local_transformer_forward.15} parent=5 // pred_check_branch
        %130 = sbr.rel (%p128) target = $region24
      $region23: #{continuous_local_transformer_forward.15} parent=5 // pred_region
        // Predicated region
        $region25: #{continuous_local_transformer_forward.15} parent=23 // pred_check
          %p131 = pneg %p32
        $region26: #{continuous_local_transformer_forward.15} parent=23 // pred_check_branch
          %133 = sbr.rel (%p131) target = $region28
        $region27: #{continuous_local_transformer_forward.15} parent=23 // pred_region
          %s134 = smul.u32 2, %s12
          %p135 = scmp.lt.s32.totalorder %s134, 3
          %s136 = scalar_select %p135, %s134, 3
          %s137 = smul.addr %s136, 8
          %s138 = scalar_lea.vmem %s0, %s137
          %s139 = smul.u32 2, %s12
        $region28: #{continuous_local_transformer_forward.15} parent=23 // pred_fallthru
          _
      $region24: #{continuous_local_transformer_forward.15} parent=5 // pred_fallthru
        _
      %p140 = scmp.le.s32.totalorder 1, %s12
      %p141 = scmp.lt.s32.totalorder %s12, 3
      %p142 = pnand %p140, %p141
      %p143 = pneg %p142
      // Predicated region
      $region29: #{continuous_local_transformer_forward.15} parent=5 // pred_check
        _
      $region30: #{continuous_local_transformer_forward.15} parent=5 // pred_check_branch
        %145 = sbr.rel (%p142) target = $region32
      $region31: #{continuous_local_transformer_forward.15} parent=5 // pred_region
        %s146 = ssub.s32 %s12, 1
        %s147 = smul.u32 2, %s17
        %p148 = scmp.lt.s32.totalorder %s147, 3
        %s149 = scalar_select %p148, %s147, 3
        %s150 = smul.addr %s149, 8
        %s151 = scalar_lea.vmem %s0, %s150
        %p152 = pneg %p38
        %p153 = pneg %p35
        %p154 = pneg %p59
        %p155 = pneg %p56
        %p156 = pneg %p80
        %p157 = pneg %p77
        %p158 = pneg %p106
        %p159 = pneg %p103
        %s160 = sand.u32 %s93, 1
        %s161 = scalar_lea.sflag [#allocation3], %s160
        %s162 = sand.u32 %s93, 1
        %s163 = smul.addr %s162, 16
        %s164 = scalar_lea.vmem [#allocation2], %s163
        %s165 = smul.u32 2, %s17
        %p166 = scmp.lt.s32.totalorder %s165, 3
        %s167 = scalar_select %p166, %s165, 3
        %s168 = smul.addr %s167, 8
        %s169 = scalar_lea.vmem %s0, %s168
        %s170 = smul.u32 2, %s17
        %s171 = smul.u32 2, %s17
        %v173 = vld [vmem:[%s169] sm:$0xff]
        %v174 = vld [vmem:[%s169 + $0x8] sm:$0xff]
        %v175 = vpack.c.bf16 %v174, %v173
        %v176 = vld [vmem:[%s1] sm:$0xff]
        %v177 = vld [vmem:[%s1 + $0x8] sm:$0xff]
        %v178 = vld [vmem:[%s1 + $0x10] sm:$0xff]
        %v179 = vld [vmem:[%s1 + $0x18] sm:$0xff]
        %v180 = vld [vmem:[%s1 + $0x20] sm:$0xff]
        %v181 = vld [vmem:[%s1 + $0x28] sm:$0xff]
        %v182 = vld [vmem:[%s1 + $0x30] sm:$0xff]
        %v183 = vld [vmem:[%s1 + $0x38] sm:$0xff]
        %v184 = vpack.c.bf16 %v177, %v176
        %v185 = vpack.c.bf16 %v179, %v178
        %v186 = vpack.c.bf16 %v181, %v180
        %v187 = vpack.c.bf16 %v183, %v182
        %v188 = vld [vmem:[%s2] sm:$0x1]
        %v190 = vperm.slane %v188, 0
        %vm192 = vcmask 523264
        %v194 = vsel %vm192, %v175, 0
        %196 = vmatpush.bf16.msra.mxu0 0
        %197 = vmatpush.bf16.msra.mxu0 0
        %198 = vmatpush.bf16.msra.mxu0 0
        %199 = vmatpush.bf16.msra.mxu0 0
        %200 = vmatpush.bf16.msra.mxu0 %v187
        %201 = vmatpush.bf16.msra.mxu0 %v186
        %202 = vmatpush.bf16.msra.mxu0 %v185
        %203 = vmatpush.bf16.msra.mxu0 %v184
        %204 = vmatmul.bf16.gmra.mxu0 %v194
        %v205 = vpop.f32.mrf.mxu0
        %v206 = vadd.f32 %v190, %v205
        %v207 = vpop.f32.mrf.mxu0
        %v208 = vadd.f32 %v190, %v207
        %209 = vdwg.mxu0
        %vm210 = vcmask 162816
        %211 = vst.msk [vmem:[%s164] sm:$0xff] %vm210, %v206
        %212 = vst.msk [vmem:[%s164 + $0x8] sm:$0xff] %vm210, %v208
        %s213 = sand.u32 %s93, 1
        %s214 = scalar_lea.sflag [#allocation3], %s213
        %s215 = sand.u32 %s93, 1
        %s216 = smul.addr %s215, 16
        %s217 = scalar_lea.vmem [#allocation2], %s216
        // Predicated region
        $region33: #{continuous_local_transformer_forward.15} parent=31 // pred_check
          %p218 = pneg %p103
        $region34: #{continuous_local_transformer_forward.15} parent=31 // pred_check_branch
          %220 = sbr.rel (%p218) target = $region36
        $region35: #{continuous_local_transformer_forward.15} parent=31 // pred_region
          %s221 = smul.u32 2, %s17
          %223 = vsyncadd %s214, 0
          %s224 = smul.addr %s221, 8
          %s225 = scalar_lea.hbm %s3, %s224
          %s226 = sshll.u32 %s217, 4
          %s227 = int_to_ptr.vmem [resolvable:$true] %s226
          %s228 = sshll.u32 %s225, 4
          %s229 = int_to_ptr.hbm [resolvable:$true] %s228
          %234 = dma.vmem_to_hbm [thread:$0]  %s227, 256, %s229, %s214, 128, 128, 8
        $region36: #{continuous_local_transformer_forward.15} parent=31 // pred_fallthru
          _
      $region32: #{continuous_local_transformer_forward.15} parent=5 // pred_fallthru
        _
      %p235 = scmp.le.s32.totalorder 2, %s12
      // Predicated region
      $region37: #{continuous_local_transformer_forward.15} parent=5 // pred_check
        %p236 = pneg %p235
      $region38: #{continuous_local_transformer_forward.15} parent=5 // pred_check_branch
        %238 = sbr.rel (%p236) target = $region40
      $region39: #{continuous_local_transformer_forward.15} parent=5 // pred_region
        %s239 = ssub.s32 %s12, 2
        // Predicated region
        $region41: #{continuous_local_transformer_forward.15} parent=39 // pred_check
          %p240 = pneg %p109
        $region42: #{continuous_local_transformer_forward.15} parent=39 // pred_check_branch
          %242 = sbr.rel (%p240) target = $region44
        $region43: #{continuous_local_transformer_forward.15} parent=39 // pred_region
          %s243 = sand.u32 %s94, 1
          %s244 = scalar_lea.sflag [#allocation3], %s243
          %s245 = sand.u32 %s94, 1
          %s246 = smul.addr %s245, 16
          %s247 = scalar_lea.vmem [#allocation2], %s246
          %249 = dma.done %s244, 256
        $region44: #{continuous_local_transformer_forward.15} parent=39 // pred_fallthru
          _
      $region40: #{continuous_local_transformer_forward.15} parent=5 // pred_fallthru
        _
    $region6: #{continuous_local_transformer_forward.15} parent=1 // loop_footer
      %s16 = sadd.s32 1, %s12
    $region7: #{continuous_local_transformer_forward.15} parent=1 // loop_footer_branch
      %11 = sbr.rel target = $region3
    $region8: #{continuous_local_transformer_forward.15} parent=1 // loop_exit
      _
    %250 = vsyncpa [#allocation3], 1
    %s251 = scalar_lea.sflag [#allocation3], 1
    %252 = vsyncpa %s251, 1

</llo_original>
